<compile_context>
chip_gen: v5e
topology: v5e:2x2
jax: 0.10.0
libtpu: 0.0.40
codegen_flags: <defaults>
</compile_context>

<pallas_src>
import functools

import jax
import jax.numpy as jnp
from jax.experimental import pallas as pl
from jax.experimental.pallas import tpu as pltpu

EPS = 1e-5
_LANE = 128
_VMEM_LIMIT = 48 * 1024 * 1024   # explicit scoped-VMEM limit: fits v7x (64 MiB) with headroom


def _round_up(x, m):
    return ((x + m - 1) // m) * m


# ----------------------------------------------------------------------------
# Parameter construction (deterministic, synthetic) + BN folding
# ----------------------------------------------------------------------------
def _conv_params(key, cout, cin, scale=0.1):
    k1, k2 = jax.random.split(key)
    w = scale * jax.random.normal(k1, (cout, cin), jnp.float32)   # PyTorch layout (out, in)
    b = scale * jax.random.normal(k2, (cout,), jnp.float32)
    return w, b


def _bn_params(key, c):
    k1, k2, k3, k4 = jax.random.split(key, 4)
    gamma = 1.0 + 0.1 * jax.random.normal(k1, (c,), jnp.float32)
    beta = 0.1 * jax.random.normal(k2, (c,), jnp.float32)
    mean = 0.1 * jax.random.normal(k3, (c,), jnp.float32)
    var = jnp.abs(1.0 + 0.1 * jax.random.normal(k4, (c,), jnp.float32))
    return gamma, beta, mean, var


def _fold_bn(w_oi, b_o, gamma, beta, mean, var):
    """Fold (out,in) conv/linear weight + bias with inference BN -> (out,in) W, (out,1) bias."""
    scale = gamma / jnp.sqrt(var + EPS)
    shift = beta - mean * scale
    return w_oi * scale[:, None], (b_o * scale + shift)[:, None]


def _pad_cols(w, cols):
    return jnp.pad(w, ((0, 0), (0, cols - w.shape[1])))


def make_params(key, bottleneck):
    """Folded AE_CurSkeNet parameters.  MXU weights are bf16, biases / wrapper weights f32."""
    C = 2 + bottleneck                      # PointGenCon bottleneck_size
    bf16 = jnp.bfloat16
    keys = iter(jax.random.split(key, 16))

    enc = {}
    w, b = _fold_bn(*_conv_params(next(keys), 64, 3), *_bn_params(next(keys), 64))
    enc["w1"], enc["b1"] = _pad_cols(w, 8).astype(bf16), b       # conv1+bn1 (in-dim 3 -> 8, zero pad)
    w, b = _fold_bn(*_conv_params(next(keys), 128, 64), *_bn_params(next(keys), 128))
    enc["w2"], enc["b2"] = w.astype(bf16), b                     # conv2+bn2
    w, b = _fold_bn(*_conv_params(next(keys), 1024, 128), *_bn_params(next(keys), 1024))
    enc["w3"], enc["b3"] = w.astype(bf16), b                     # conv3+bn3
    w, b = _conv_params(next(keys), bottleneck, 1024)            # Linear(1024, bneck)+BN (wrapper-side)
    wl, bl = _fold_bn(w, b, *_bn_params(next(keys), bottleneck))
    enc["wl"], enc["bl"] = wl.T, bl[:, 0]                        # (1024, bneck), (bneck,)

    dec = {}
    w, b = _fold_bn(*_conv_params(next(keys), C, C), *_bn_params(next(keys), C))
    dec["w1r"] = _pad_cols(w[:, :2], 8).astype(bf16)             # grid half of conv1 (in-dim 2 -> 8)
    dec["w1z"], dec["b1"] = w[:, 2:], b[:, 0]                    # code half, folded into a per-batch bias
    w, b = _fold_bn(*_conv_params(next(keys), C // 2, C), *_bn_params(next(keys), C // 2))
    dec["w2"], dec["b2"] = w.astype(bf16), b                     # conv2+bn2
    w, b = _fold_bn(*_conv_params(next(keys), C // 4, C // 2), *_bn_params(next(keys), C // 4))
    dec["w3"], dec["b3"] = w.astype(bf16), b                     # conv3+bn3
    w, b = _conv_params(next(keys), 3, C // 4)                   # conv4 (tanh, no BN)
    dec["w4"] = jnp.pad(w, ((0, 5), (0, 0))).astype(bf16)        # out-dim 3 -> 8 rows (zero pad)
    dec["b4"] = b[:, None]
    return enc, dec


# ----------------------------------------------------------------------------
# Encoder kernel: PointNetfeat (3 folded pointwise convs, channel-major) + running max
# ----------------------------------------------------------------------------
def _encoder_kernel(x_ref, w1, b1, w2, b2, w3, b3, g_ref, gmax):
    nj = pl.program_id(1)

    @pl.when(nj == 0)
    def _():
        gmax[...] = jnp.full(gmax.shape, -jnp.inf, gmax.dtype)

    x = x_ref[0]                                                          # (8, TN) bf16
    h = jnp.dot(w1[...], x, preferred_element_type=jnp.float32) + b1[...]
    h = jnp.maximum(h, 0.0)                                               # (64, TN)
    h = jnp.dot(w2[...], h.astype(jnp.bfloat16),
                preferred_element_type=jnp.float32) + b2[...]
    h = jnp.maximum(h, 0.0)                                               # (128, TN)
    h = jnp.dot(w3[...], h.astype(jnp.bfloat16),
                preferred_element_type=jnp.float32) + b3[...]             # (1024, TN), bn3: no relu
    gmax[...] = jnp.maximum(gmax[...], jnp.max(h, axis=1, keepdims=True))  # max over points (lanes)

    @pl.when(nj == pl.num_programs(1) - 1)
    def _():
        g_ref[0] = gmax[...]


def encoder_features(x_b3n, enc, *, tile_n):
    """PointNetfeat: (B, 3, N) -> global max feature (B, 1024)."""
    B, _, N = x_b3n.shape
    tn = min(tile_n, _round_up(N, _LANE))
    n_pad = _round_up(N, tn)
    if n_pad != N:   # replicate the last point so the global max over the tail pad is unchanged
        x_b3n = jnp.pad(x_b3n, ((0, 0), (0, 0), (0, n_pad - N)), mode="edge")
    x = jnp.pad(x_b3n, ((0, 0), (0, 5), (0, 0))).astype(jnp.bfloat16)     # channels 3 -> 8 (zeros)

    wspec = lambda a: pl.BlockSpec(a.shape, lambda b, n: (0,) * a.ndim)
    g = pl.pallas_call(
        _encoder_kernel,
        out_shape=jax.ShapeDtypeStruct((B, 1024, 1), jnp.float32),
        grid_spec=pltpu.PrefetchScalarGridSpec(
            num_scalar_prefetch=0,
            grid=(B, n_pad // tn),
            in_specs=[
                pl.BlockSpec((1, 8, tn), lambda b, n: (b, 0, n)),
                wspec(enc["w1"]), wspec(enc["b1"]),
                wspec(enc["w2"]), wspec(enc["b2"]),
                wspec(enc["w3"]), wspec(enc["b3"]),
            ],
            out_specs=pl.BlockSpec((1, 1024, 1), lambda b, n: (b, 0, 0)),
            scratch_shapes=[pltpu.VMEM((1024, 1), jnp.float32)],
        ),
        compiler_params=pltpu.CompilerParams(
            dimension_semantics=("parallel", "arbitrary"),
            vmem_limit_bytes=_VMEM_LIMIT),
    )(x, enc["w1"], enc["b1"], enc["w2"], enc["b2"], enc["w3"], enc["b3"])
    return g[:, :, 0]                                                     # (B, 1024)


# ----------------------------------------------------------------------------
# Decoder kernel: PointGenCon (latent code pre-folded into conv1's per-batch bias)
# ----------------------------------------------------------------------------
def _decoder_kernel(r_ref, b1_ref, w1r, w2, b2, w3, b3, w4, b4, o_ref):
    r = r_ref[0]                                                          # (8, TP) bf16
    h = jnp.dot(w1r[...], r, preferred_element_type=jnp.float32) + b1_ref[0]
    h = jnp.maximum(h, 0.0)                                               # (C, TP)
    h = jnp.dot(w2[...], h.astype(jnp.bfloat16),
                preferred_element_type=jnp.float32) + b2[...]
    h = jnp.maximum(h, 0.0)                                               # (C//2, TP)
    h = jnp.dot(w3[...], h.astype(jnp.bfloat16),
                preferred_element_type=jnp.float32) + b3[...]
    h = jnp.maximum(h, 0.0)                                               # (C//4, TP)
    o = jnp.dot(w4[...], h.astype(jnp.bfloat16),
                preferred_element_type=jnp.float32)                       # (8, TP); rows 3: are pad
    o_ref[0] = jnp.tanh(o[:3, :] + b4[...])                               # lane-dense (3, TP) store


def decoder_forward(rand_b2p, b1_eff, dec, *, tile_p):
    """PointGenCon: (B, 2, P) grid + per-batch folded bias (B, C) -> (B, 3, P)."""
    B, _, P = rand_b2p.shape
    C = b1_eff.shape[1]
    tp = min(tile_p, _round_up(P, _LANE))
    p_pad = _round_up(P, tp)
    r = jnp.pad(rand_b2p, ((0, 0), (0, 6), (0, p_pad - P))).astype(jnp.bfloat16)  # channels 2 -> 8
    b1c = b1_eff[:, :, None]                                                      # (B, C, 1)

    wspec = lambda a: pl.BlockSpec(a.shape, lambda b, p: (0,) * a.ndim)
    o = pl.pallas_call(
        _decoder_kernel,
        out_shape=jax.ShapeDtypeStruct((B, 3, p_pad), jnp.float32),
        grid_spec=pltpu.PrefetchScalarGridSpec(
            num_scalar_prefetch=0,
            grid=(B, p_pad // tp),
            in_specs=[
                pl.BlockSpec((1, 8, tp), lambda b, p: (b, 0, p)),
                pl.BlockSpec((1, C, 1), lambda b, p: (b, 0, 0)),
                wspec(dec["w1r"]),
                wspec(dec["w2"]), wspec(dec["b2"]),
                wspec(dec["w3"]), wspec(dec["b3"]),
                wspec(dec["w4"]), wspec(dec["b4"]),
            ],
            out_specs=pl.BlockSpec((1, 3, tp), lambda b, p: (b, 0, p)),
        ),
        compiler_params=pltpu.CompilerParams(
            dimension_semantics=("parallel", "parallel"),
            vmem_limit_bytes=_VMEM_LIMIT),
    )(r, b1c, dec["w1r"], dec["w2"], dec["b2"], dec["w3"], dec["b3"], dec["w4"], dec["b4"])
    return o[:, :, :P]                                                    # drop point-tail pad


# ----------------------------------------------------------------------------
# Full AE_CurSkeNet forward
# ----------------------------------------------------------------------------
def ae_curskenet_forward(x_b3n, rand_b2p, enc, dec, *, tile_n=1024, tile_p=2048):
    """x_b3n: (B, 3, N) point cloud; rand_b2p: (B, 2, P) = cat(uniform, zeros) grid.
    Returns (B, P, 3), matching the PyTorch module's final .transpose(2, 1)."""
    g = encoder_features(x_b3n, enc, tile_n=tile_n)                       # (B, 1024)
    z = jax.nn.relu(g @ enc["wl"] + enc["bl"])                            # Linear+BN+ReLU bottleneck
    b1_eff = z @ dec["w1z"].T + dec["b1"]                                 # code folded into conv1 bias
    # nb_primitives = 1 (the reference module effectively decodes a single primitive)
    out = decoder_forward(rand_b2p, b1_eff, dec, tile_p=tile_p)           # (B, 3, P)
    return jnp.transpose(out, (0, 2, 1))                                  # (B, P, 3)


# Pure-JAX reference (same folded params and bf16 matmul operands) for correctness checking.
def reference_forward(x_b3n, rand_b2p, enc, dec):
    def conv(w, b, h, relu=True):
        h = jnp.einsum("oi,bin->bon", w, h.astype(w.dtype),
                       preferred_element_type=jnp.float32)
        if b is not None:
            h = h + b[None]
        return jnp.maximum(h, 0.0) if relu else h

    x = jnp.pad(x_b3n, ((0, 0), (0, 5), (0, 0))).astype(jnp.bfloat16)
    h = conv(enc["w1"], enc["b1"], x)
    h = conv(enc["w2"], enc["b2"], h)
    h = conv(enc["w3"], enc["b3"], h, relu=False)
    g = jnp.max(h, axis=2)                                                # (B, 1024)
    z = jax.nn.relu(g @ enc["wl"] + enc["bl"])
    b1_eff = z @ dec["w1z"].T + dec["b1"]                                 # (B, C)

    r = jnp.pad(rand_b2p, ((0, 0), (0, 6), (0, 0))).astype(jnp.bfloat16)
    h = conv(dec["w1r"], None, r, relu=False) + b1_eff[:, :, None]
    h = jnp.maximum(h, 0.0)
    h = conv(dec["w2"], dec["b2"], h)
    h = conv(dec["w3"], dec["b3"], h)
    o = conv(dec["w4"], None, h, relu=False)[:, :3, :]                    # drop padded output rows
    o = jnp.tanh(o + dec["b4"][None])
    return jnp.transpose(o, (0, 2, 1))


if __name__ == "__main__":
    key = jax.random.PRNGKey(0)
    pkey, xkey, rkey = jax.random.split(key, 3)

    # Small shapes consistent with the module: batch=2, 3-D points, N=300 input points and
    # num_points=200 generated points (neither a tile multiple, to exercise tail handling),
    # bottleneck=62 so the PointGenCon width is 2 + 62 = 64.
    B, N = 2, 300
    num_points = 200
    bottleneck = 62

    enc, dec = make_params(pkey, bottleneck)
    x = jax.random.normal(xkey, (B, 3, N), jnp.float32)

    # rand_grid = cat(uniform(0,1), zeros) along the channel axis: (B, 2, num_points)
    u = jax.random.uniform(rkey, (B, 1, num_points), jnp.float32)
    rand = jnp.concatenate([u, jnp.zeros_like(u)], axis=1)

    fwd = jax.jit(functools.partial(ae_curskenet_forward, tile_n=1024, tile_p=2048))
    out = jax.block_until_ready(fwd(x, rand, enc, dec))

    ref = reference_forward(x, rand, enc, dec)
    assert out.shape == (B, num_points, 3), out.shape
    err = float(jnp.max(jnp.abs(out - ref)))
    assert err < 5e-3, f"max abs err {err}"
    print("KERNEL_OK")
</pallas_src>

<mosaic_0001>
module attributes {stable_mosaic.version = 11 : i64} {
  func.func @_encoder_kernel(%arg0: i32, %arg1: i32, %arg2: memref<1x8x384xbf16, #tpu.memory_space<vmem>>, %arg3: memref<64x8xbf16, #tpu.memory_space<vmem>>, %arg4: memref<64x1xf32, #tpu.memory_space<vmem>>, %arg5: memref<128x64xbf16, #tpu.memory_space<vmem>>, %arg6: memref<128x1xf32, #tpu.memory_space<vmem>>, %arg7: memref<1024x128xbf16, #tpu.memory_space<vmem>>, %arg8: memref<1024x1xf32, #tpu.memory_space<vmem>>, %arg9: memref<1x1024x1xf32, #tpu.memory_space<vmem>>, %arg10: memref<1024x1xf32, #tpu.memory_space<vmem>>) attributes {dimension_semantics = [#tpu.dimension_semantics<parallel>, #tpu.dimension_semantics<arbitrary>], iteration_bounds = array<i64: 2, 1>, scalar_prefetch = 0 : i64, scratch_operands = 1 : i64, tpu.core_type = #tpu.core_type<tc>, window_params = [{transform_indices = @transform_0, window_bounds = array<i64: 1, 8, 384>}, {pipeline_mode = #tpu.pipeline_mode<synchronous>, transform_indices = @transform_1, window_bounds = array<i64: 64, 8>}, {pipeline_mode = #tpu.pipeline_mode<synchronous>, transform_indices = @transform_2, window_bounds = array<i64: 64, 1>}, {pipeline_mode = #tpu.pipeline_mode<synchronous>, transform_indices = @transform_3, window_bounds = array<i64: 128, 64>}, {pipeline_mode = #tpu.pipeline_mode<synchronous>, transform_indices = @transform_4, window_bounds = array<i64: 128, 1>}, {pipeline_mode = #tpu.pipeline_mode<synchronous>, transform_indices = @transform_5, window_bounds = array<i64: 1024, 128>}, {pipeline_mode = #tpu.pipeline_mode<synchronous>, transform_indices = @transform_6, window_bounds = array<i64: 1024, 1>}, {transform_indices = @transform_7, window_bounds = array<i64: 1, 1024, 1>}]} {
    %c0_i32 = arith.constant 0 : i32
    %0 = arith.cmpi eq, %arg1, %c0_i32 : i32
    %1 = arith.extui %0 : i1 to i32
    %c0_i32_0 = arith.constant 0 : i32
    %2 = arith.cmpi ne, %1, %c0_i32_0 : i32
    scf.if %2 {
      %cst_26 = arith.constant 0xFF800000 : f32
      %34 = vector.broadcast %cst_26 : f32 to vector<1024x1xf32>
      %c0_27 = arith.constant 0 : index
      %c0_28 = arith.constant 0 : index
      %35 = vector.load %arg10[%c0_27, %c0_28] : memref<1024x1xf32, #tpu.memory_space<vmem>>, vector<1024x1xf32>
      tpu.vector_store %arg10[%c0_27, %c0_28], %34 {strides = array<i32>} : memref<1024x1xf32, #tpu.memory_space<vmem>>, vector<1024x1xf32>,
    } else {
    }
    %c0 = arith.constant 0 : index
    %c0_1 = arith.constant 0 : index
    %c0_2 = arith.constant 0 : index
    %3 = vector.load %arg2[%c0, %c0_1, %c0_2] : memref<1x8x384xbf16, #tpu.memory_space<vmem>>, vector<1x8x384xbf16>
    %4 = vector.shape_cast %3 : vector<1x8x384xbf16> to vector<8x384xbf16>
    %c0_3 = arith.constant 0 : index
    %c0_4 = arith.constant 0 : index
    %5 = vector.load %arg3[%c0_3, %c0_4] : memref<64x8xbf16, #tpu.memory_space<vmem>>, vector<64x8xbf16>
    %cst = arith.constant dense<0.000000e+00> : vector<64x384xf32>
    %6 = tpu.matmul %5, %4, %cst {dimension_numbers = #tpu.dot_dimension_numbers<[1], [0], [0], [1], [0, 0, 1, 1], [], []>} : vector<64x8xbf16>, vector<8x384xbf16>, vector<64x384xf32> -> vector<64x384xf32>
    %c0_5 = arith.constant 0 : index
    %c0_6 = arith.constant 0 : index
    %7 = vector.load %arg4[%c0_5, %c0_6] : memref<64x1xf32, #tpu.memory_space<vmem>>, vector<64x1xf32>
    %8 = vector.broadcast %7 : vector<64x1xf32> to vector<64x384xf32>
    %9 = arith.addf %6, %8 : vector<64x384xf32>
    %cst_7 = arith.constant 0.000000e+00 : f32
    %10 = vector.broadcast %cst_7 : f32 to vector<64x384xf32>
    %11 = arith.maximumf %9, %10 : vector<64x384xf32>
    %c0_8 = arith.constant 0 : index
    %c0_9 = arith.constant 0 : index
    %12 = vector.load %arg5[%c0_8, %c0_9] : memref<128x64xbf16, #tpu.memory_space<vmem>>, vector<128x64xbf16>
    %13 = arith.truncf %11 : vector<64x384xf32> to vector<64x384xbf16>
    %cst_10 = arith.constant dense<0.000000e+00> : vector<128x384xf32>
    %14 = tpu.matmul %12, %13, %cst_10 {dimension_numbers = #tpu.dot_dimension_numbers<[1], [0], [0], [1], [0, 0, 1, 1], [], []>} : vector<128x64xbf16>, vector<64x384xbf16>, vector<128x384xf32> -> vector<128x384xf32>
    %c0_11 = arith.constant 0 : index
    %c0_12 = arith.constant 0 : index
    %15 = vector.load %arg6[%c0_11, %c0_12] : memref<128x1xf32, #tpu.memory_space<vmem>>, vector<128x1xf32>
    %16 = vector.broadcast %15 : vector<128x1xf32> to vector<128x384xf32>
    %17 = arith.addf %14, %16 : vector<128x384xf32>
    %cst_13 = arith.constant 0.000000e+00 : f32
    %18 = vector.broadcast %cst_13 : f32 to vector<128x384xf32>
    %19 = arith.maximumf %17, %18 : vector<128x384xf32>
    %c0_14 = arith.constant 0 : index
    %c0_15 = arith.constant 0 : index
    %20 = vector.load %arg7[%c0_14, %c0_15] : memref<1024x128xbf16, #tpu.memory_space<vmem>>, vector<1024x128xbf16>
    %21 = arith.truncf %19 : vector<128x384xf32> to vector<128x384xbf16>
    %cst_16 = arith.constant dense<0.000000e+00> : vector<1024x384xf32>
    %22 = tpu.matmul %20, %21, %cst_16 {dimension_numbers = #tpu.dot_dimension_numbers<[1], [0], [0], [1], [0, 0, 1, 1], [], []>} : vector<1024x128xbf16>, vector<128x384xbf16>, vector<1024x384xf32> -> vector<1024x384xf32>
    %c0_17 = arith.constant 0 : index
    %c0_18 = arith.constant 0 : index
    %23 = vector.load %arg8[%c0_17, %c0_18] : memref<1024x1xf32, #tpu.memory_space<vmem>>, vector<1024x1xf32>
    %24 = vector.broadcast %23 : vector<1024x1xf32> to vector<1024x384xf32>
    %25 = arith.addf %22, %24 : vector<1024x384xf32>
    %c0_19 = arith.constant 0 : index
    %c0_20 = arith.constant 0 : index
    %26 = vector.load %arg10[%c0_19, %c0_20] : memref<1024x1xf32, #tpu.memory_space<vmem>>, vector<1024x1xf32>
    %cst_21 = arith.constant dense<0xFF800000> : vector<1024xf32>
    %27 = vector.multi_reduction <maximumf>, %25, %cst_21 [1] : vector<1024x384xf32> to vector<1024xf32>
    %28 = vector.shape_cast %27 : vector<1024xf32> to vector<1024x1xf32>
    %29 = arith.maximumf %26, %28 : vector<1024x1xf32>
    %c0_22 = arith.constant 0 : index
    %c0_23 = arith.constant 0 : index
    %30 = vector.load %arg10[%c0_22, %c0_23] : memref<1024x1xf32, #tpu.memory_space<vmem>>, vector<1024x1xf32>
    tpu.vector_store %arg10[%c0_22, %c0_23], %29 {strides = array<i32>} : memref<1024x1xf32, #tpu.memory_space<vmem>>, vector<1024x1xf32>,
    %c0_i32_24 = arith.constant 0 : i32
    %31 = arith.cmpi eq, %arg1, %c0_i32_24 : i32
    %32 = arith.extui %31 : i1 to i32
    %c0_i32_25 = arith.constant 0 : i32
    %33 = arith.cmpi ne, %32, %c0_i32_25 : i32
    scf.if %33 {
      %c0_26 = arith.constant 0 : index
      %c0_27 = arith.constant 0 : index
      %34 = vector.load %arg10[%c0_26, %c0_27] : memref<1024x1xf32, #tpu.memory_space<vmem>>, vector<1024x1xf32>
      %c0_28 = arith.constant 0 : index
      %c0_29 = arith.constant 0 : index
      %c0_30 = arith.constant 0 : index
      %35 = vector.load %arg9[%c0_28, %c0_29, %c0_30] : memref<1x1024x1xf32, #tpu.memory_space<vmem>>, vector<1x1024x1xf32>
      %36 = vector.shape_cast %35 : vector<1x1024x1xf32> to vector<1024x1xf32>
      %37 = vector.shape_cast %34 : vector<1024x1xf32> to vector<1x1024x1xf32>
      tpu.vector_store %arg9[%c0_28, %c0_29, %c0_30], %37 {strides = array<i32>} : memref<1x1024x1xf32, #tpu.memory_space<vmem>>, vector<1x1024x1xf32>,
    } else {
    }
    return
  }
  func.func @transform_0(%arg0: i32, %arg1: i32) -> (i32, i32, i32) {
    %c0_i32 = arith.constant 0 : i32
    %c0_i32_0 = arith.constant 0 : i32
    return %arg0, %c0_i32, %arg1 : i32, i32, i32
  }
  func.func @transform_1(%arg0: i32, %arg1: i32) -> (i32, i32) {
    %c0_i32 = arith.constant 0 : i32
    %c0_i32_0 = arith.constant 0 : i32
    %c0_i32_1 = arith.constant 0 : i32
    return %c0_i32, %c0_i32_0 : i32, i32
  }
  func.func @transform_2(%arg0: i32, %arg1: i32) -> (i32, i32) {
    %c0_i32 = arith.constant 0 : i32
    %c0_i32_0 = arith.constant 0 : i32
    %c0_i32_1 = arith.constant 0 : i32
    return %c0_i32, %c0_i32_0 : i32, i32
  }
  func.func @transform_3(%arg0: i32, %arg1: i32) -> (i32, i32) {
    %c0_i32 = arith.constant 0 : i32
    %c0_i32_0 = arith.constant 0 : i32
    %c0_i32_1 = arith.constant 0 : i32
    return %c0_i32, %c0_i32_0 : i32, i32
  }
  func.func @transform_4(%arg0: i32, %arg1: i32) -> (i32, i32) {
    %c0_i32 = arith.constant 0 : i32
    %c0_i32_0 = arith.constant 0 : i32
    %c0_i32_1 = arith.constant 0 : i32
    return %c0_i32, %c0_i32_0 : i32, i32
  }
  func.func @transform_5(%arg0: i32, %arg1: i32) -> (i32, i32) {
    %c0_i32 = arith.constant 0 : i32
    %c0_i32_0 = arith.constant 0 : i32
    %c0_i32_1 = arith.constant 0 : i32
    return %c0_i32, %c0_i32_0 : i32, i32
  }
  func.func @transform_6(%arg0: i32, %arg1: i32) -> (i32, i32) {
    %c0_i32 = arith.constant 0 : i32
    %c0_i32_0 = arith.constant 0 : i32
    %c0_i32_1 = arith.constant 0 : i32
    return %c0_i32, %c0_i32_0 : i32, i32
  }
  func.func @transform_7(%arg0: i32, %arg1: i32) -> (i32, i32, i32) {
    %c0_i32 = arith.constant 0 : i32
    %c0_i32_0 = arith.constant 0 : i32
    %c0_i32_1 = arith.constant 0 : i32
    return %arg0, %c0_i32, %c0_i32_0 : i32, i32, i32
  }
}

module attributes {stable_mosaic.version = 11 : i64} {
  func.func @_decoder_kernel(%arg0: i32, %arg1: i32, %arg2: memref<1x8x256xbf16, #tpu.memory_space<vmem>>, %arg3: memref<1x64x1xf32, #tpu.memory_space<vmem>>, %arg4: memref<64x8xbf16, #tpu.memory_space<vmem>>, %arg5: memref<32x64xbf16, #tpu.memory_space<vmem>>, %arg6: memref<32x1xf32, #tpu.memory_space<vmem>>, %arg7: memref<16x32xbf16, #tpu.memory_space<vmem>>, %arg8: memref<16x1xf32, #tpu.memory_space<vmem>>, %arg9: memref<8x16xbf16, #tpu.memory_space<vmem>>, %arg10: memref<3x1xf32, #tpu.memory_space<vmem>>, %arg11: memref<1x3x256xf32, #tpu.memory_space<vmem>>) attributes {dimension_semantics = [#tpu.dimension_semantics<parallel>, #tpu.dimension_semantics<parallel>], iteration_bounds = array<i64: 2, 1>, scalar_prefetch = 0 : i64, scratch_operands = 0 : i64, tpu.core_type = #tpu.core_type<tc>, window_params = [{transform_indices = @transform_0, window_bounds = array<i64: 1, 8, 256>}, {transform_indices = @transform_1, window_bounds = array<i64: 1, 64, 1>}, {pipeline_mode = #tpu.pipeline_mode<synchronous>, transform_indices = @transform_2, window_bounds = array<i64: 64, 8>}, {pipeline_mode = #tpu.pipeline_mode<synchronous>, transform_indices = @transform_3, window_bounds = array<i64: 32, 64>}, {pipeline_mode = #tpu.pipeline_mode<synchronous>, transform_indices = @transform_4, window_bounds = array<i64: 32, 1>}, {pipeline_mode = #tpu.pipeline_mode<synchronous>, transform_indices = @transform_5, window_bounds = array<i64: 16, 32>}, {pipeline_mode = #tpu.pipeline_mode<synchronous>, transform_indices = @transform_6, window_bounds = array<i64: 16, 1>}, {pipeline_mode = #tpu.pipeline_mode<synchronous>, transform_indices = @transform_7, window_bounds = array<i64: 8, 16>}, {pipeline_mode = #tpu.pipeline_mode<synchronous>, transform_indices = @transform_8, window_bounds = array<i64: 3, 1>}, {transform_indices = @transform_9, window_bounds = array<i64: 1, 3, 256>}]} {
    %c0 = arith.constant 0 : index
    %c0_0 = arith.constant 0 : index
    %c0_1 = arith.constant 0 : index
    %0 = vector.load %arg2[%c0, %c0_0, %c0_1] : memref<1x8x256xbf16, #tpu.memory_space<vmem>>, vector<1x8x256xbf16>
    %1 = vector.shape_cast %0 : vector<1x8x256xbf16> to vector<8x256xbf16>
    %c0_2 = arith.constant 0 : index
    %c0_3 = arith.constant 0 : index
    %2 = vector.load %arg4[%c0_2, %c0_3] : memref<64x8xbf16, #tpu.memory_space<vmem>>, vector<64x8xbf16>
    %cst = arith.constant dense<0.000000e+00> : vector<64x256xf32>
    %3 = tpu.matmul %2, %1, %cst {dimension_numbers = #tpu.dot_dimension_numbers<[1], [0], [0], [1], [0, 0, 1, 1], [], []>} : vector<64x8xbf16>, vector<8x256xbf16>, vector<64x256xf32> -> vector<64x256xf32>
    %c0_4 = arith.constant 0 : index
    %c0_5 = arith.constant 0 : index
    %c0_6 = arith.constant 0 : index
    %4 = vector.load %arg3[%c0_4, %c0_5, %c0_6] : memref<1x64x1xf32, #tpu.memory_space<vmem>>, vector<1x64x1xf32>
    %5 = vector.shape_cast %4 : vector<1x64x1xf32> to vector<64x1xf32>
    %6 = vector.broadcast %5 : vector<64x1xf32> to vector<64x256xf32>
    %7 = arith.addf %3, %6 : vector<64x256xf32>
    %cst_7 = arith.constant 0.000000e+00 : f32
    %8 = vector.broadcast %cst_7 : f32 to vector<64x256xf32>
    %9 = arith.maximumf %7, %8 : vector<64x256xf32>
    %c0_8 = arith.constant 0 : index
    %c0_9 = arith.constant 0 : index
    %10 = vector.load %arg5[%c0_8, %c0_9] : memref<32x64xbf16, #tpu.memory_space<vmem>>, vector<32x64xbf16>
    %11 = arith.truncf %9 : vector<64x256xf32> to vector<64x256xbf16>
    %cst_10 = arith.constant dense<0.000000e+00> : vector<32x256xf32>
    %12 = tpu.matmul %10, %11, %cst_10 {dimension_numbers = #tpu.dot_dimension_numbers<[1], [0], [0], [1], [0, 0, 1, 1], [], []>} : vector<32x64xbf16>, vector<64x256xbf16>, vector<32x256xf32> -> vector<32x256xf32>
    %c0_11 = arith.constant 0 : index
    %c0_12 = arith.constant 0 : index
    %13 = vector.load %arg6[%c0_11, %c0_12] : memref<32x1xf32, #tpu.memory_space<vmem>>, vector<32x1xf32>
    %14 = vector.broadcast %13 : vector<32x1xf32> to vector<32x256xf32>
    %15 = arith.addf %12, %14 : vector<32x256xf32>
    %cst_13 = arith.constant 0.000000e+00 : f32
    %16 = vector.broadcast %cst_13 : f32 to vector<32x256xf32>
    %17 = arith.maximumf %15, %16 : vector<32x256xf32>
    %c0_14 = arith.constant 0 : index
    %c0_15 = arith.constant 0 : index
    %18 = vector.load %arg7[%c0_14, %c0_15] : memref<16x32xbf16, #tpu.memory_space<vmem>>, vector<16x32xbf16>
    %19 = arith.truncf %17 : vector<32x256xf32> to vector<32x256xbf16>
    %cst_16 = arith.constant dense<0.000000e+00> : vector<16x256xf32>
    %20 = tpu.matmul %18, %19, %cst_16 {dimension_numbers = #tpu.dot_dimension_numbers<[1], [0], [0], [1], [0, 0, 1, 1], [], []>} : vector<16x32xbf16>, vector<32x256xbf16>, vector<16x256xf32> -> vector<16x256xf32>
    %c0_17 = arith.constant 0 : index
    %c0_18 = arith.constant 0 : index
    %21 = vector.load %arg8[%c0_17, %c0_18] : memref<16x1xf32, #tpu.memory_space<vmem>>, vector<16x1xf32>
    %22 = vector.broadcast %21 : vector<16x1xf32> to vector<16x256xf32>
    %23 = arith.addf %20, %22 : vector<16x256xf32>
    %cst_19 = arith.constant 0.000000e+00 : f32
    %24 = vector.broadcast %cst_19 : f32 to vector<16x256xf32>
    %25 = arith.maximumf %23, %24 : vector<16x256xf32>
    %c0_20 = arith.constant 0 : index
    %c0_21 = arith.constant 0 : index
    %26 = vector.load %arg9[%c0_20, %c0_21] : memref<8x16xbf16, #tpu.memory_space<vmem>>, vector<8x16xbf16>
    %27 = arith.truncf %25 : vector<16x256xf32> to vector<16x256xbf16>
    %cst_22 = arith.constant dense<0.000000e+00> : vector<8x256xf32>
    %28 = tpu.matmul %26, %27, %cst_22 {dimension_numbers = #tpu.dot_dimension_numbers<[1], [0], [0], [1], [0, 0, 1, 1], [], []>} : vector<8x16xbf16>, vector<16x256xbf16>, vector<8x256xf32> -> vector<8x256xf32>
    %29 = vector.extract_strided_slice %28 {offsets = [0, 0], sizes = [3, 256], strides = [1, 1]} : vector<8x256xf32> to vector<3x256xf32>
    %c0_23 = arith.constant 0 : index
    %c0_24 = arith.constant 0 : index
    %30 = vector.load %arg10[%c0_23, %c0_24] : memref<3x1xf32, #tpu.memory_space<vmem>>, vector<3x1xf32>
    %31 = vector.broadcast %30 : vector<3x1xf32> to vector<3x256xf32>
    %32 = arith.addf %29, %31 : vector<3x256xf32>
    %33 = math.tanh %32 : vector<3x256xf32>
    %c0_25 = arith.constant 0 : index
    %c0_26 = arith.constant 0 : index
    %c0_27 = arith.constant 0 : index
    %34 = vector.load %arg11[%c0_25, %c0_26, %c0_27] : memref<1x3x256xf32, #tpu.memory_space<vmem>>, vector<1x3x256xf32>
    %35 = vector.shape_cast %34 : vector<1x3x256xf32> to vector<3x256xf32>
    %36 = vector.shape_cast %33 : vector<3x256xf32> to vector<1x3x256xf32>
    tpu.vector_store %arg11[%c0_25, %c0_26, %c0_27], %36 {strides = array<i32>} : memref<1x3x256xf32, #tpu.memory_space<vmem>>, vector<1x3x256xf32>,
    return
  }
  func.func @transform_0(%arg0: i32, %arg1: i32) -> (i32, i32, i32) {
    %c0_i32 = arith.constant 0 : i32
    %c0_i32_0 = arith.constant 0 : i32
    return %arg0, %c0_i32, %arg1 : i32, i32, i32
  }
  func.func @transform_1(%arg0: i32, %arg1: i32) -> (i32, i32, i32) {
    %c0_i32 = arith.constant 0 : i32
    %c0_i32_0 = arith.constant 0 : i32
    %c0_i32_1 = arith.constant 0 : i32
    return %arg0, %c0_i32, %c0_i32_0 : i32, i32, i32
  }
  func.func @transform_2(%arg0: i32, %arg1: i32) -> (i32, i32) {
    %c0_i32 = arith.constant 0 : i32
    %c0_i32_0 = arith.constant 0 : i32
    %c0_i32_1 = arith.constant 0 : i32
    return %c0_i32, %c0_i32_0 : i32, i32
  }
  func.func @transform_3(%arg0: i32, %arg1: i32) -> (i32, i32) {
    %c0_i32 = arith.constant 0 : i32
    %c0_i32_0 = arith.constant 0 : i32
    %c0_i32_1 = arith.constant 0 : i32
    return %c0_i32, %c0_i32_0 : i32, i32
  }
  func.func @transform_4(%arg0: i32, %arg1: i32) -> (i32, i32) {
    %c0_i32 = arith.constant 0 : i32
    %c0_i32_0 = arith.constant 0 : i32
    %c0_i32_1 = arith.constant 0 : i32
    return %c0_i32, %c0_i32_0 : i32, i32
  }
  func.func @transform_5(%arg0: i32, %arg1: i32) -> (i32, i32) {
    %c0_i32 = arith.constant 0 : i32
    %c0_i32_0 = arith.constant 0 : i32
    %c0_i32_1 = arith.constant 0 : i32
    return %c0_i32, %c0_i32_0 : i32, i32
  }
  func.func @transform_6(%arg0: i32, %arg1: i32) -> (i32, i32) {
    %c0_i32 = arith.constant 0 : i32
    %c0_i32_0 = arith.constant 0 : i32
    %c0_i32_1 = arith.constant 0 : i32
    return %c0_i32, %c0_i32_0 : i32, i32
  }
  func.func @transform_7(%arg0: i32, %arg1: i32) -> (i32, i32) {
    %c0_i32 = arith.constant 0 : i32
    %c0_i32_0 = arith.constant 0 : i32
    %c0_i32_1 = arith.constant 0 : i32
    return %c0_i32, %c0_i32_0 : i32, i32
  }
  func.func @transform_8(%arg0: i32, %arg1: i32) -> (i32, i32) {
    %c0_i32 = arith.constant 0 : i32
    %c0_i32_0 = arith.constant 0 : i32
    %c0_i32_1 = arith.constant 0 : i32
    return %c0_i32, %c0_i32_0 : i32, i32
  }
  func.func @transform_9(%arg0: i32, %arg1: i32) -> (i32, i32, i32) {
    %c0_i32 = arith.constant 0 : i32
    %c0_i32_0 = arith.constant 0 : i32
    return %arg0, %c0_i32, %arg1 : i32, i32, i32
  }
}

</mosaic_0001>

<llo_original>
// kernel: ae_curskenet_forward.3
$region0: #{ae_curskenet_forward.3}
  #allocation0 [shape = 'u32[]', space=smem, size = 0x4, offset = 0x4, fixed_abs, tag = 'smem constant byte address 0x4 - core index']
  #allocation1 [shape = 'u32[72,128]{1,0:T(1,128)}', space=vmem, size = 0x9000, scoped, tag = 'internal scratch']
  %s0 = inlined_call_operand.vmem [shape: bf16[2,8,256], index: 0, kind: input, shape index: {}]
  %s1 = inlined_call_operand.vmem [shape: f32[2,64,1], index: 1, kind: input, shape index: {}]
  %s2 = inlined_call_operand.vmem [shape: bf16[64,8], index: 2, kind: input, shape index: {}]
  %s3 = inlined_call_operand.vmem [shape: bf16[32,64], index: 3, kind: input, shape index: {}]
  %s4 = inlined_call_operand.vmem [shape: f32[32,1], index: 4, kind: input, shape index: {}]
  %s5 = inlined_call_operand.vmem [shape: bf16[16,32], index: 5, kind: input, shape index: {}]
  %s6 = inlined_call_operand.vmem [shape: f32[16,1], index: 6, kind: input, shape index: {}]
  %s7 = inlined_call_operand.vmem [shape: bf16[8,16], index: 7, kind: input, shape index: {}]
  %s8 = inlined_call_operand.vmem [shape: f32[3,1], index: 8, kind: input, shape index: {}]
  %s9 = inlined_call_operand.vmem [shape: f32[2,3,256], index: 9, kind: output, shape index: {}]
  %s10 = sld [smem:[#allocation0]]
  $region69: #{ae_curskenet_forward.3} parent=0
    _
  %s12 = ssub.s32 1, %s10
  %s13 = scalar_select 0, %s12, %s10
  loop: start=0, step=1, limit=4
  $region2: #{ae_curskenet_forward.3} parent=0 // loop_pre_header
    _
  $region3: #{ae_curskenet_forward.3} parent=0 // loop_header
    %s15 = sphi 0, %s19
    %p16 = scmp.ge.s32.totalorder %s15, 4
    %s22 = sphi 0, %s34
    %s23 = sphi 0, %s30
    %s24 = sphi 0, %s22
    %s25 = sphi 0, %s23
    %s26 = sphi 0, %s24
    %s27 = sphi 0, %s25
    %s39 = sphi 0, %s41
    %s42 = sphi 0, %s39
    %s43 = sphi 0, %s42
    %s59 = sphi 0, %s43
    %s65 = sphi 0, %s67
    %s68 = sphi 0, %s65
    %s69 = sphi 0, %s68
    %s85 = sphi 0, %s69
    %s89 = sphi 0, %s89
    %s91 = sphi 0, %s89
    %s92 = sphi 0, %s91
    %s106 = sphi 0, %s92
    %s110 = sphi 0, %s110
    %s112 = sphi 0, %s110
    %s113 = sphi 0, %s112
    %s127 = sphi 0, %s113
    %s131 = sphi 0, %s131
    %s133 = sphi 0, %s131
    %s134 = sphi 0, %s133
    %s148 = sphi 0, %s134
    %s152 = sphi 0, %s152
    %s154 = sphi 0, %s152
    %s155 = sphi 0, %s154
    %s169 = sphi 0, %s155
    %s173 = sphi 0, %s173
    %s175 = sphi 0, %s173
    %s176 = sphi 0, %s175
    %s190 = sphi 0, %s176
    %s194 = sphi 0, %s194
    %s196 = sphi 0, %s194
    %s197 = sphi 0, %s196
    %s211 = sphi 0, %s197
    %s215 = sphi 0, %s215
    %s217 = sphi 0, %s215
    %s218 = sphi 0, %s217
    %s232 = sphi 0, %s218
    %s240 = sphi 0, %s242
    %s243 = sphi 0, %s240
    %s244 = sphi 0, %s243
    %s260 = sphi 0, %s244
  $region4: #{ae_curskenet_forward.3} parent=0 // loop_header_branch
    %18 = sbr.rel (%p16) target = $region8
  $region5: #{ae_curskenet_forward.3} parent=0 // loop_body
    %s20 = ssub.s32 %s15, 1
    %s21 = ssub.s32 %s15, 2
    %s28 = sadd.s32 1, %s23
    %p29 = scmp.ge.s32.totalorder %s28, 1
    %s30 = scalar_select %p29, 0, %s28
    %s31 = sadd.s32 1, %s22
    %s32 = scalar_select %p29, %s31, %s22
    %p33 = scmp.ge.s32.totalorder %s32, 2
    %s34 = scalar_select %p33, 0, %s32
    %s35 = ssub.s32 %s22, %s34
    %s36 = ssub.s32 %s23, %s30
    %s37 = sor.u32 %s35, %s36
    %p38 = scmp.eq.s32.totalorder %s37, 0
    %s40 = sadd.s32 %s39, 1
    %s41 = scalar_select %p38, %s39, %s40
    %p44 = pneg %p38
    %p45 = scmp.eq.s32.totalorder %s15, 1
    %p46 = por %p44, %p45
    %p47 = scmp.ne.s32.totalorder %s39, %s42
    %p48 = scmp.eq.s32.totalorder %s15, 0
    %p49 = por %p47, %p48
    %p50 = scmp.ne.s32.totalorder %s39, %s42
    %p51 = scmp.eq.s32.totalorder %s20, 1
    %p52 = por %p50, %p51
    %p53 = scmp.ne.s32.totalorder %s42, %s43
    %p54 = scmp.eq.s32.totalorder %s20, 0
    %p55 = por %p53, %p54
    %p56 = scmp.ne.s32.totalorder %s42, %s43
    %p57 = scmp.eq.s32.totalorder %s21, 1
    %p58 = por %p56, %p57
    %p60 = scmp.ne.s32.totalorder %s43, %s59
    %p61 = scmp.eq.s32.totalorder %s21, 0
    %p62 = por %p60, %p61
    %s63 = ssub.s32 %s22, %s34
    %p64 = scmp.eq.s32.totalorder %s63, 0
    %s66 = sadd.s32 %s65, 1
    %s67 = scalar_select %p64, %s65, %s66
    %p70 = pneg %p64
    %p71 = scmp.eq.s32.totalorder %s15, 1
    %p72 = por %p70, %p71
    %p73 = scmp.ne.s32.totalorder %s65, %s68
    %p74 = scmp.eq.s32.totalorder %s15, 0
    %p75 = por %p73, %p74
    %p76 = scmp.ne.s32.totalorder %s65, %s68
    %p77 = scmp.eq.s32.totalorder %s20, 1
    %p78 = por %p76, %p77
    %p79 = scmp.ne.s32.totalorder %s68, %s69
    %p80 = scmp.eq.s32.totalorder %s20, 0
    %p81 = por %p79, %p80
    %p82 = scmp.ne.s32.totalorder %s68, %s69
    %p83 = scmp.eq.s32.totalorder %s21, 1
    %p84 = por %p82, %p83
    %p86 = scmp.ne.s32.totalorder %s69, %s85
    %p87 = scmp.eq.s32.totalorder %s21, 0
    %p88 = por %p86, %p87
    %s90 = sadd.s32 %s89, 1
    %p93 = scmp.eq.s32.totalorder %s15, 1
    %p94 = scmp.ne.s32.totalorder %s89, %s91
    %p95 = scmp.eq.s32.totalorder %s15, 0
    %p96 = por %p94, %p95
    %p97 = scmp.ne.s32.totalorder %s89, %s91
    %p98 = scmp.eq.s32.totalorder %s20, 1
    %p99 = por %p97, %p98
    %p100 = scmp.ne.s32.totalorder %s91, %s92
    %p101 = scmp.eq.s32.totalorder %s20, 0
    %p102 = por %p100, %p101
    %p103 = scmp.ne.s32.totalorder %s91, %s92
    %p104 = scmp.eq.s32.totalorder %s21, 1
    %p105 = por %p103, %p104
    %p107 = scmp.ne.s32.totalorder %s92, %s106
    %p108 = scmp.eq.s32.totalorder %s21, 0
    %p109 = por %p107, %p108
    %s111 = sadd.s32 %s110, 1
    %p114 = scmp.eq.s32.totalorder %s15, 1
    %p115 = scmp.ne.s32.totalorder %s110, %s112
    %p116 = scmp.eq.s32.totalorder %s15, 0
    %p117 = por %p115, %p116
    %p118 = scmp.ne.s32.totalorder %s110, %s112
    %p119 = scmp.eq.s32.totalorder %s20, 1
    %p120 = por %p118, %p119
    %p121 = scmp.ne.s32.totalorder %s112, %s113
    %p122 = scmp.eq.s32.totalorder %s20, 0
    %p123 = por %p121, %p122
    %p124 = scmp.ne.s32.totalorder %s112, %s113
    %p125 = scmp.eq.s32.totalorder %s21, 1
    %p126 = por %p124, %p125
    %p128 = scmp.ne.s32.totalorder %s113, %s127
    %p129 = scmp.eq.s32.totalorder %s21, 0
    %p130 = por %p128, %p129
    %s132 = sadd.s32 %s131, 1
    %p135 = scmp.eq.s32.totalorder %s15, 1
    %p136 = scmp.ne.s32.totalorder %s131, %s133
    %p137 = scmp.eq.s32.totalorder %s15, 0
    %p138 = por %p136, %p137
    %p139 = scmp.ne.s32.totalorder %s131, %s133
    %p140 = scmp.eq.s32.totalorder %s20, 1
    %p141 = por %p139, %p140
    %p142 = scmp.ne.s32.totalorder %s133, %s134
    %p143 = scmp.eq.s32.totalorder %s20, 0
    %p144 = por %p142, %p143
    %p145 = scmp.ne.s32.totalorder %s133, %s134
    %p146 = scmp.eq.s32.totalorder %s21, 1
    %p147 = por %p145, %p146
    %p149 = scmp.ne.s32.totalorder %s134, %s148
    %p150 = scmp.eq.s32.totalorder %s21, 0
    %p151 = por %p149, %p150
    %s153 = sadd.s32 %s152, 1
    %p156 = scmp.eq.s32.totalorder %s15, 1
    %p157 = scmp.ne.s32.totalorder %s152, %s154
    %p158 = scmp.eq.s32.totalorder %s15, 0
    %p159 = por %p157, %p158
    %p160 = scmp.ne.s32.totalorder %s152, %s154
    %p161 = scmp.eq.s32.totalorder %s20, 1
    %p162 = por %p160, %p161
    %p163 = scmp.ne.s32.totalorder %s154, %s155
    %p164 = scmp.eq.s32.totalorder %s20, 0
    %p165 = por %p163, %p164
    %p166 = scmp.ne.s32.totalorder %s154, %s155
    %p167 = scmp.eq.s32.totalorder %s21, 1
    %p168 = por %p166, %p167
    %p170 = scmp.ne.s32.totalorder %s155, %s169
    %p171 = scmp.eq.s32.totalorder %s21, 0
    %p172 = por %p170, %p171
    %s174 = sadd.s32 %s173, 1
    %p177 = scmp.eq.s32.totalorder %s15, 1
    %p178 = scmp.ne.s32.totalorder %s173, %s175
    %p179 = scmp.eq.s32.totalorder %s15, 0
    %p180 = por %p178, %p179
    %p181 = scmp.ne.s32.totalorder %s173, %s175
    %p182 = scmp.eq.s32.totalorder %s20, 1
    %p183 = por %p181, %p182
    %p184 = scmp.ne.s32.totalorder %s175, %s176
    %p185 = scmp.eq.s32.totalorder %s20, 0
    %p186 = por %p184, %p185
    %p187 = scmp.ne.s32.totalorder %s175, %s176
    %p188 = scmp.eq.s32.totalorder %s21, 1
    %p189 = por %p187, %p188
    %p191 = scmp.ne.s32.totalorder %s176, %s190
    %p192 = scmp.eq.s32.totalorder %s21, 0
    %p193 = por %p191, %p192
    %s195 = sadd.s32 %s194, 1
    %p198 = scmp.eq.s32.totalorder %s15, 1
    %p199 = scmp.ne.s32.totalorder %s194, %s196
    %p200 = scmp.eq.s32.totalorder %s15, 0
    %p201 = por %p199, %p200
    %p202 = scmp.ne.s32.totalorder %s194, %s196
    %p203 = scmp.eq.s32.totalorder %s20, 1
    %p204 = por %p202, %p203
    %p205 = scmp.ne.s32.totalorder %s196, %s197
    %p206 = scmp.eq.s32.totalorder %s20, 0
    %p207 = por %p205, %p206
    %p208 = scmp.ne.s32.totalorder %s196, %s197
    %p209 = scmp.eq.s32.totalorder %s21, 1
    %p210 = por %p208, %p209
    %p212 = scmp.ne.s32.totalorder %s197, %s211
    %p213 = scmp.eq.s32.totalorder %s21, 0
    %p214 = por %p212, %p213
    %s216 = sadd.s32 %s215, 1
    %p219 = scmp.eq.s32.totalorder %s15, 1
    %p220 = scmp.ne.s32.totalorder %s215, %s217
    %p221 = scmp.eq.s32.totalorder %s15, 0
    %p222 = por %p220, %p221
    %p223 = scmp.ne.s32.totalorder %s215, %s217
    %p224 = scmp.eq.s32.totalorder %s20, 1
    %p225 = por %p223, %p224
    %p226 = scmp.ne.s32.totalorder %s217, %s218
    %p227 = scmp.eq.s32.totalorder %s20, 0
    %p228 = por %p226, %p227
    %p229 = scmp.ne.s32.totalorder %s217, %s218
    %p230 = scmp.eq.s32.totalorder %s21, 1
    %p231 = por %p229, %p230
    %p233 = scmp.ne.s32.totalorder %s218, %s232
    %p234 = scmp.eq.s32.totalorder %s21, 0
    %p235 = por %p233, %p234
    %s236 = ssub.s32 %s22, %s34
    %s237 = ssub.s32 %s23, %s30
    %s238 = sor.u32 %s236, %s237
    %p239 = scmp.eq.s32.totalorder %s238, 0
    %s241 = sadd.s32 %s240, 1
    %s242 = scalar_select %p239, %s240, %s241
    %p245 = pneg %p239
    %p246 = scmp.eq.s32.totalorder %s15, 1
    %p247 = por %p245, %p246
    %p248 = scmp.ne.s32.totalorder %s240, %s243
    %p249 = scmp.eq.s32.totalorder %s15, 0
    %p250 = por %p248, %p249
    %p251 = scmp.ne.s32.totalorder %s240, %s243
    %p252 = scmp.eq.s32.totalorder %s20, 1
    %p253 = por %p251, %p252
    %p254 = scmp.ne.s32.totalorder %s243, %s244
    %p255 = scmp.eq.s32.totalorder %s20, 0
    %p256 = por %p254, %p255
    %p257 = scmp.ne.s32.totalorder %s243, %s244
    %p258 = scmp.eq.s32.totalorder %s21, 1
    %p259 = por %p257, %p258
    %p261 = scmp.ne.s32.totalorder %s244, %s260
    %p262 = scmp.eq.s32.totalorder %s21, 0
    %p263 = por %p261, %p262
    %p264 = scmp.le.s32.totalorder 1, %s15
    %p265 = scmp.lt.s32.totalorder %s15, 3
    %p266 = pnand %p264, %p265
    %p267 = pneg %p266
    // Predicated region
    $region9: #{ae_curskenet_forward.3} parent=5 // pred_check
      _
    $region10: #{ae_curskenet_forward.3} parent=5 // pred_check_branch
      %269 = sbr.rel (%p266) target = $region12
    $region11: #{ae_curskenet_forward.3} parent=5 // pred_region
      %s270 = ssub.s32 %s15, 1
      // Predicated region
      $region13: #{ae_curskenet_forward.3} parent=11 // pred_check
        %p271 = pneg %p102
      $region14: #{ae_curskenet_forward.3} parent=11 // pred_check_branch
        %273 = sbr.rel (%p271) target = $region16
      $region15: #{ae_curskenet_forward.3} parent=11 // pred_region
        _
      $region16: #{ae_curskenet_forward.3} parent=11 // pred_fallthru
        _
      // Predicated region
      $region17: #{ae_curskenet_forward.3} parent=11 // pred_check
        %p274 = pneg %p123
      $region18: #{ae_curskenet_forward.3} parent=11 // pred_check_branch
        %276 = sbr.rel (%p274) target = $region20
      $region19: #{ae_curskenet_forward.3} parent=11 // pred_region
        _
      $region20: #{ae_curskenet_forward.3} parent=11 // pred_fallthru
        _
      // Predicated region
      $region21: #{ae_curskenet_forward.3} parent=11 // pred_check
        %p277 = pneg %p144
      $region22: #{ae_curskenet_forward.3} parent=11 // pred_check_branch
        %279 = sbr.rel (%p277) target = $region24
      $region23: #{ae_curskenet_forward.3} parent=11 // pred_region
        _
      $region24: #{ae_curskenet_forward.3} parent=11 // pred_fallthru
        _
      // Predicated region
      $region25: #{ae_curskenet_forward.3} parent=11 // pred_check
        %p280 = pneg %p165
      $region26: #{ae_curskenet_forward.3} parent=11 // pred_check_branch
        %282 = sbr.rel (%p280) target = $region28
      $region27: #{ae_curskenet_forward.3} parent=11 // pred_region
        _
      $region28: #{ae_curskenet_forward.3} parent=11 // pred_fallthru
        _
      // Predicated region
      $region29: #{ae_curskenet_forward.3} parent=11 // pred_check
        %p283 = pneg %p186
      $region30: #{ae_curskenet_forward.3} parent=11 // pred_check_branch
        %285 = sbr.rel (%p283) target = $region32
      $region31: #{ae_curskenet_forward.3} parent=11 // pred_region
        _
      $region32: #{ae_curskenet_forward.3} parent=11 // pred_fallthru
        _
      // Predicated region
      $region33: #{ae_curskenet_forward.3} parent=11 // pred_check
        %p286 = pneg %p207
      $region34: #{ae_curskenet_forward.3} parent=11 // pred_check_branch
        %288 = sbr.rel (%p286) target = $region36
      $region35: #{ae_curskenet_forward.3} parent=11 // pred_region
        _
      $region36: #{ae_curskenet_forward.3} parent=11 // pred_fallthru
        _
      // Predicated region
      $region37: #{ae_curskenet_forward.3} parent=11 // pred_check
        %p289 = pneg %p228
      $region38: #{ae_curskenet_forward.3} parent=11 // pred_check_branch
        %291 = sbr.rel (%p289) target = $region40
      $region39: #{ae_curskenet_forward.3} parent=11 // pred_region
        _
      $region40: #{ae_curskenet_forward.3} parent=11 // pred_fallthru
        _
    $region12: #{ae_curskenet_forward.3} parent=5 // pred_fallthru
      _
    %p292 = scmp.lt.s32.totalorder %s15, 2
    // Predicated region
    $region41: #{ae_curskenet_forward.3} parent=5 // pred_check
      %p293 = pneg %p292
    $region42: #{ae_curskenet_forward.3} parent=5 // pred_check_branch
      %295 = sbr.rel (%p293) target = $region44
    $region43: #{ae_curskenet_forward.3} parent=5 // pred_region
      // Predicated region
      $region45: #{ae_curskenet_forward.3} parent=43 // pred_check
        %p296 = pneg %p49
      $region46: #{ae_curskenet_forward.3} parent=43 // pred_check_branch
        %298 = sbr.rel (%p296) target = $region48
      $region47: #{ae_curskenet_forward.3} parent=43 // pred_region
        %s299 = smul.u32 2, %s23
        %p300 = scmp.lt.s32.totalorder %s22, 1
        %s301 = scalar_select %p300, %s22, 1
        %p302 = scmp.lt.s32.totalorder %s299, 1
        %s303 = scalar_select %p302, %s299, 1
        %s304 = smul.addr %s301, 2
        %s305 = sadd.s32 %s303, %s304
        %s306 = smul.addr %s305, 4
        %s307 = scalar_lea.vmem %s0, %s306
        %s308 = smul.u32 2, %s23
      $region48: #{ae_curskenet_forward.3} parent=43 // pred_fallthru
        _
      // Predicated region
      $region49: #{ae_curskenet_forward.3} parent=43 // pred_check
        %p309 = pneg %p75
      $region50: #{ae_curskenet_forward.3} parent=43 // pred_check_branch
        %311 = sbr.rel (%p309) target = $region52
      $region51: #{ae_curskenet_forward.3} parent=43 // pred_region
        %p312 = scmp.lt.s32.totalorder %s22, 1
        %s313 = scalar_select %p312, %s22, 1
        %s314 = smul.addr %s313, 8
        %s315 = smul.addr %s314, 8
        %s316 = scalar_lea.vmem %s1, %s315
      $region52: #{ae_curskenet_forward.3} parent=43 // pred_fallthru
        _
    $region44: #{ae_curskenet_forward.3} parent=5 // pred_fallthru
      _
    %p317 = scmp.le.s32.totalorder 1, %s15
    %p318 = scmp.lt.s32.totalorder %s15, 3
    %p319 = pnand %p317, %p318
    %p320 = pneg %p319
    // Predicated region
    $region53: #{ae_curskenet_forward.3} parent=5 // pred_check
      _
    $region54: #{ae_curskenet_forward.3} parent=5 // pred_check_branch
      %322 = sbr.rel (%p319) target = $region56
    $region55: #{ae_curskenet_forward.3} parent=5 // pred_region
      %s323 = ssub.s32 %s15, 1
      %s324 = smul.u32 2, %s25
      %p325 = scmp.lt.s32.totalorder %s24, 1
      %s326 = scalar_select %p325, %s24, 1
      %p327 = scmp.lt.s32.totalorder %s324, 1
      %s328 = scalar_select %p327, %s324, 1
      %s329 = smul.addr %s326, 2
      %s330 = sadd.s32 %s328, %s329
      %s331 = smul.addr %s330, 4
      %s332 = scalar_lea.vmem %s0, %s331
      %p333 = pneg %p55
      %p334 = pneg %p52
      %p335 = scmp.lt.s32.totalorder %s24, 1
      %s336 = scalar_select %p335, %s24, 1
      %s337 = smul.addr %s336, 8
      %s338 = smul.addr %s337, 8
      %s339 = scalar_lea.vmem %s1, %s338
      %p340 = pneg %p81
      %p341 = pneg %p78
      %p342 = pneg %p102
      %p343 = pneg %p99
      %p344 = pneg %p123
      %p345 = pneg %p120
      %p346 = pneg %p144
      %p347 = pneg %p141
      %p348 = pneg %p165
      %p349 = pneg %p162
      %p350 = pneg %p186
      %p351 = pneg %p183
      %p352 = pneg %p207
      %p353 = pneg %p204
      %p354 = pneg %p228
      %p355 = pneg %p225
      %p356 = pneg %p256
      %p357 = pneg %p253
      %s358 = smul.u32 2, %s25
      %p359 = scmp.lt.s32.totalorder %s24, 1
      %s360 = scalar_select %p359, %s24, 1
      %p361 = scmp.lt.s32.totalorder %s358, 1
      %s362 = scalar_select %p361, %s358, 1
      %s363 = smul.addr %s360, 2
      %s364 = sadd.s32 %s362, %s363
      %s365 = smul.addr %s364, 4
      %s366 = scalar_lea.vmem %s9, %s365
      %s367 = smul.u32 2, %s25
      %p368 = scmp.lt.s32.totalorder %s24, 1
      %s369 = scalar_select %p368, %s24, 1
      %p370 = scmp.lt.s32.totalorder %s367, 1
      %s371 = scalar_select %p370, %s367, 1
      %s372 = smul.addr %s369, 2
      %s373 = sadd.s32 %s371, %s372
      %s374 = smul.addr %s373, 4
      %s375 = scalar_lea.vmem %s0, %s374
      %s376 = smul.u32 2, %s25
      %p377 = scmp.lt.s32.totalorder %s24, 1
      %s378 = scalar_select %p377, %s24, 1
      %s379 = smul.addr %s378, 8
      %s380 = smul.addr %s379, 8
      %s381 = scalar_lea.vmem %s1, %s380
      %s382 = smul.u32 2, %s25
      %p383 = scmp.lt.s32.totalorder %s24, 1
      %s384 = scalar_select %p383, %s24, 1
      %p385 = scmp.lt.s32.totalorder %s382, 1
      %s386 = scalar_select %p385, %s382, 1
      %s387 = smul.addr %s384, 2
      %s388 = sadd.s32 %s386, %s387
      %s389 = smul.addr %s388, 4
      %s390 = scalar_lea.vmem %s9, %s389
      %s391 = smul.u32 2, %s25
      %v393 = vld [vmem:[%s375] sm:$0xff]
      %v394 = vld [vmem:[%s2] sm:$0xf]
      %v395 = vld [vmem:[%s2 + $0x4] sm:$0xf]
      %v396 = vld [vmem:[%s2 + $0x8] sm:$0xf]
      %v397 = vld [vmem:[%s2 + $0xc] sm:$0xf]
      %v398 = vld [vmem:[%s2 + $0x10] sm:$0xf]
      %v399 = vld [vmem:[%s2 + $0x14] sm:$0xf]
      %v400 = vld [vmem:[%s2 + $0x18] sm:$0xf]
      %v401 = vld [vmem:[%s2 + $0x1c] sm:$0xf]
      %v402 = vld [vmem:[%s381] sm:$0xff]
      %v403 = vld [vmem:[%s381 + $0x8] sm:$0xff]
      %v404 = vld [vmem:[%s381 + $0x10] sm:$0xff]
      %v405 = vld [vmem:[%s381 + $0x18] sm:$0xff]
      %v406 = vld [vmem:[%s381 + $0x20] sm:$0xff]
      %v407 = vld [vmem:[%s381 + $0x28] sm:$0xff]
      %v408 = vld [vmem:[%s381 + $0x30] sm:$0xff]
      %v409 = vld [vmem:[%s381 + $0x38] sm:$0xff]
      %411 = vset.pattern.permute.xlu0 0
      %412 = vperm.xlu0 %411, %v402
      %v413 = vpop.permute.xlu0 %412
      %416 = vset.pattern.permute.xlu0 0
      %417 = vperm.xlu0 %416, %v403
      %v418 = vpop.permute.xlu0 %417
      %421 = vset.pattern.permute.xlu0 0
      %422 = vperm.xlu0 %421, %v404
      %v423 = vpop.permute.xlu0 %422
      %426 = vset.pattern.permute.xlu0 0
      %427 = vperm.xlu0 %426, %v405
      %v428 = vpop.permute.xlu0 %427
      %431 = vset.pattern.permute.xlu0 0
      %432 = vperm.xlu0 %431, %v406
      %v433 = vpop.permute.xlu0 %432
      %436 = vset.pattern.permute.xlu0 0
      %437 = vperm.xlu0 %436, %v407
      %v438 = vpop.permute.xlu0 %437
      %441 = vset.pattern.permute.xlu0 0
      %442 = vperm.xlu0 %441, %v408
      %v443 = vpop.permute.xlu0 %442
      %446 = vset.pattern.permute.xlu0 0
      %447 = vperm.xlu0 %446, %v409
      %v448 = vpop.permute.xlu0 %447
      %v458 = vunpack.c.l.b16 %v394
      %v459 = vunpack.c.l.b16 %v395
      %v460 = vunpack.c.l.b16 %v396
      %v461 = vunpack.c.l.b16 %v397
      %v462 = vunpack.c.l.b16 %v398
      %v463 = vunpack.c.l.b16 %v399
      %v464 = vunpack.c.l.b16 %v400
      %v465 = vunpack.c.l.b16 %v401
      %v466 = vpack.c.b16 %v459, %v458
      %v467 = vpack.c.b16 %v461, %v460
      %v468 = vpack.c.b16 %v463, %v462
      %v469 = vpack.c.b16 %v465, %v464
      %v471 = vunpack.c.l.b16 %v393
      %v472 = vunpack.c.h.b16 %v393
      %v473 = vpack.c.b16 %v471, %v471
      %v474 = vpack.c.b16 %v472, %v472
      %vm475 = vcmask 64512
      %v477 = vsel %vm475, %v466, 0
      %v480 = vsel %vm475, %v467, 0
      %v483 = vsel %vm475, %v468, 0
      %v486 = vsel %vm475, %v469, 0
      %vm488 = vcmask 1043456
      %v490 = vsel %vm488, %v473, 0
      %v493 = vsel %vm488, %v474, 0
      %495 = vmatpush.bf16.msra.mxu0 0
      %496 = vmatpush.bf16.msra.mxu0 0
      %497 = vmatpush.bf16.msra.mxu0 0
      %498 = vmatpush.bf16.msra.mxu0 0
      %499 = vmatpush.bf16.msra.mxu0 0
      %500 = vmatpush.bf16.msra.mxu0 0
      %501 = vmatpush.bf16.msra.mxu0 0
      %502 = vmatpush.bf16.msra.mxu0 %v490
      %503 = vmatmul.bf16.gmra.mxu0 %v477
      %v504 = vpop.f32.mrf.mxu0
      %v505 = vadd.f32 %v413, %v504
      %v506 = vpop.f32.mrf.mxu0
      %v507 = vadd.f32 %v418, %v506
      %508 = vmatmul.bf16.gmra.mxu0 %v480
      %v509 = vpop.f32.mrf.mxu0
      %v510 = vadd.f32 %v423, %v509
      %v511 = vpop.f32.mrf.mxu0
      %v512 = vadd.f32 %v428, %v511
      %513 = vmatmul.bf16.gmra.mxu0 %v483
      %v514 = vpop.f32.mrf.mxu0
      %v515 = vadd.f32 %v433, %v514
      %v516 = vpop.f32.mrf.mxu0
      %v517 = vadd.f32 %v438, %v516
      %518 = vmatmul.bf16.gmra.mxu0 %v486
      %v519 = vpop.f32.mrf.mxu0
      %v520 = vadd.f32 %v443, %v519
      %v521 = vpop.f32.mrf.mxu0
      %v522 = vadd.f32 %v448, %v521
      %523 = vdwg.mxu0
      %524 = vmatpush.bf16.msra.mxu0 0
      %525 = vmatpush.bf16.msra.mxu0 0
      %526 = vmatpush.bf16.msra.mxu0 0
      %527 = vmatpush.bf16.msra.mxu0 0
      %528 = vmatpush.bf16.msra.mxu0 0
      %529 = vmatpush.bf16.msra.mxu0 0
      %530 = vmatpush.bf16.msra.mxu0 0
      %531 = vmatpush.bf16.msra.mxu0 %v493
      %532 = vmatmul.bf16.gmra.mxu0 %v477
      %v533 = vpop.f32.mrf.mxu0
      %v534 = vadd.f32 %v413, %v533
      %v535 = vpop.f32.mrf.mxu0
      %v536 = vadd.f32 %v418, %v535
      %537 = vmatmul.bf16.gmra.mxu0 %v480
      %v538 = vpop.f32.mrf.mxu0
      %v539 = vadd.f32 %v423, %v538
      %v540 = vpop.f32.mrf.mxu0
      %v541 = vadd.f32 %v428, %v540
      %542 = vmatmul.bf16.gmra.mxu0 %v483
      %v543 = vpop.f32.mrf.mxu0
      %v544 = vadd.f32 %v433, %v543
      %v545 = vpop.f32.mrf.mxu0
      %v546 = vadd.f32 %v438, %v545
      %547 = vmatmul.bf16.gmra.mxu0 %v486
      %v548 = vpop.f32.mrf.mxu0
      %v549 = vadd.f32 %v443, %v548
      %v550 = vpop.f32.mrf.mxu0
      %v551 = vadd.f32 %v448, %v550
      %552 = vdwg.mxu0
      %v553 = vmax.f32 %v505, 0.0
      %v554 = vmax.f32 %v534, 0.0
      %v555 = vmax.f32 %v507, 0.0
      %v556 = vmax.f32 %v536, 0.0
      %v557 = vmax.f32 %v510, 0.0
      %v558 = vmax.f32 %v539, 0.0
      %v559 = vmax.f32 %v512, 0.0
      %v560 = vmax.f32 %v541, 0.0
      %v561 = vmax.f32 %v515, 0.0
      %v562 = vmax.f32 %v544, 0.0
      %v563 = vmax.f32 %v517, 0.0
      %v564 = vmax.f32 %v546, 0.0
      %v565 = vmax.f32 %v520, 0.0
      %v566 = vmax.f32 %v549, 0.0
      %v567 = vmax.f32 %v522, 0.0
      %v568 = vmax.f32 %v551, 0.0
      %v569 = vld [vmem:[%s3] sm:$0xf]
      %v570 = vld [vmem:[%s3 + $0x4] sm:$0xf]
      %v571 = vld [vmem:[%s3 + $0x8] sm:$0xf]
      %v572 = vld [vmem:[%s3 + $0xc] sm:$0xf]
      %v573 = vpack.c.bf16 %v555, %v553
      %v574 = vpack.c.bf16 %v556, %v554
      %v575 = vpack.c.bf16 %v559, %v557
      %v576 = vpack.c.bf16 %v560, %v558
      %v577 = vpack.c.bf16 %v563, %v561
      %v578 = vpack.c.bf16 %v564, %v562
      %v579 = vpack.c.bf16 %v567, %v565
      %v580 = vpack.c.bf16 %v568, %v566
      %v581 = vld [vmem:[%s4] sm:$0xff]
      %v582 = vld [vmem:[%s4 + $0x8] sm:$0xff]
      %v583 = vld [vmem:[%s4 + $0x10] sm:$0xff]
      %v584 = vld [vmem:[%s4 + $0x18] sm:$0xff]
      %586 = vset.pattern.permute.xlu0 0
      %587 = vperm.xlu0 %586, %v581
      %v588 = vpop.permute.xlu0 %587
      %591 = vset.pattern.permute.xlu0 0
      %592 = vperm.xlu0 %591, %v582
      %v593 = vpop.permute.xlu0 %592
      %596 = vset.pattern.permute.xlu0 0
      %597 = vperm.xlu0 %596, %v583
      %v598 = vpop.permute.xlu0 %597
      %601 = vset.pattern.permute.xlu0 0
      %602 = vperm.xlu0 %601, %v584
      %v603 = vpop.permute.xlu0 %602
      %v609 = vunpack.c.l.b16 %v569
      %v610 = vunpack.c.l.b16 %v570
      %v611 = vunpack.c.l.b16 %v571
      %v612 = vunpack.c.l.b16 %v572
      %v613 = vpack.c.b16 %v610, %v609
      %v614 = vpack.c.b16 %v612, %v611
      %vm615 = vcmask 523264
      %v617 = vsel %vm615, %v613, 0
      %v620 = vsel %vm615, %v614, 0
      %622 = vmatpush.bf16.msra.mxu0 0
      %623 = vmatpush.bf16.msra.mxu0 0
      %624 = vmatpush.bf16.msra.mxu0 0
      %625 = vmatpush.bf16.msra.mxu0 0
      %626 = vmatpush.bf16.msra.mxu0 %v579
      %627 = vmatpush.bf16.msra.mxu0 %v577
      %628 = vmatpush.bf16.msra.mxu0 %v575
      %629 = vmatpush.bf16.msra.mxu0 %v573
      %630 = vmatmul.bf16.gmra.mxu0 %v617
      %v631 = vpop.f32.mrf.mxu0
      %v632 = vadd.f32 %v588, %v631
      %v633 = vpop.f32.mrf.mxu0
      %v634 = vadd.f32 %v593, %v633
      %635 = vmatmul.bf16.gmra.mxu0 %v620
      %v636 = vpop.f32.mrf.mxu0
      %v637 = vadd.f32 %v598, %v636
      %v638 = vpop.f32.mrf.mxu0
      %v639 = vadd.f32 %v603, %v638
      %640 = vdwg.mxu0
      %641 = vmatpush.bf16.msra.mxu0 0
      %642 = vmatpush.bf16.msra.mxu0 0
      %643 = vmatpush.bf16.msra.mxu0 0
      %644 = vmatpush.bf16.msra.mxu0 0
      %645 = vmatpush.bf16.msra.mxu0 %v580
      %646 = vmatpush.bf16.msra.mxu0 %v578
      %647 = vmatpush.bf16.msra.mxu0 %v576
      %648 = vmatpush.bf16.msra.mxu0 %v574
      %649 = vmatmul.bf16.gmra.mxu0 %v617
      %v650 = vpop.f32.mrf.mxu0
      %v651 = vadd.f32 %v588, %v650
      %v652 = vpop.f32.mrf.mxu0
      %v653 = vadd.f32 %v593, %v652
      %654 = vmatmul.bf16.gmra.mxu0 %v620
      %v655 = vpop.f32.mrf.mxu0
      %v656 = vadd.f32 %v598, %v655
      %v657 = vpop.f32.mrf.mxu0
      %v658 = vadd.f32 %v603, %v657
      %659 = vdwg.mxu0
      %v660 = vmax.f32 %v632, 0.0
      %v661 = vmax.f32 %v651, 0.0
      %v662 = vmax.f32 %v634, 0.0
      %v663 = vmax.f32 %v653, 0.0
      %v664 = vmax.f32 %v637, 0.0
      %v665 = vmax.f32 %v656, 0.0
      %v666 = vmax.f32 %v639, 0.0
      %v667 = vmax.f32 %v658, 0.0
      %v668 = vld [vmem:[%s5] sm:$0xf]
      %v669 = vld [vmem:[%s5 + $0x4] sm:$0xf]
      %v670 = vpack.c.bf16 %v662, %v660
      %v671 = vpack.c.bf16 %v663, %v661
      %v672 = vpack.c.bf16 %v666, %v664
      %v673 = vpack.c.bf16 %v667, %v665
      %v674 = vld [vmem:[%s6] sm:$0xff]
      %v675 = vld [vmem:[%s6 + $0x8] sm:$0xff]
      %677 = vset.pattern.permute.xlu0 0
      %678 = vperm.xlu0 %677, %v674
      %v679 = vpop.permute.xlu0 %678
      %682 = vset.pattern.permute.xlu0 0
      %683 = vperm.xlu0 %682, %v675
      %v684 = vpop.permute.xlu0 %683
      %v688 = vunpack.c.l.b16 %v668
      %v689 = vunpack.c.l.b16 %v669
      %v690 = vpack.c.b16 %v689, %v688
      %vm691 = vcmask 261120
      %v693 = vsel %vm691, %v690, 0
      %695 = vmatpush.bf16.msra.mxu0 0
      %696 = vmatpush.bf16.msra.mxu0 0
      %697 = vmatpush.bf16.msra.mxu0 0
      %698 = vmatpush.bf16.msra.mxu0 0
      %699 = vmatpush.bf16.msra.mxu0 0
      %700 = vmatpush.bf16.msra.mxu0 0
      %701 = vmatpush.bf16.msra.mxu0 %v672
      %702 = vmatpush.bf16.msra.mxu0 %v670
      %703 = vmatmul.bf16.gmra.mxu0 %v693
      %v704 = vpop.f32.mrf.mxu0
      %v705 = vadd.f32 %v679, %v704
      %v706 = vpop.f32.mrf.mxu0
      %v707 = vadd.f32 %v684, %v706
      %708 = vdwg.mxu0
      %709 = vmatpush.bf16.msra.mxu0 0
      %710 = vmatpush.bf16.msra.mxu0 0
      %711 = vmatpush.bf16.msra.mxu0 0
      %712 = vmatpush.bf16.msra.mxu0 0
      %713 = vmatpush.bf16.msra.mxu0 0
      %714 = vmatpush.bf16.msra.mxu0 0
      %715 = vmatpush.bf16.msra.mxu0 %v673
      %716 = vmatpush.bf16.msra.mxu0 %v671
      %717 = vmatmul.bf16.gmra.mxu0 %v693
      %v718 = vpop.f32.mrf.mxu0
      %v719 = vadd.f32 %v679, %v718
      %v720 = vpop.f32.mrf.mxu0
      %v721 = vadd.f32 %v684, %v720
      %722 = vdwg.mxu0
      %v723 = vmax.f32 %v705, 0.0
      %v724 = vmax.f32 %v719, 0.0
      %v725 = vmax.f32 %v707, 0.0
      %v726 = vmax.f32 %v721, 0.0
      %v727 = vld [vmem:[%s7] sm:$0xf]
      %v728 = vpack.c.bf16 %v725, %v723
      %v729 = vpack.c.bf16 %v726, %v724
      %vm730 = vcmask 130048
      %v732 = vsel %vm730, %v727, 0
      %734 = vmatpush.bf16.msra.mxu0 0
      %735 = vmatpush.bf16.msra.mxu0 0
      %736 = vmatpush.bf16.msra.mxu0 0
      %737 = vmatpush.bf16.msra.mxu0 0
      %738 = vmatpush.bf16.msra.mxu0 0
      %739 = vmatpush.bf16.msra.mxu0 0
      %740 = vmatpush.bf16.msra.mxu0 0
      %741 = vmatpush.bf16.msra.mxu0 %v728
      %742 = vmatmul.bf16.gmra.mxu0 %v732
      %v743 = vpop.f32.mrf.mxu0
      %v744 = vadd.f32 0.0, %v743
      %v745 = vpop.f32.mrf.mxu0
      %746 = vdwg.mxu0
      %747 = vmatpush.bf16.msra.mxu0 0
      %748 = vmatpush.bf16.msra.mxu0 0
      %749 = vmatpush.bf16.msra.mxu0 0
      %750 = vmatpush.bf16.msra.mxu0 0
      %751 = vmatpush.bf16.msra.mxu0 0
      %752 = vmatpush.bf16.msra.mxu0 0
      %753 = vmatpush.bf16.msra.mxu0 0
      %754 = vmatpush.bf16.msra.mxu0 %v729
      %755 = vmatmul.bf16.gmra.mxu0 %v732
      %v756 = vpop.f32.mrf.mxu0
      %v757 = vadd.f32 0.0, %v756
      %v758 = vpop.f32.mrf.mxu0
      %759 = vdwg.mxu0
      %v760 = vld [vmem:[%s8] sm:$0x7]
      %762 = vset.pattern.permute.xlu0 0
      %763 = vperm.xlu0 %762, %v760
      %v764 = vpop.permute.xlu0 %763
      %v766 = vadd.f32 %v744, %v764
      %v767 = vadd.f32 %v757, %v764
      %v768 = vtanh.pop %v766
      %v769 = vtanh.pop %v767
      %v772 = vrot.slane %v769, 4
      %v773 = vsel %vm488, %v768, %v772
      %775 = vst [vmem:[%s390] sm:$0x77] %v773
      %s776 = smul.u32 2, %s25
      %p777 = scmp.lt.s32.totalorder %s24, 1
      %s778 = scalar_select %p777, %s24, 1
      %p779 = scmp.lt.s32.totalorder %s776, 1
      %s780 = scalar_select %p779, %s776, 1
      %s781 = smul.addr %s778, 2
      %s782 = sadd.s32 %s780, %s781
      %s783 = smul.addr %s782, 4
      %s784 = scalar_lea.vmem %s9, %s783
      // Predicated region
      $region57: #{ae_curskenet_forward.3} parent=55 // pred_check
        %p785 = pneg %p253
      $region58: #{ae_curskenet_forward.3} parent=55 // pred_check_branch
        %787 = sbr.rel (%p785) target = $region60
      $region59: #{ae_curskenet_forward.3} parent=55 // pred_region
        %s788 = smul.u32 2, %s25
      $region60: #{ae_curskenet_forward.3} parent=55 // pred_fallthru
        _
    $region56: #{ae_curskenet_forward.3} parent=5 // pred_fallthru
      _
    %p789 = scmp.le.s32.totalorder 2, %s15
    // Predicated region
    $region61: #{ae_curskenet_forward.3} parent=5 // pred_check
      %p790 = pneg %p789
    $region62: #{ae_curskenet_forward.3} parent=5 // pred_check_branch
      %792 = sbr.rel (%p790) target = $region64
    $region63: #{ae_curskenet_forward.3} parent=5 // pred_region
      %s793 = ssub.s32 %s15, 2
      // Predicated region
      $region65: #{ae_curskenet_forward.3} parent=63 // pred_check
        %p794 = pneg %p259
      $region66: #{ae_curskenet_forward.3} parent=63 // pred_check_branch
        %796 = sbr.rel (%p794) target = $region68
      $region67: #{ae_curskenet_forward.3} parent=63 // pred_region
        %s797 = smul.u32 2, %s27
        %p798 = scmp.lt.s32.totalorder %s26, 1
        %s799 = scalar_select %p798, %s26, 1
        %p800 = scmp.lt.s32.totalorder %s797, 1
        %s801 = scalar_select %p800, %s797, 1
        %s802 = smul.addr %s799, 2
        %s803 = sadd.s32 %s801, %s802
        %s804 = smul.addr %s803, 4
        %s805 = scalar_lea.vmem %s9, %s804
      $region68: #{ae_curskenet_forward.3} parent=63 // pred_fallthru
        _
    $region64: #{ae_curskenet_forward.3} parent=5 // pred_fallthru
      _
  $region6: #{ae_curskenet_forward.3} parent=0 // loop_footer
    %s19 = sadd.s32 1, %s15
  $region7: #{ae_curskenet_forward.3} parent=0 // loop_footer_branch
    %14 = sbr.rel target = $region3
  $region8: #{ae_curskenet_forward.3} parent=0 // loop_exit
    _

// kernel: ae_curskenet_forward.2
$region0: #{ae_curskenet_forward.2}
  #allocation0 [shape = 'u32[]', space=smem, size = 0x4, offset = 0x4, fixed_abs, tag = 'smem constant byte address 0x4 - core index']
  #allocation1 [shape = 'u32[72,128]{1,0:T(1,128)}', space=vmem, size = 0x9000, scoped, tag = 'internal scratch']
  #allocation2 [shape = 'f32[1024,1]{1,0:T(8,128)}', space=vmem, size = 0x80000, scoped, tag = 'scratch operand']
  %s0 = inlined_call_operand.vmem [shape: bf16[2,8,384], index: 0, kind: input, shape index: {}]
  %s1 = inlined_call_operand.vmem [shape: bf16[64,8], index: 1, kind: input, shape index: {}]
  %s2 = inlined_call_operand.vmem [shape: f32[64,1], index: 2, kind: input, shape index: {}]
  %s3 = inlined_call_operand.vmem [shape: bf16[128,64], index: 3, kind: input, shape index: {}]
  %s4 = inlined_call_operand.vmem [shape: f32[128,1], index: 4, kind: input, shape index: {}]
  %s5 = inlined_call_operand.vmem [shape: bf16[1024,128], index: 5, kind: input, shape index: {}]
  %s6 = inlined_call_operand.vmem [shape: f32[1024,1], index: 6, kind: input, shape index: {}]
  %s7 = inlined_call_operand.vmem [shape: f32[2,1024,1], index: 7, kind: output, shape index: {}]
  %s8 = sld [smem:[#allocation0]]
  $region69: #{ae_curskenet_forward.2} parent=0
    _
  %s10 = ssub.s32 1, %s8
  %s11 = scalar_select 0, %s10, %s8
  loop: start=0, step=1, limit=4
  $region2: #{ae_curskenet_forward.2} parent=0 // loop_pre_header
    _
  $region3: #{ae_curskenet_forward.2} parent=0 // loop_header
    %s13 = sphi 0, %s17
    %p14 = scmp.ge.s32.totalorder %s13, 4
    %s20 = sphi 0, %s32
    %s21 = sphi 0, %s28
    %s22 = sphi 0, %s20
    %s23 = sphi 0, %s21
    %s24 = sphi 0, %s22
    %s25 = sphi 0, %s23
    %s37 = sphi 0, %s39
    %s40 = sphi 0, %s37
    %s41 = sphi 0, %s40
    %s57 = sphi 0, %s41
    %s61 = sphi 0, %s61
    %s63 = sphi 0, %s61
    %s64 = sphi 0, %s63
    %s78 = sphi 0, %s64
    %s82 = sphi 0, %s82
    %s84 = sphi 0, %s82
    %s85 = sphi 0, %s84
    %s99 = sphi 0, %s85
    %s103 = sphi 0, %s103
    %s105 = sphi 0, %s103
    %s106 = sphi 0, %s105
    %s120 = sphi 0, %s106
    %s124 = sphi 0, %s124
    %s126 = sphi 0, %s124
    %s127 = sphi 0, %s126
    %s141 = sphi 0, %s127
    %s145 = sphi 0, %s145
    %s147 = sphi 0, %s145
    %s148 = sphi 0, %s147
    %s162 = sphi 0, %s148
    %s166 = sphi 0, %s166
    %s168 = sphi 0, %s166
    %s169 = sphi 0, %s168
    %s183 = sphi 0, %s169
    %s189 = sphi 0, %s191
    %s192 = sphi 0, %s189
    %s193 = sphi 0, %s192
    %s209 = sphi 0, %s193
  $region4: #{ae_curskenet_forward.2} parent=0 // loop_header_branch
    %16 = sbr.rel (%p14) target = $region8
  $region5: #{ae_curskenet_forward.2} parent=0 // loop_body
    %s18 = ssub.s32 %s13, 1
    %s19 = ssub.s32 %s13, 2
    %s26 = sadd.s32 1, %s21
    %p27 = scmp.ge.s32.totalorder %s26, 1
    %s28 = scalar_select %p27, 0, %s26
    %s29 = sadd.s32 1, %s20
    %s30 = scalar_select %p27, %s29, %s20
    %p31 = scmp.ge.s32.totalorder %s30, 2
    %s32 = scalar_select %p31, 0, %s30
    %s33 = ssub.s32 %s20, %s32
    %s34 = ssub.s32 %s21, %s28
    %s35 = sor.u32 %s33, %s34
    %p36 = scmp.eq.s32.totalorder %s35, 0
    %s38 = sadd.s32 %s37, 1
    %s39 = scalar_select %p36, %s37, %s38
    %p42 = pneg %p36
    %p43 = scmp.eq.s32.totalorder %s13, 1
    %p44 = por %p42, %p43
    %p45 = scmp.ne.s32.totalorder %s37, %s40
    %p46 = scmp.eq.s32.totalorder %s13, 0
    %p47 = por %p45, %p46
    %p48 = scmp.ne.s32.totalorder %s37, %s40
    %p49 = scmp.eq.s32.totalorder %s18, 1
    %p50 = por %p48, %p49
    %p51 = scmp.ne.s32.totalorder %s40, %s41
    %p52 = scmp.eq.s32.totalorder %s18, 0
    %p53 = por %p51, %p52
    %p54 = scmp.ne.s32.totalorder %s40, %s41
    %p55 = scmp.eq.s32.totalorder %s19, 1
    %p56 = por %p54, %p55
    %p58 = scmp.ne.s32.totalorder %s41, %s57
    %p59 = scmp.eq.s32.totalorder %s19, 0
    %p60 = por %p58, %p59
    %s62 = sadd.s32 %s61, 1
    %p65 = scmp.eq.s32.totalorder %s13, 1
    %p66 = scmp.ne.s32.totalorder %s61, %s63
    %p67 = scmp.eq.s32.totalorder %s13, 0
    %p68 = por %p66, %p67
    %p69 = scmp.ne.s32.totalorder %s61, %s63
    %p70 = scmp.eq.s32.totalorder %s18, 1
    %p71 = por %p69, %p70
    %p72 = scmp.ne.s32.totalorder %s63, %s64
    %p73 = scmp.eq.s32.totalorder %s18, 0
    %p74 = por %p72, %p73
    %p75 = scmp.ne.s32.totalorder %s63, %s64
    %p76 = scmp.eq.s32.totalorder %s19, 1
    %p77 = por %p75, %p76
    %p79 = scmp.ne.s32.totalorder %s64, %s78
    %p80 = scmp.eq.s32.totalorder %s19, 0
    %p81 = por %p79, %p80
    %s83 = sadd.s32 %s82, 1
    %p86 = scmp.eq.s32.totalorder %s13, 1
    %p87 = scmp.ne.s32.totalorder %s82, %s84
    %p88 = scmp.eq.s32.totalorder %s13, 0
    %p89 = por %p87, %p88
    %p90 = scmp.ne.s32.totalorder %s82, %s84
    %p91 = scmp.eq.s32.totalorder %s18, 1
    %p92 = por %p90, %p91
    %p93 = scmp.ne.s32.totalorder %s84, %s85
    %p94 = scmp.eq.s32.totalorder %s18, 0
    %p95 = por %p93, %p94
    %p96 = scmp.ne.s32.totalorder %s84, %s85
    %p97 = scmp.eq.s32.totalorder %s19, 1
    %p98 = por %p96, %p97
    %p100 = scmp.ne.s32.totalorder %s85, %s99
    %p101 = scmp.eq.s32.totalorder %s19, 0
    %p102 = por %p100, %p101
    %s104 = sadd.s32 %s103, 1
    %p107 = scmp.eq.s32.totalorder %s13, 1
    %p108 = scmp.ne.s32.totalorder %s103, %s105
    %p109 = scmp.eq.s32.totalorder %s13, 0
    %p110 = por %p108, %p109
    %p111 = scmp.ne.s32.totalorder %s103, %s105
    %p112 = scmp.eq.s32.totalorder %s18, 1
    %p113 = por %p111, %p112
    %p114 = scmp.ne.s32.totalorder %s105, %s106
    %p115 = scmp.eq.s32.totalorder %s18, 0
    %p116 = por %p114, %p115
    %p117 = scmp.ne.s32.totalorder %s105, %s106
    %p118 = scmp.eq.s32.totalorder %s19, 1
    %p119 = por %p117, %p118
    %p121 = scmp.ne.s32.totalorder %s106, %s120
    %p122 = scmp.eq.s32.totalorder %s19, 0
    %p123 = por %p121, %p122
    %s125 = sadd.s32 %s124, 1
    %p128 = scmp.eq.s32.totalorder %s13, 1
    %p129 = scmp.ne.s32.totalorder %s124, %s126
    %p130 = scmp.eq.s32.totalorder %s13, 0
    %p131 = por %p129, %p130
    %p132 = scmp.ne.s32.totalorder %s124, %s126
    %p133 = scmp.eq.s32.totalorder %s18, 1
    %p134 = por %p132, %p133
    %p135 = scmp.ne.s32.totalorder %s126, %s127
    %p136 = scmp.eq.s32.totalorder %s18, 0
    %p137 = por %p135, %p136
    %p138 = scmp.ne.s32.totalorder %s126, %s127
    %p139 = scmp.eq.s32.totalorder %s19, 1
    %p140 = por %p138, %p139
    %p142 = scmp.ne.s32.totalorder %s127, %s141
    %p143 = scmp.eq.s32.totalorder %s19, 0
    %p144 = por %p142, %p143
    %s146 = sadd.s32 %s145, 1
    %p149 = scmp.eq.s32.totalorder %s13, 1
    %p150 = scmp.ne.s32.totalorder %s145, %s147
    %p151 = scmp.eq.s32.totalorder %s13, 0
    %p152 = por %p150, %p151
    %p153 = scmp.ne.s32.totalorder %s145, %s147
    %p154 = scmp.eq.s32.totalorder %s18, 1
    %p155 = por %p153, %p154
    %p156 = scmp.ne.s32.totalorder %s147, %s148
    %p157 = scmp.eq.s32.totalorder %s18, 0
    %p158 = por %p156, %p157
    %p159 = scmp.ne.s32.totalorder %s147, %s148
    %p160 = scmp.eq.s32.totalorder %s19, 1
    %p161 = por %p159, %p160
    %p163 = scmp.ne.s32.totalorder %s148, %s162
    %p164 = scmp.eq.s32.totalorder %s19, 0
    %p165 = por %p163, %p164
    %s167 = sadd.s32 %s166, 1
    %p170 = scmp.eq.s32.totalorder %s13, 1
    %p171 = scmp.ne.s32.totalorder %s166, %s168
    %p172 = scmp.eq.s32.totalorder %s13, 0
    %p173 = por %p171, %p172
    %p174 = scmp.ne.s32.totalorder %s166, %s168
    %p175 = scmp.eq.s32.totalorder %s18, 1
    %p176 = por %p174, %p175
    %p177 = scmp.ne.s32.totalorder %s168, %s169
    %p178 = scmp.eq.s32.totalorder %s18, 0
    %p179 = por %p177, %p178
    %p180 = scmp.ne.s32.totalorder %s168, %s169
    %p181 = scmp.eq.s32.totalorder %s19, 1
    %p182 = por %p180, %p181
    %p184 = scmp.ne.s32.totalorder %s169, %s183
    %p185 = scmp.eq.s32.totalorder %s19, 0
    %p186 = por %p184, %p185
    %s187 = ssub.s32 %s20, %s32
    %p188 = scmp.eq.s32.totalorder %s187, 0
    %s190 = sadd.s32 %s189, 1
    %s191 = scalar_select %p188, %s189, %s190
    %p194 = pneg %p188
    %p195 = scmp.eq.s32.totalorder %s13, 1
    %p196 = por %p194, %p195
    %p197 = scmp.ne.s32.totalorder %s189, %s192
    %p198 = scmp.eq.s32.totalorder %s13, 0
    %p199 = por %p197, %p198
    %p200 = scmp.ne.s32.totalorder %s189, %s192
    %p201 = scmp.eq.s32.totalorder %s18, 1
    %p202 = por %p200, %p201
    %p203 = scmp.ne.s32.totalorder %s192, %s193
    %p204 = scmp.eq.s32.totalorder %s18, 0
    %p205 = por %p203, %p204
    %p206 = scmp.ne.s32.totalorder %s192, %s193
    %p207 = scmp.eq.s32.totalorder %s19, 1
    %p208 = por %p206, %p207
    %p210 = scmp.ne.s32.totalorder %s193, %s209
    %p211 = scmp.eq.s32.totalorder %s19, 0
    %p212 = por %p210, %p211
    %p213 = scmp.le.s32.totalorder 1, %s13
    %p214 = scmp.lt.s32.totalorder %s13, 3
    %p215 = pnand %p213, %p214
    %p216 = pneg %p215
    // Predicated region
    $region9: #{ae_curskenet_forward.2} parent=5 // pred_check
      _
    $region10: #{ae_curskenet_forward.2} parent=5 // pred_check_branch
      %218 = sbr.rel (%p215) target = $region12
    $region11: #{ae_curskenet_forward.2} parent=5 // pred_region
      %s219 = ssub.s32 %s13, 1
      // Predicated region
      $region13: #{ae_curskenet_forward.2} parent=11 // pred_check
        %p220 = pneg %p74
      $region14: #{ae_curskenet_forward.2} parent=11 // pred_check_branch
        %222 = sbr.rel (%p220) target = $region16
      $region15: #{ae_curskenet_forward.2} parent=11 // pred_region
        _
      $region16: #{ae_curskenet_forward.2} parent=11 // pred_fallthru
        _
      // Predicated region
      $region17: #{ae_curskenet_forward.2} parent=11 // pred_check
        %p223 = pneg %p95
      $region18: #{ae_curskenet_forward.2} parent=11 // pred_check_branch
        %225 = sbr.rel (%p223) target = $region20
      $region19: #{ae_curskenet_forward.2} parent=11 // pred_region
        _
      $region20: #{ae_curskenet_forward.2} parent=11 // pred_fallthru
        _
      // Predicated region
      $region21: #{ae_curskenet_forward.2} parent=11 // pred_check
        %p226 = pneg %p116
      $region22: #{ae_curskenet_forward.2} parent=11 // pred_check_branch
        %228 = sbr.rel (%p226) target = $region24
      $region23: #{ae_curskenet_forward.2} parent=11 // pred_region
        _
      $region24: #{ae_curskenet_forward.2} parent=11 // pred_fallthru
        _
      // Predicated region
      $region25: #{ae_curskenet_forward.2} parent=11 // pred_check
        %p229 = pneg %p137
      $region26: #{ae_curskenet_forward.2} parent=11 // pred_check_branch
        %231 = sbr.rel (%p229) target = $region28
      $region27: #{ae_curskenet_forward.2} parent=11 // pred_region
        _
      $region28: #{ae_curskenet_forward.2} parent=11 // pred_fallthru
        _
      // Predicated region
      $region29: #{ae_curskenet_forward.2} parent=11 // pred_check
        %p232 = pneg %p158
      $region30: #{ae_curskenet_forward.2} parent=11 // pred_check_branch
        %234 = sbr.rel (%p232) target = $region32
      $region31: #{ae_curskenet_forward.2} parent=11 // pred_region
        _
      $region32: #{ae_curskenet_forward.2} parent=11 // pred_fallthru
        _
      // Predicated region
      $region33: #{ae_curskenet_forward.2} parent=11 // pred_check
        %p235 = pneg %p179
      $region34: #{ae_curskenet_forward.2} parent=11 // pred_check_branch
        %237 = sbr.rel (%p235) target = $region36
      $region35: #{ae_curskenet_forward.2} parent=11 // pred_region
        _
      $region36: #{ae_curskenet_forward.2} parent=11 // pred_fallthru
        _
    $region12: #{ae_curskenet_forward.2} parent=5 // pred_fallthru
      _
    %p238 = scmp.lt.s32.totalorder %s13, 2
    // Predicated region
    $region37: #{ae_curskenet_forward.2} parent=5 // pred_check
      %p239 = pneg %p238
    $region38: #{ae_curskenet_forward.2} parent=5 // pred_check_branch
      %241 = sbr.rel (%p239) target = $region40
    $region39: #{ae_curskenet_forward.2} parent=5 // pred_region
      // Predicated region
      $region41: #{ae_curskenet_forward.2} parent=39 // pred_check
        %p242 = pneg %p47
      $region42: #{ae_curskenet_forward.2} parent=39 // pred_check_branch
        %244 = sbr.rel (%p242) target = $region44
      $region43: #{ae_curskenet_forward.2} parent=39 // pred_region
        %s245 = smul.u32 3, %s21
        %p246 = scmp.lt.s32.totalorder %s20, 1
        %s247 = scalar_select %p246, %s20, 1
        %p248 = scmp.lt.s32.totalorder %s245, 2
        %s249 = scalar_select %p248, %s245, 2
        %s250 = smul.addr %s247, 3
        %s251 = sadd.s32 %s249, %s250
        %s252 = smul.addr %s251, 4
        %s253 = scalar_lea.vmem %s0, %s252
        %s254 = smul.u32 3, %s21
      $region44: #{ae_curskenet_forward.2} parent=39 // pred_fallthru
        _
    $region40: #{ae_curskenet_forward.2} parent=5 // pred_fallthru
      _
    %p255 = scmp.le.s32.totalorder 1, %s13
    %p256 = scmp.lt.s32.totalorder %s13, 3
    %p257 = pnand %p255, %p256
    %p258 = pneg %p257
    // Predicated region
    $region45: #{ae_curskenet_forward.2} parent=5 // pred_check
      _
    $region46: #{ae_curskenet_forward.2} parent=5 // pred_check_branch
      %260 = sbr.rel (%p257) target = $region48
    $region47: #{ae_curskenet_forward.2} parent=5 // pred_region
      %s261 = ssub.s32 %s13, 1
      %s262 = smul.u32 3, %s23
      %p263 = scmp.lt.s32.totalorder %s22, 1
      %s264 = scalar_select %p263, %s22, 1
      %p265 = scmp.lt.s32.totalorder %s262, 2
      %s266 = scalar_select %p265, %s262, 2
      %s267 = smul.addr %s264, 3
      %s268 = sadd.s32 %s266, %s267
      %s269 = smul.addr %s268, 4
      %s270 = scalar_lea.vmem %s0, %s269
      %p271 = pneg %p53
      %p272 = pneg %p50
      %p273 = pneg %p74
      %p274 = pneg %p71
      %p275 = pneg %p95
      %p276 = pneg %p92
      %p277 = pneg %p116
      %p278 = pneg %p113
      %p279 = pneg %p137
      %p280 = pneg %p134
      %p281 = pneg %p158
      %p282 = pneg %p155
      %p283 = pneg %p179
      %p284 = pneg %p176
      %p285 = pneg %p205
      %p286 = pneg %p202
      %p287 = scmp.lt.s32.totalorder %s22, 1
      %s288 = scalar_select %p287, %s22, 1
      %s289 = smul.addr %s288, 128
      %s290 = smul.addr %s289, 8
      %s291 = scalar_lea.vmem %s7, %s290
      %s292 = smul.u32 3, %s23
      %p293 = scmp.lt.s32.totalorder %s22, 1
      %s294 = scalar_select %p293, %s22, 1
      %p295 = scmp.lt.s32.totalorder %s292, 2
      %s296 = scalar_select %p295, %s292, 2
      %s297 = smul.addr %s294, 3
      %s298 = sadd.s32 %s296, %s297
      %s299 = smul.addr %s298, 4
      %s300 = scalar_lea.vmem %s0, %s299
      %s301 = smul.u32 3, %s23
      %p302 = scmp.lt.s32.totalorder %s22, 1
      %s303 = scalar_select %p302, %s22, 1
      %s304 = smul.addr %s303, 128
      %s305 = smul.addr %s304, 8
      %s306 = scalar_lea.vmem %s7, %s305
      %p308 = scmp.eq.s32.totalorder %s23, 0
      // Predicated region
      $region49: #{ae_curskenet_forward.2} parent=47 // pred_check
        %p309 = pneg %p308
      $region50: #{ae_curskenet_forward.2} parent=47 // pred_check_branch
        %311 = sbr.rel (%p309) target = $region52
      $region51: #{ae_curskenet_forward.2} parent=47 // pred_region
        %vm312 = vcmask 7168
        %313 = vst.msk [vmem:[#allocation2] sm:$0xff] %vm312, -inf
        %314 = vst.msk [vmem:[#allocation2 + $0x8] sm:$0xff] %vm312, -inf
        %315 = vst.msk [vmem:[#allocation2 + $0x10] sm:$0xff] %vm312, -inf
        %316 = vst.msk [vmem:[#allocation2 + $0x18] sm:$0xff] %vm312, -inf
        %317 = vst.msk [vmem:[#allocation2 + $0x20] sm:$0xff] %vm312, -inf
        %318 = vst.msk [vmem:[#allocation2 + $0x28] sm:$0xff] %vm312, -inf
        %319 = vst.msk [vmem:[#allocation2 + $0x30] sm:$0xff] %vm312, -inf
        %320 = vst.msk [vmem:[#allocation2 + $0x38] sm:$0xff] %vm312, -inf
        %321 = vst.msk [vmem:[#allocation2 + $0x40] sm:$0xff] %vm312, -inf
        %322 = vst.msk [vmem:[#allocation2 + $0x48] sm:$0xff] %vm312, -inf
        %323 = vst.msk [vmem:[#allocation2 + $0x50] sm:$0xff] %vm312, -inf
        %324 = vst.msk [vmem:[#allocation2 + $0x58] sm:$0xff] %vm312, -inf
        %325 = vst.msk [vmem:[#allocation2 + $0x60] sm:$0xff] %vm312, -inf
        %326 = vst.msk [vmem:[#allocation2 + $0x68] sm:$0xff] %vm312, -inf
        %327 = vst.msk [vmem:[#allocation2 + $0x70] sm:$0xff] %vm312, -inf
        %328 = vst.msk [vmem:[#allocation2 + $0x78] sm:$0xff] %vm312, -inf
        %329 = vst.msk [vmem:[#allocation2 + $0x80] sm:$0xff] %vm312, -inf
        %330 = vst.msk [vmem:[#allocation2 + $0x88] sm:$0xff] %vm312, -inf
        %331 = vst.msk [vmem:[#allocation2 + $0x90] sm:$0xff] %vm312, -inf
        %332 = vst.msk [vmem:[#allocation2 + $0x98] sm:$0xff] %vm312, -inf
        %333 = vst.msk [vmem:[#allocation2 + $0xa0] sm:$0xff] %vm312, -inf
        %334 = vst.msk [vmem:[#allocation2 + $0xa8] sm:$0xff] %vm312, -inf
        %335 = vst.msk [vmem:[#allocation2 + $0xb0] sm:$0xff] %vm312, -inf
        %336 = vst.msk [vmem:[#allocation2 + $0xb8] sm:$0xff] %vm312, -inf
        %337 = vst.msk [vmem:[#allocation2 + $0xc0] sm:$0xff] %vm312, -inf
        %338 = vst.msk [vmem:[#allocation2 + $0xc8] sm:$0xff] %vm312, -inf
        %339 = vst.msk [vmem:[#allocation2 + $0xd0] sm:$0xff] %vm312, -inf
        %340 = vst.msk [vmem:[#allocation2 + $0xd8] sm:$0xff] %vm312, -inf
        %341 = vst.msk [vmem:[#allocation2 + $0xe0] sm:$0xff] %vm312, -inf
        %342 = vst.msk [vmem:[#allocation2 + $0xe8] sm:$0xff] %vm312, -inf
        %343 = vst.msk [vmem:[#allocation2 + $0xf0] sm:$0xff] %vm312, -inf
        %344 = vst.msk [vmem:[#allocation2 + $0xf8] sm:$0xff] %vm312, -inf
        %345 = vst.msk [vmem:[#allocation2 + $0x100] sm:$0xff] %vm312, -inf
        %346 = vst.msk [vmem:[#allocation2 + $0x108] sm:$0xff] %vm312, -inf
        %347 = vst.msk [vmem:[#allocation2 + $0x110] sm:$0xff] %vm312, -inf
        %348 = vst.msk [vmem:[#allocation2 + $0x118] sm:$0xff] %vm312, -inf
        %349 = vst.msk [vmem:[#allocation2 + $0x120] sm:$0xff] %vm312, -inf
        %350 = vst.msk [vmem:[#allocation2 + $0x128] sm:$0xff] %vm312, -inf
        %351 = vst.msk [vmem:[#allocation2 + $0x130] sm:$0xff] %vm312, -inf
        %352 = vst.msk [vmem:[#allocation2 + $0x138] sm:$0xff] %vm312, -inf
        %353 = vst.msk [vmem:[#allocation2 + $0x140] sm:$0xff] %vm312, -inf
        %354 = vst.msk [vmem:[#allocation2 + $0x148] sm:$0xff] %vm312, -inf
        %355 = vst.msk [vmem:[#allocation2 + $0x150] sm:$0xff] %vm312, -inf
        %356 = vst.msk [vmem:[#allocation2 + $0x158] sm:$0xff] %vm312, -inf
        %357 = vst.msk [vmem:[#allocation2 + $0x160] sm:$0xff] %vm312, -inf
        %358 = vst.msk [vmem:[#allocation2 + $0x168] sm:$0xff] %vm312, -inf
        %359 = vst.msk [vmem:[#allocation2 + $0x170] sm:$0xff] %vm312, -inf
        %360 = vst.msk [vmem:[#allocation2 + $0x178] sm:$0xff] %vm312, -inf
        %361 = vst.msk [vmem:[#allocation2 + $0x180] sm:$0xff] %vm312, -inf
        %362 = vst.msk [vmem:[#allocation2 + $0x188] sm:$0xff] %vm312, -inf
        %363 = vst.msk [vmem:[#allocation2 + $0x190] sm:$0xff] %vm312, -inf
        %364 = vst.msk [vmem:[#allocation2 + $0x198] sm:$0xff] %vm312, -inf
        %365 = vst.msk [vmem:[#allocation2 + $0x1a0] sm:$0xff] %vm312, -inf
        %366 = vst.msk [vmem:[#allocation2 + $0x1a8] sm:$0xff] %vm312, -inf
        %367 = vst.msk [vmem:[#allocation2 + $0x1b0] sm:$0xff] %vm312, -inf
        %368 = vst.msk [vmem:[#allocation2 + $0x1b8] sm:$0xff] %vm312, -inf
        %369 = vst.msk [vmem:[#allocation2 + $0x1c0] sm:$0xff] %vm312, -inf
        %370 = vst.msk [vmem:[#allocation2 + $0x1c8] sm:$0xff] %vm312, -inf
        %371 = vst.msk [vmem:[#allocation2 + $0x1d0] sm:$0xff] %vm312, -inf
        %372 = vst.msk [vmem:[#allocation2 + $0x1d8] sm:$0xff] %vm312, -inf
        %373 = vst.msk [vmem:[#allocation2 + $0x1e0] sm:$0xff] %vm312, -inf
        %374 = vst.msk [vmem:[#allocation2 + $0x1e8] sm:$0xff] %vm312, -inf
        %375 = vst.msk [vmem:[#allocation2 + $0x1f0] sm:$0xff] %vm312, -inf
        %376 = vst.msk [vmem:[#allocation2 + $0x1f8] sm:$0xff] %vm312, -inf
        %377 = vst.msk [vmem:[#allocation2 + $0x200] sm:$0xff] %vm312, -inf
        %378 = vst.msk [vmem:[#allocation2 + $0x208] sm:$0xff] %vm312, -inf
        %379 = vst.msk [vmem:[#allocation2 + $0x210] sm:$0xff] %vm312, -inf
        %380 = vst.msk [vmem:[#allocation2 + $0x218] sm:$0xff] %vm312, -inf
        %381 = vst.msk [vmem:[#allocation2 + $0x220] sm:$0xff] %vm312, -inf
        %382 = vst.msk [vmem:[#allocation2 + $0x228] sm:$0xff] %vm312, -inf
        %383 = vst.msk [vmem:[#allocation2 + $0x230] sm:$0xff] %vm312, -inf
        %384 = vst.msk [vmem:[#allocation2 + $0x238] sm:$0xff] %vm312, -inf
        %385 = vst.msk [vmem:[#allocation2 + $0x240] sm:$0xff] %vm312, -inf
        %386 = vst.msk [vmem:[#allocation2 + $0x248] sm:$0xff] %vm312, -inf
        %387 = vst.msk [vmem:[#allocation2 + $0x250] sm:$0xff] %vm312, -inf
        %388 = vst.msk [vmem:[#allocation2 + $0x258] sm:$0xff] %vm312, -inf
        %389 = vst.msk [vmem:[#allocation2 + $0x260] sm:$0xff] %vm312, -inf
        %390 = vst.msk [vmem:[#allocation2 + $0x268] sm:$0xff] %vm312, -inf
        %391 = vst.msk [vmem:[#allocation2 + $0x270] sm:$0xff] %vm312, -inf
        %392 = vst.msk [vmem:[#allocation2 + $0x278] sm:$0xff] %vm312, -inf
        %393 = vst.msk [vmem:[#allocation2 + $0x280] sm:$0xff] %vm312, -inf
        %394 = vst.msk [vmem:[#allocation2 + $0x288] sm:$0xff] %vm312, -inf
        %395 = vst.msk [vmem:[#allocation2 + $0x290] sm:$0xff] %vm312, -inf
        %396 = vst.msk [vmem:[#allocation2 + $0x298] sm:$0xff] %vm312, -inf
        %397 = vst.msk [vmem:[#allocation2 + $0x2a0] sm:$0xff] %vm312, -inf
        %398 = vst.msk [vmem:[#allocation2 + $0x2a8] sm:$0xff] %vm312, -inf
        %399 = vst.msk [vmem:[#allocation2 + $0x2b0] sm:$0xff] %vm312, -inf
        %400 = vst.msk [vmem:[#allocation2 + $0x2b8] sm:$0xff] %vm312, -inf
        %401 = vst.msk [vmem:[#allocation2 + $0x2c0] sm:$0xff] %vm312, -inf
        %402 = vst.msk [vmem:[#allocation2 + $0x2c8] sm:$0xff] %vm312, -inf
        %403 = vst.msk [vmem:[#allocation2 + $0x2d0] sm:$0xff] %vm312, -inf
        %404 = vst.msk [vmem:[#allocation2 + $0x2d8] sm:$0xff] %vm312, -inf
        %405 = vst.msk [vmem:[#allocation2 + $0x2e0] sm:$0xff] %vm312, -inf
        %406 = vst.msk [vmem:[#allocation2 + $0x2e8] sm:$0xff] %vm312, -inf
        %407 = vst.msk [vmem:[#allocation2 + $0x2f0] sm:$0xff] %vm312, -inf
        %408 = vst.msk [vmem:[#allocation2 + $0x2f8] sm:$0xff] %vm312, -inf
        %409 = vst.msk [vmem:[#allocation2 + $0x300] sm:$0xff] %vm312, -inf
        %410 = vst.msk [vmem:[#allocation2 + $0x308] sm:$0xff] %vm312, -inf
        %411 = vst.msk [vmem:[#allocation2 + $0x310] sm:$0xff] %vm312, -inf
        %412 = vst.msk [vmem:[#allocation2 + $0x318] sm:$0xff] %vm312, -inf
        %413 = vst.msk [vmem:[#allocation2 + $0x320] sm:$0xff] %vm312, -inf
        %414 = vst.msk [vmem:[#allocation2 + $0x328] sm:$0xff] %vm312, -inf
        %415 = vst.msk [vmem:[#allocation2 + $0x330] sm:$0xff] %vm312, -inf
        %416 = vst.msk [vmem:[#allocation2 + $0x338] sm:$0xff] %vm312, -inf
        %417 = vst.msk [vmem:[#allocation2 + $0x340] sm:$0xff] %vm312, -inf
        %418 = vst.msk [vmem:[#allocation2 + $0x348] sm:$0xff] %vm312, -inf
        %419 = vst.msk [vmem:[#allocation2 + $0x350] sm:$0xff] %vm312, -inf
        %420 = vst.msk [vmem:[#allocation2 + $0x358] sm:$0xff] %vm312, -inf
        %421 = vst.msk [vmem:[#allocation2 + $0x360] sm:$0xff] %vm312, -inf
        %422 = vst.msk [vmem:[#allocation2 + $0x368] sm:$0xff] %vm312, -inf
        %423 = vst.msk [vmem:[#allocation2 + $0x370] sm:$0xff] %vm312, -inf
        %424 = vst.msk [vmem:[#allocation2 + $0x378] sm:$0xff] %vm312, -inf
        %425 = vst.msk [vmem:[#allocation2 + $0x380] sm:$0xff] %vm312, -inf
        %426 = vst.msk [vmem:[#allocation2 + $0x388] sm:$0xff] %vm312, -inf
        %427 = vst.msk [vmem:[#allocation2 + $0x390] sm:$0xff] %vm312, -inf
        %428 = vst.msk [vmem:[#allocation2 + $0x398] sm:$0xff] %vm312, -inf
        %429 = vst.msk [vmem:[#allocation2 + $0x3a0] sm:$0xff] %vm312, -inf
        %430 = vst.msk [vmem:[#allocation2 + $0x3a8] sm:$0xff] %vm312, -inf
        %431 = vst.msk [vmem:[#allocation2 + $0x3b0] sm:$0xff] %vm312, -inf
        %432 = vst.msk [vmem:[#allocation2 + $0x3b8] sm:$0xff] %vm312, -inf
        %433 = vst.msk [vmem:[#allocation2 + $0x3c0] sm:$0xff] %vm312, -inf
        %434 = vst.msk [vmem:[#allocation2 + $0x3c8] sm:$0xff] %vm312, -inf
        %435 = vst.msk [vmem:[#allocation2 + $0x3d0] sm:$0xff] %vm312, -inf
        %436 = vst.msk [vmem:[#allocation2 + $0x3d8] sm:$0xff] %vm312, -inf
        %437 = vst.msk [vmem:[#allocation2 + $0x3e0] sm:$0xff] %vm312, -inf
        %438 = vst.msk [vmem:[#allocation2 + $0x3e8] sm:$0xff] %vm312, -inf
        %439 = vst.msk [vmem:[#allocation2 + $0x3f0] sm:$0xff] %vm312, -inf
        %440 = vst.msk [vmem:[#allocation2 + $0x3f8] sm:$0xff] %vm312, -inf
      $region52: #{ae_curskenet_forward.2} parent=47 // pred_fallthru
        _
      %v441 = vld [vmem:[%s300] sm:$0xff]
      %v442 = vld [vmem:[%s300 + $0x8] sm:$0xf]
      %v443 = vld [vmem:[%s1] sm:$0xf]
      %v444 = vld [vmem:[%s1 + $0x4] sm:$0xf]
      %v445 = vld [vmem:[%s1 + $0x8] sm:$0xf]
      %v446 = vld [vmem:[%s1 + $0xc] sm:$0xf]
      %v447 = vld [vmem:[%s1 + $0x10] sm:$0xf]
      %v448 = vld [vmem:[%s1 + $0x14] sm:$0xf]
      %v449 = vld [vmem:[%s1 + $0x18] sm:$0xf]
      %v450 = vld [vmem:[%s1 + $0x1c] sm:$0xf]
      %v451 = vld [vmem:[%s2] sm:$0xff]
      %v452 = vld [vmem:[%s2 + $0x8] sm:$0xff]
      %v453 = vld [vmem:[%s2 + $0x10] sm:$0xff]
      %v454 = vld [vmem:[%s2 + $0x18] sm:$0xff]
      %v455 = vld [vmem:[%s2 + $0x20] sm:$0xff]
      %v456 = vld [vmem:[%s2 + $0x28] sm:$0xff]
      %v457 = vld [vmem:[%s2 + $0x30] sm:$0xff]
      %v458 = vld [vmem:[%s2 + $0x38] sm:$0xff]
      %460 = vset.pattern.permute.xlu0 0
      %461 = vperm.xlu0 %460, %v451
      %v462 = vpop.permute.xlu0 %461
      %465 = vset.pattern.permute.xlu0 0
      %466 = vperm.xlu0 %465, %v452
      %v467 = vpop.permute.xlu0 %466
      %470 = vset.pattern.permute.xlu0 0
      %471 = vperm.xlu0 %470, %v453
      %v472 = vpop.permute.xlu0 %471
      %475 = vset.pattern.permute.xlu0 0
      %476 = vperm.xlu0 %475, %v454
      %v477 = vpop.permute.xlu0 %476
      %480 = vset.pattern.permute.xlu0 0
      %481 = vperm.xlu0 %480, %v455
      %v482 = vpop.permute.xlu0 %481
      %485 = vset.pattern.permute.xlu0 0
      %486 = vperm.xlu0 %485, %v456
      %v487 = vpop.permute.xlu0 %486
      %490 = vset.pattern.permute.xlu0 0
      %491 = vperm.xlu0 %490, %v457
      %v492 = vpop.permute.xlu0 %491
      %495 = vset.pattern.permute.xlu0 0
      %496 = vperm.xlu0 %495, %v458
      %v497 = vpop.permute.xlu0 %496
      %v507 = vunpack.c.l.b16 %v443
      %v508 = vunpack.c.l.b16 %v444
      %v509 = vunpack.c.l.b16 %v445
      %v510 = vunpack.c.l.b16 %v446
      %v511 = vunpack.c.l.b16 %v447
      %v512 = vunpack.c.l.b16 %v448
      %v513 = vunpack.c.l.b16 %v449
      %v514 = vunpack.c.l.b16 %v450
      %v515 = vpack.c.b16 %v508, %v507
      %v516 = vpack.c.b16 %v510, %v509
      %v517 = vpack.c.b16 %v512, %v511
      %v518 = vpack.c.b16 %v514, %v513
      %v521 = vunpack.c.l.b16 %v441
      %v522 = vunpack.c.h.b16 %v441
      %v523 = vunpack.c.l.b16 %v442
      %v524 = vpack.c.b16 %v521, %v521
      %v525 = vpack.c.b16 %v522, %v522
      %v526 = vpack.c.b16 %v523, %v523
      %vm527 = vcmask 64512
      %v529 = vsel %vm527, %v515, 0
      %v532 = vsel %vm527, %v516, 0
      %v535 = vsel %vm527, %v517, 0
      %v538 = vsel %vm527, %v518, 0
      %vm540 = vcmask 1043456
      %v542 = vsel %vm540, %v524, 0
      %v545 = vsel %vm540, %v525, 0
      %v548 = vsel %vm540, %v526, 0
      %550 = vmatpush.bf16.msra.mxu0 0
      %551 = vmatpush.bf16.msra.mxu0 0
      %552 = vmatpush.bf16.msra.mxu0 0
      %553 = vmatpush.bf16.msra.mxu0 0
      %554 = vmatpush.bf16.msra.mxu0 0
      %555 = vmatpush.bf16.msra.mxu0 0
      %556 = vmatpush.bf16.msra.mxu0 0
      %557 = vmatpush.bf16.msra.mxu0 %v542
      %558 = vmatmul.bf16.gmra.mxu0 %v529
      %v559 = vpop.f32.mrf.mxu0
      %v560 = vadd.f32 %v462, %v559
      %v561 = vpop.f32.mrf.mxu0
      %v562 = vadd.f32 %v467, %v561
      %563 = vmatmul.bf16.gmra.mxu0 %v532
      %v564 = vpop.f32.mrf.mxu0
      %v565 = vadd.f32 %v472, %v564
      %v566 = vpop.f32.mrf.mxu0
      %v567 = vadd.f32 %v477, %v566
      %568 = vmatmul.bf16.gmra.mxu0 %v535
      %v569 = vpop.f32.mrf.mxu0
      %v570 = vadd.f32 %v482, %v569
      %v571 = vpop.f32.mrf.mxu0
      %v572 = vadd.f32 %v487, %v571
      %573 = vmatmul.bf16.gmra.mxu0 %v538
      %v574 = vpop.f32.mrf.mxu0
      %v575 = vadd.f32 %v492, %v574
      %v576 = vpop.f32.mrf.mxu0
      %v577 = vadd.f32 %v497, %v576
      %578 = vdwg.mxu0
      %579 = vmatpush.bf16.msra.mxu0 0
      %580 = vmatpush.bf16.msra.mxu0 0
      %581 = vmatpush.bf16.msra.mxu0 0
      %582 = vmatpush.bf16.msra.mxu0 0
      %583 = vmatpush.bf16.msra.mxu0 0
      %584 = vmatpush.bf16.msra.mxu0 0
      %585 = vmatpush.bf16.msra.mxu0 0
      %586 = vmatpush.bf16.msra.mxu0 %v545
      %587 = vmatmul.bf16.gmra.mxu0 %v529
      %v588 = vpop.f32.mrf.mxu0
      %v589 = vadd.f32 %v462, %v588
      %v590 = vpop.f32.mrf.mxu0
      %v591 = vadd.f32 %v467, %v590
      %592 = vmatmul.bf16.gmra.mxu0 %v532
      %v593 = vpop.f32.mrf.mxu0
      %v594 = vadd.f32 %v472, %v593
      %v595 = vpop.f32.mrf.mxu0
      %v596 = vadd.f32 %v477, %v595
      %597 = vmatmul.bf16.gmra.mxu0 %v535
      %v598 = vpop.f32.mrf.mxu0
      %v599 = vadd.f32 %v482, %v598
      %v600 = vpop.f32.mrf.mxu0
      %v601 = vadd.f32 %v487, %v600
      %602 = vmatmul.bf16.gmra.mxu0 %v538
      %v603 = vpop.f32.mrf.mxu0
      %v604 = vadd.f32 %v492, %v603
      %v605 = vpop.f32.mrf.mxu0
      %v606 = vadd.f32 %v497, %v605
      %607 = vdwg.mxu0
      %608 = vmatpush.bf16.msra.mxu0 0
      %609 = vmatpush.bf16.msra.mxu0 0
      %610 = vmatpush.bf16.msra.mxu0 0
      %611 = vmatpush.bf16.msra.mxu0 0
      %612 = vmatpush.bf16.msra.mxu0 0
      %613 = vmatpush.bf16.msra.mxu0 0
      %614 = vmatpush.bf16.msra.mxu0 0
      %615 = vmatpush.bf16.msra.mxu0 %v548
      %616 = vmatmul.bf16.gmra.mxu0 %v529
      %v617 = vpop.f32.mrf.mxu0
      %v618 = vadd.f32 %v462, %v617
      %v619 = vpop.f32.mrf.mxu0
      %v620 = vadd.f32 %v467, %v619
      %621 = vmatmul.bf16.gmra.mxu0 %v532
      %v622 = vpop.f32.mrf.mxu0
      %v623 = vadd.f32 %v472, %v622
      %v624 = vpop.f32.mrf.mxu0
      %v625 = vadd.f32 %v477, %v624
      %626 = vmatmul.bf16.gmra.mxu0 %v535
      %v627 = vpop.f32.mrf.mxu0
      %v628 = vadd.f32 %v482, %v627
      %v629 = vpop.f32.mrf.mxu0
      %v630 = vadd.f32 %v487, %v629
      %631 = vmatmul.bf16.gmra.mxu0 %v538
      %v632 = vpop.f32.mrf.mxu0
      %v633 = vadd.f32 %v492, %v632
      %v634 = vpop.f32.mrf.mxu0
      %v635 = vadd.f32 %v497, %v634
      %636 = vdwg.mxu0
      %v637 = vmax.f32 %v560, 0.0
      %v638 = vmax.f32 %v589, 0.0
      %v639 = vmax.f32 %v618, 0.0
      %v640 = vmax.f32 %v562, 0.0
      %v641 = vmax.f32 %v591, 0.0
      %v642 = vmax.f32 %v620, 0.0
      %v643 = vmax.f32 %v565, 0.0
      %v644 = vmax.f32 %v594, 0.0
      %v645 = vmax.f32 %v623, 0.0
      %v646 = vmax.f32 %v567, 0.0
      %v647 = vmax.f32 %v596, 0.0
      %v648 = vmax.f32 %v625, 0.0
      %v649 = vmax.f32 %v570, 0.0
      %v650 = vmax.f32 %v599, 0.0
      %v651 = vmax.f32 %v628, 0.0
      %v652 = vmax.f32 %v572, 0.0
      %v653 = vmax.f32 %v601, 0.0
      %v654 = vmax.f32 %v630, 0.0
      %v655 = vmax.f32 %v575, 0.0
      %v656 = vmax.f32 %v604, 0.0
      %v657 = vmax.f32 %v633, 0.0
      %v658 = vmax.f32 %v577, 0.0
      %v659 = vmax.f32 %v606, 0.0
      %v660 = vmax.f32 %v635, 0.0
      %v661 = vld [vmem:[%s3] sm:$0xf]
      %v662 = vld [vmem:[%s3 + $0x4] sm:$0xf]
      %v663 = vld [vmem:[%s3 + $0x8] sm:$0xf]
      %v664 = vld [vmem:[%s3 + $0xc] sm:$0xf]
      %v665 = vld [vmem:[%s3 + $0x10] sm:$0xf]
      %v666 = vld [vmem:[%s3 + $0x14] sm:$0xf]
      %v667 = vld [vmem:[%s3 + $0x18] sm:$0xf]
      %v668 = vld [vmem:[%s3 + $0x1c] sm:$0xf]
      %v669 = vld [vmem:[%s3 + $0x20] sm:$0xf]
      %v670 = vld [vmem:[%s3 + $0x24] sm:$0xf]
      %v671 = vld [vmem:[%s3 + $0x28] sm:$0xf]
      %v672 = vld [vmem:[%s3 + $0x2c] sm:$0xf]
      %v673 = vld [vmem:[%s3 + $0x30] sm:$0xf]
      %v674 = vld [vmem:[%s3 + $0x34] sm:$0xf]
      %v675 = vld [vmem:[%s3 + $0x38] sm:$0xf]
      %v676 = vld [vmem:[%s3 + $0x3c] sm:$0xf]
      %v677 = vpack.c.bf16 %v640, %v637
      %v678 = vpack.c.bf16 %v641, %v638
      %v679 = vpack.c.bf16 %v642, %v639
      %v680 = vpack.c.bf16 %v646, %v643
      %v681 = vpack.c.bf16 %v647, %v644
      %v682 = vpack.c.bf16 %v648, %v645
      %v683 = vpack.c.bf16 %v652, %v649
      %v684 = vpack.c.bf16 %v653, %v650
      %v685 = vpack.c.bf16 %v654, %v651
      %v686 = vpack.c.bf16 %v658, %v655
      %v687 = vpack.c.bf16 %v659, %v656
      %v688 = vpack.c.bf16 %v660, %v657
      %v689 = vld [vmem:[%s4] sm:$0xff]
      %v690 = vld [vmem:[%s4 + $0x8] sm:$0xff]
      %v691 = vld [vmem:[%s4 + $0x10] sm:$0xff]
      %v692 = vld [vmem:[%s4 + $0x18] sm:$0xff]
      %v693 = vld [vmem:[%s4 + $0x20] sm:$0xff]
      %v694 = vld [vmem:[%s4 + $0x28] sm:$0xff]
      %v695 = vld [vmem:[%s4 + $0x30] sm:$0xff]
      %v696 = vld [vmem:[%s4 + $0x38] sm:$0xff]
      %v697 = vld [vmem:[%s4 + $0x40] sm:$0xff]
      %v698 = vld [vmem:[%s4 + $0x48] sm:$0xff]
      %v699 = vld [vmem:[%s4 + $0x50] sm:$0xff]
      %v700 = vld [vmem:[%s4 + $0x58] sm:$0xff]
      %v701 = vld [vmem:[%s4 + $0x60] sm:$0xff]
      %v702 = vld [vmem:[%s4 + $0x68] sm:$0xff]
      %v703 = vld [vmem:[%s4 + $0x70] sm:$0xff]
      %v704 = vld [vmem:[%s4 + $0x78] sm:$0xff]
      %706 = vset.pattern.permute.xlu0 0
      %707 = vperm.xlu0 %706, %v689
      %v708 = vpop.permute.xlu0 %707
      %711 = vset.pattern.permute.xlu0 0
      %712 = vperm.xlu0 %711, %v690
      %v713 = vpop.permute.xlu0 %712
      %716 = vset.pattern.permute.xlu0 0
      %717 = vperm.xlu0 %716, %v691
      %v718 = vpop.permute.xlu0 %717
      %721 = vset.pattern.permute.xlu0 0
      %722 = vperm.xlu0 %721, %v692
      %v723 = vpop.permute.xlu0 %722
      %726 = vset.pattern.permute.xlu0 0
      %727 = vperm.xlu0 %726, %v693
      %v728 = vpop.permute.xlu0 %727
      %731 = vset.pattern.permute.xlu0 0
      %732 = vperm.xlu0 %731, %v694
      %v733 = vpop.permute.xlu0 %732
      %736 = vset.pattern.permute.xlu0 0
      %737 = vperm.xlu0 %736, %v695
      %v738 = vpop.permute.xlu0 %737
      %741 = vset.pattern.permute.xlu0 0
      %742 = vperm.xlu0 %741, %v696
      %v743 = vpop.permute.xlu0 %742
      %746 = vset.pattern.permute.xlu0 0
      %747 = vperm.xlu0 %746, %v697
      %v748 = vpop.permute.xlu0 %747
      %751 = vset.pattern.permute.xlu0 0
      %752 = vperm.xlu0 %751, %v698
      %v753 = vpop.permute.xlu0 %752
      %756 = vset.pattern.permute.xlu0 0
      %757 = vperm.xlu0 %756, %v699
      %v758 = vpop.permute.xlu0 %757
      %761 = vset.pattern.permute.xlu0 0
      %762 = vperm.xlu0 %761, %v700
      %v763 = vpop.permute.xlu0 %762
      %766 = vset.pattern.permute.xlu0 0
      %767 = vperm.xlu0 %766, %v701
      %v768 = vpop.permute.xlu0 %767
      %771 = vset.pattern.permute.xlu0 0
      %772 = vperm.xlu0 %771, %v702
      %v773 = vpop.permute.xlu0 %772
      %776 = vset.pattern.permute.xlu0 0
      %777 = vperm.xlu0 %776, %v703
      %v778 = vpop.permute.xlu0 %777
      %781 = vset.pattern.permute.xlu0 0
      %782 = vperm.xlu0 %781, %v704
      %v783 = vpop.permute.xlu0 %782
      %v801 = vunpack.c.l.b16 %v661
      %v802 = vunpack.c.l.b16 %v662
      %v803 = vunpack.c.l.b16 %v663
      %v804 = vunpack.c.l.b16 %v664
      %v805 = vunpack.c.l.b16 %v665
      %v806 = vunpack.c.l.b16 %v666
      %v807 = vunpack.c.l.b16 %v667
      %v808 = vunpack.c.l.b16 %v668
      %v809 = vunpack.c.l.b16 %v669
      %v810 = vunpack.c.l.b16 %v670
      %v811 = vunpack.c.l.b16 %v671
      %v812 = vunpack.c.l.b16 %v672
      %v813 = vunpack.c.l.b16 %v673
      %v814 = vunpack.c.l.b16 %v674
      %v815 = vunpack.c.l.b16 %v675
      %v816 = vunpack.c.l.b16 %v676
      %v817 = vpack.c.b16 %v802, %v801
      %v818 = vpack.c.b16 %v804, %v803
      %v819 = vpack.c.b16 %v806, %v805
      %v820 = vpack.c.b16 %v808, %v807
      %v821 = vpack.c.b16 %v810, %v809
      %v822 = vpack.c.b16 %v812, %v811
      %v823 = vpack.c.b16 %v814, %v813
      %v824 = vpack.c.b16 %v816, %v815
      %vm825 = vcmask 523264
      %v827 = vsel %vm825, %v817, 0
      %v830 = vsel %vm825, %v818, 0
      %v833 = vsel %vm825, %v819, 0
      %v836 = vsel %vm825, %v820, 0
      %v839 = vsel %vm825, %v821, 0
      %v842 = vsel %vm825, %v822, 0
      %v845 = vsel %vm825, %v823, 0
      %v848 = vsel %vm825, %v824, 0
      %850 = vmatpush.bf16.msra.mxu0 0
      %851 = vmatpush.bf16.msra.mxu0 0
      %852 = vmatpush.bf16.msra.mxu0 0
      %853 = vmatpush.bf16.msra.mxu0 0
      %854 = vmatpush.bf16.msra.mxu0 %v686
      %855 = vmatpush.bf16.msra.mxu0 %v683
      %856 = vmatpush.bf16.msra.mxu0 %v680
      %857 = vmatpush.bf16.msra.mxu0 %v677
      %858 = vmatmul.bf16.gmra.mxu0 %v827
      %v859 = vpop.f32.mrf.mxu0
      %v860 = vadd.f32 %v708, %v859
      %v861 = vpop.f32.mrf.mxu0
      %v862 = vadd.f32 %v713, %v861
      %863 = vmatmul.bf16.gmra.mxu0 %v830
      %v864 = vpop.f32.mrf.mxu0
      %v865 = vadd.f32 %v718, %v864
      %v866 = vpop.f32.mrf.mxu0
      %v867 = vadd.f32 %v723, %v866
      %868 = vmatmul.bf16.gmra.mxu0 %v833
      %v869 = vpop.f32.mrf.mxu0
      %v870 = vadd.f32 %v728, %v869
      %v871 = vpop.f32.mrf.mxu0
      %v872 = vadd.f32 %v733, %v871
      %873 = vmatmul.bf16.gmra.mxu0 %v836
      %v874 = vpop.f32.mrf.mxu0
      %v875 = vadd.f32 %v738, %v874
      %v876 = vpop.f32.mrf.mxu0
      %v877 = vadd.f32 %v743, %v876
      %878 = vmatmul.bf16.gmra.mxu0 %v839
      %v879 = vpop.f32.mrf.mxu0
      %v880 = vadd.f32 %v748, %v879
      %v881 = vpop.f32.mrf.mxu0
      %v882 = vadd.f32 %v753, %v881
      %883 = vmatmul.bf16.gmra.mxu0 %v842
      %v884 = vpop.f32.mrf.mxu0
      %v885 = vadd.f32 %v758, %v884
      %v886 = vpop.f32.mrf.mxu0
      %v887 = vadd.f32 %v763, %v886
      %888 = vmatmul.bf16.gmra.mxu0 %v845
      %v889 = vpop.f32.mrf.mxu0
      %v890 = vadd.f32 %v768, %v889
      %v891 = vpop.f32.mrf.mxu0
      %v892 = vadd.f32 %v773, %v891
      %893 = vmatmul.bf16.gmra.mxu0 %v848
      %v894 = vpop.f32.mrf.mxu0
      %v895 = vadd.f32 %v778, %v894
      %v896 = vpop.f32.mrf.mxu0
      %v897 = vadd.f32 %v783, %v896
      %898 = vdwg.mxu0
      %899 = vmatpush.bf16.msra.mxu0 0
      %900 = vmatpush.bf16.msra.mxu0 0
      %901 = vmatpush.bf16.msra.mxu0 0
      %902 = vmatpush.bf16.msra.mxu0 0
      %903 = vmatpush.bf16.msra.mxu0 %v687
      %904 = vmatpush.bf16.msra.mxu0 %v684
      %905 = vmatpush.bf16.msra.mxu0 %v681
      %906 = vmatpush.bf16.msra.mxu0 %v678
      %907 = vmatmul.bf16.gmra.mxu0 %v827
      %v908 = vpop.f32.mrf.mxu0
      %v909 = vadd.f32 %v708, %v908
      %v910 = vpop.f32.mrf.mxu0
      %v911 = vadd.f32 %v713, %v910
      %912 = vmatmul.bf16.gmra.mxu0 %v830
      %v913 = vpop.f32.mrf.mxu0
      %v914 = vadd.f32 %v718, %v913
      %v915 = vpop.f32.mrf.mxu0
      %v916 = vadd.f32 %v723, %v915
      %917 = vmatmul.bf16.gmra.mxu0 %v833
      %v918 = vpop.f32.mrf.mxu0
      %v919 = vadd.f32 %v728, %v918
      %v920 = vpop.f32.mrf.mxu0
      %v921 = vadd.f32 %v733, %v920
      %922 = vmatmul.bf16.gmra.mxu0 %v836
      %v923 = vpop.f32.mrf.mxu0
      %v924 = vadd.f32 %v738, %v923
      %v925 = vpop.f32.mrf.mxu0
      %v926 = vadd.f32 %v743, %v925
      %927 = vmatmul.bf16.gmra.mxu0 %v839
      %v928 = vpop.f32.mrf.mxu0
      %v929 = vadd.f32 %v748, %v928
      %v930 = vpop.f32.mrf.mxu0
      %v931 = vadd.f32 %v753, %v930
      %932 = vmatmul.bf16.gmra.mxu0 %v842
      %v933 = vpop.f32.mrf.mxu0
      %v934 = vadd.f32 %v758, %v933
      %v935 = vpop.f32.mrf.mxu0
      %v936 = vadd.f32 %v763, %v935
      %937 = vmatmul.bf16.gmra.mxu0 %v845
      %v938 = vpop.f32.mrf.mxu0
      %v939 = vadd.f32 %v768, %v938
      %v940 = vpop.f32.mrf.mxu0
      %v941 = vadd.f32 %v773, %v940
      %942 = vmatmul.bf16.gmra.mxu0 %v848
      %v943 = vpop.f32.mrf.mxu0
      %v944 = vadd.f32 %v778, %v943
      %v945 = vpop.f32.mrf.mxu0
      %v946 = vadd.f32 %v783, %v945
      %947 = vdwg.mxu0
      %948 = vmatpush.bf16.msra.mxu0 0
      %949 = vmatpush.bf16.msra.mxu0 0
      %950 = vmatpush.bf16.msra.mxu0 0
      %951 = vmatpush.bf16.msra.mxu0 0
      %952 = vmatpush.bf16.msra.mxu0 %v688
      %953 = vmatpush.bf16.msra.mxu0 %v685
      %954 = vmatpush.bf16.msra.mxu0 %v682
      %955 = vmatpush.bf16.msra.mxu0 %v679
      %956 = vmatmul.bf16.gmra.mxu0 %v827
      %v957 = vpop.f32.mrf.mxu0
      %v958 = vadd.f32 %v708, %v957
      %v959 = vpop.f32.mrf.mxu0
      %v960 = vadd.f32 %v713, %v959
      %961 = vmatmul.bf16.gmra.mxu0 %v830
      %v962 = vpop.f32.mrf.mxu0
      %v963 = vadd.f32 %v718, %v962
      %v964 = vpop.f32.mrf.mxu0
      %v965 = vadd.f32 %v723, %v964
      %966 = vmatmul.bf16.gmra.mxu0 %v833
      %v967 = vpop.f32.mrf.mxu0
      %v968 = vadd.f32 %v728, %v967
      %v969 = vpop.f32.mrf.mxu0
      %v970 = vadd.f32 %v733, %v969
      %971 = vmatmul.bf16.gmra.mxu0 %v836
      %v972 = vpop.f32.mrf.mxu0
      %v973 = vadd.f32 %v738, %v972
      %v974 = vpop.f32.mrf.mxu0
      %v975 = vadd.f32 %v743, %v974
      %976 = vmatmul.bf16.gmra.mxu0 %v839
      %v977 = vpop.f32.mrf.mxu0
      %v978 = vadd.f32 %v748, %v977
      %v979 = vpop.f32.mrf.mxu0
      %v980 = vadd.f32 %v753, %v979
      %981 = vmatmul.bf16.gmra.mxu0 %v842
      %v982 = vpop.f32.mrf.mxu0
      %v983 = vadd.f32 %v758, %v982
      %v984 = vpop.f32.mrf.mxu0
      %v985 = vadd.f32 %v763, %v984
      %986 = vmatmul.bf16.gmra.mxu0 %v845
      %v987 = vpop.f32.mrf.mxu0
      %v988 = vadd.f32 %v768, %v987
      %v989 = vpop.f32.mrf.mxu0
      %v990 = vadd.f32 %v773, %v989
      %991 = vmatmul.bf16.gmra.mxu0 %v848
      %v992 = vpop.f32.mrf.mxu0
      %v993 = vadd.f32 %v778, %v992
      %v994 = vpop.f32.mrf.mxu0
      %v995 = vadd.f32 %v783, %v994
      %996 = vdwg.mxu0
      %v997 = vmax.f32 %v860, 0.0
      %v998 = vmax.f32 %v909, 0.0
      %v999 = vmax.f32 %v958, 0.0
      %v1000 = vmax.f32 %v862, 0.0
      %v1001 = vmax.f32 %v911, 0.0
      %v1002 = vmax.f32 %v960, 0.0
      %v1003 = vmax.f32 %v865, 0.0
      %v1004 = vmax.f32 %v914, 0.0
      %v1005 = vmax.f32 %v963, 0.0
      %v1006 = vmax.f32 %v867, 0.0
      %v1007 = vmax.f32 %v916, 0.0
      %v1008 = vmax.f32 %v965, 0.0
      %v1009 = vmax.f32 %v870, 0.0
      %v1010 = vmax.f32 %v919, 0.0
      %v1011 = vmax.f32 %v968, 0.0
      %v1012 = vmax.f32 %v872, 0.0
      %v1013 = vmax.f32 %v921, 0.0
      %v1014 = vmax.f32 %v970, 0.0
      %v1015 = vmax.f32 %v875, 0.0
      %v1016 = vmax.f32 %v924, 0.0
      %v1017 = vmax.f32 %v973, 0.0
      %v1018 = vmax.f32 %v877, 0.0
      %v1019 = vmax.f32 %v926, 0.0
      %v1020 = vmax.f32 %v975, 0.0
      %v1021 = vmax.f32 %v880, 0.0
      %v1022 = vmax.f32 %v929, 0.0
      %v1023 = vmax.f32 %v978, 0.0
      %v1024 = vmax.f32 %v882, 0.0
      %v1025 = vmax.f32 %v931, 0.0
      %v1026 = vmax.f32 %v980, 0.0
      %v1027 = vmax.f32 %v885, 0.0
      %v1028 = vmax.f32 %v934, 0.0
      %v1029 = vmax.f32 %v983, 0.0
      %v1030 = vmax.f32 %v887, 0.0
      %v1031 = vmax.f32 %v936, 0.0
      %v1032 = vmax.f32 %v985, 0.0
      %v1033 = vmax.f32 %v890, 0.0
      %v1034 = vmax.f32 %v939, 0.0
      %v1035 = vmax.f32 %v988, 0.0
      %v1036 = vmax.f32 %v892, 0.0
      %v1037 = vmax.f32 %v941, 0.0
      %v1038 = vmax.f32 %v990, 0.0
      %v1039 = vmax.f32 %v895, 0.0
      %v1040 = vmax.f32 %v944, 0.0
      %v1041 = vmax.f32 %v993, 0.0
      %v1042 = vmax.f32 %v897, 0.0
      %v1043 = vmax.f32 %v946, 0.0
      %v1044 = vmax.f32 %v995, 0.0
      %v1045 = vld [vmem:[%s5] sm:$0xf]
      %v1046 = vld [vmem:[%s5 + $0x4] sm:$0xf]
      %v1047 = vld [vmem:[%s5 + $0x8] sm:$0xf]
      %v1048 = vld [vmem:[%s5 + $0xc] sm:$0xf]
      %v1049 = vld [vmem:[%s5 + $0x10] sm:$0xf]
      %v1050 = vld [vmem:[%s5 + $0x14] sm:$0xf]
      %v1051 = vld [vmem:[%s5 + $0x18] sm:$0xf]
      %v1052 = vld [vmem:[%s5 + $0x1c] sm:$0xf]
      %v1053 = vld [vmem:[%s5 + $0x20] sm:$0xf]
      %v1054 = vld [vmem:[%s5 + $0x24] sm:$0xf]
      %v1055 = vld [vmem:[%s5 + $0x28] sm:$0xf]
      %v1056 = vld [vmem:[%s5 + $0x2c] sm:$0xf]
      %v1057 = vld [vmem:[%s5 + $0x30] sm:$0xf]
      %v1058 = vld [vmem:[%s5 + $0x34] sm:$0xf]
      %v1059 = vld [vmem:[%s5 + $0x38] sm:$0xf]
      %v1060 = vld [vmem:[%s5 + $0x3c] sm:$0xf]
      %v1061 = vld [vmem:[%s5 + $0x40] sm:$0xf]
      %v1062 = vld [vmem:[%s5 + $0x44] sm:$0xf]
      %v1063 = vld [vmem:[%s5 + $0x48] sm:$0xf]
      %v1064 = vld [vmem:[%s5 + $0x4c] sm:$0xf]
      %v1065 = vld [vmem:[%s5 + $0x50] sm:$0xf]
      %v1066 = vld [vmem:[%s5 + $0x54] sm:$0xf]
      %v1067 = vld [vmem:[%s5 + $0x58] sm:$0xf]
      %v1068 = vld [vmem:[%s5 + $0x5c] sm:$0xf]
      %v1069 = vld [vmem:[%s5 + $0x60] sm:$0xf]
      %v1070 = vld [vmem:[%s5 + $0x64] sm:$0xf]
      %v1071 = vld [vmem:[%s5 + $0x68] sm:$0xf]
      %v1072 = vld [vmem:[%s5 + $0x6c] sm:$0xf]
      %v1073 = vld [vmem:[%s5 + $0x70] sm:$0xf]
      %v1074 = vld [vmem:[%s5 + $0x74] sm:$0xf]
      %v1075 = vld [vmem:[%s5 + $0x78] sm:$0xf]
      %v1076 = vld [vmem:[%s5 + $0x7c] sm:$0xf]
      %v1077 = vld [vmem:[%s5 + $0x80] sm:$0xf]
      %v1078 = vld [vmem:[%s5 + $0x84] sm:$0xf]
      %v1079 = vld [vmem:[%s5 + $0x88] sm:$0xf]
      %v1080 = vld [vmem:[%s5 + $0x8c] sm:$0xf]
      %v1081 = vld [vmem:[%s5 + $0x90] sm:$0xf]
      %v1082 = vld [vmem:[%s5 + $0x94] sm:$0xf]
      %v1083 = vld [vmem:[%s5 + $0x98] sm:$0xf]
      %v1084 = vld [vmem:[%s5 + $0x9c] sm:$0xf]
      %v1085 = vld [vmem:[%s5 + $0xa0] sm:$0xf]
      %v1086 = vld [vmem:[%s5 + $0xa4] sm:$0xf]
      %v1087 = vld [vmem:[%s5 + $0xa8] sm:$0xf]
      %v1088 = vld [vmem:[%s5 + $0xac] sm:$0xf]
      %v1089 = vld [vmem:[%s5 + $0xb0] sm:$0xf]
      %v1090 = vld [vmem:[%s5 + $0xb4] sm:$0xf]
      %v1091 = vld [vmem:[%s5 + $0xb8] sm:$0xf]
      %v1092 = vld [vmem:[%s5 + $0xbc] sm:$0xf]
      %v1093 = vld [vmem:[%s5 + $0xc0] sm:$0xf]
      %v1094 = vld [vmem:[%s5 + $0xc4] sm:$0xf]
      %v1095 = vld [vmem:[%s5 + $0xc8] sm:$0xf]
      %v1096 = vld [vmem:[%s5 + $0xcc] sm:$0xf]
      %v1097 = vld [vmem:[%s5 + $0xd0] sm:$0xf]
      %v1098 = vld [vmem:[%s5 + $0xd4] sm:$0xf]
      %v1099 = vld [vmem:[%s5 + $0xd8] sm:$0xf]
      %v1100 = vld [vmem:[%s5 + $0xdc] sm:$0xf]
      %v1101 = vld [vmem:[%s5 + $0xe0] sm:$0xf]
      %v1102 = vld [vmem:[%s5 + $0xe4] sm:$0xf]
      %v1103 = vld [vmem:[%s5 + $0xe8] sm:$0xf]
      %v1104 = vld [vmem:[%s5 + $0xec] sm:$0xf]
      %v1105 = vld [vmem:[%s5 + $0xf0] sm:$0xf]
      %v1106 = vld [vmem:[%s5 + $0xf4] sm:$0xf]
      %v1107 = vld [vmem:[%s5 + $0xf8] sm:$0xf]
      %v1108 = vld [vmem:[%s5 + $0xfc] sm:$0xf]
      %v1109 = vld [vmem:[%s5 + $0x100] sm:$0xf]
      %v1110 = vld [vmem:[%s5 + $0x104] sm:$0xf]
      %v1111 = vld [vmem:[%s5 + $0x108] sm:$0xf]
      %v1112 = vld [vmem:[%s5 + $0x10c] sm:$0xf]
      %v1113 = vld [vmem:[%s5 + $0x110] sm:$0xf]
      %v1114 = vld [vmem:[%s5 + $0x114] sm:$0xf]
      %v1115 = vld [vmem:[%s5 + $0x118] sm:$0xf]
      %v1116 = vld [vmem:[%s5 + $0x11c] sm:$0xf]
      %v1117 = vld [vmem:[%s5 + $0x120] sm:$0xf]
      %v1118 = vld [vmem:[%s5 + $0x124] sm:$0xf]
      %v1119 = vld [vmem:[%s5 + $0x128] sm:$0xf]
      %v1120 = vld [vmem:[%s5 + $0x12c] sm:$0xf]
      %v1121 = vld [vmem:[%s5 + $0x130] sm:$0xf]
      %v1122 = vld [vmem:[%s5 + $0x134] sm:$0xf]
      %v1123 = vld [vmem:[%s5 + $0x138] sm:$0xf]
      %v1124 = vld [vmem:[%s5 + $0x13c] sm:$0xf]
      %v1125 = vld [vmem:[%s5 + $0x140] sm:$0xf]
      %v1126 = vld [vmem:[%s5 + $0x144] sm:$0xf]
      %v1127 = vld [vmem:[%s5 + $0x148] sm:$0xf]
      %v1128 = vld [vmem:[%s5 + $0x14c] sm:$0xf]
      %v1129 = vld [vmem:[%s5 + $0x150] sm:$0xf]
      %v1130 = vld [vmem:[%s5 + $0x154] sm:$0xf]
      %v1131 = vld [vmem:[%s5 + $0x158] sm:$0xf]
      %v1132 = vld [vmem:[%s5 + $0x15c] sm:$0xf]
      %v1133 = vld [vmem:[%s5 + $0x160] sm:$0xf]
      %v1134 = vld [vmem:[%s5 + $0x164] sm:$0xf]
      %v1135 = vld [vmem:[%s5 + $0x168] sm:$0xf]
      %v1136 = vld [vmem:[%s5 + $0x16c] sm:$0xf]
      %v1137 = vld [vmem:[%s5 + $0x170] sm:$0xf]
      %v1138 = vld [vmem:[%s5 + $0x174] sm:$0xf]
      %v1139 = vld [vmem:[%s5 + $0x178] sm:$0xf]
      %v1140 = vld [vmem:[%s5 + $0x17c] sm:$0xf]
      %v1141 = vld [vmem:[%s5 + $0x180] sm:$0xf]
      %v1142 = vld [vmem:[%s5 + $0x184] sm:$0xf]
      %v1143 = vld [vmem:[%s5 + $0x188] sm:$0xf]
      %v1144 = vld [vmem:[%s5 + $0x18c] sm:$0xf]
      %v1145 = vld [vmem:[%s5 + $0x190] sm:$0xf]
      %v1146 = vld [vmem:[%s5 + $0x194] sm:$0xf]
      %v1147 = vld [vmem:[%s5 + $0x198] sm:$0xf]
      %v1148 = vld [vmem:[%s5 + $0x19c] sm:$0xf]
      %v1149 = vld [vmem:[%s5 + $0x1a0] sm:$0xf]
      %v1150 = vld [vmem:[%s5 + $0x1a4] sm:$0xf]
      %v1151 = vld [vmem:[%s5 + $0x1a8] sm:$0xf]
      %v1152 = vld [vmem:[%s5 + $0x1ac] sm:$0xf]
      %v1153 = vld [vmem:[%s5 + $0x1b0] sm:$0xf]
      %v1154 = vld [vmem:[%s5 + $0x1b4] sm:$0xf]
      %v1155 = vld [vmem:[%s5 + $0x1b8] sm:$0xf]
      %v1156 = vld [vmem:[%s5 + $0x1bc] sm:$0xf]
      %v1157 = vld [vmem:[%s5 + $0x1c0] sm:$0xf]
      %v1158 = vld [vmem:[%s5 + $0x1c4] sm:$0xf]
      %v1159 = vld [vmem:[%s5 + $0x1c8] sm:$0xf]
      %v1160 = vld [vmem:[%s5 + $0x1cc] sm:$0xf]
      %v1161 = vld [vmem:[%s5 + $0x1d0] sm:$0xf]
      %v1162 = vld [vmem:[%s5 + $0x1d4] sm:$0xf]
      %v1163 = vld [vmem:[%s5 + $0x1d8] sm:$0xf]
      %v1164 = vld [vmem:[%s5 + $0x1dc] sm:$0xf]
      %v1165 = vld [vmem:[%s5 + $0x1e0] sm:$0xf]
      %v1166 = vld [vmem:[%s5 + $0x1e4] sm:$0xf]
      %v1167 = vld [vmem:[%s5 + $0x1e8] sm:$0xf]
      %v1168 = vld [vmem:[%s5 + $0x1ec] sm:$0xf]
      %v1169 = vld [vmem:[%s5 + $0x1f0] sm:$0xf]
      %v1170 = vld [vmem:[%s5 + $0x1f4] sm:$0xf]
      %v1171 = vld [vmem:[%s5 + $0x1f8] sm:$0xf]
      %v1172 = vld [vmem:[%s5 + $0x1fc] sm:$0xf]
      %v1173 = vpack.c.bf16 %v1000, %v997
      %v1174 = vpack.c.bf16 %v1001, %v998
      %v1175 = vpack.c.bf16 %v1002, %v999
      %v1176 = vpack.c.bf16 %v1006, %v1003
      %v1177 = vpack.c.bf16 %v1007, %v1004
      %v1178 = vpack.c.bf16 %v1008, %v1005
      %v1179 = vpack.c.bf16 %v1012, %v1009
      %v1180 = vpack.c.bf16 %v1013, %v1010
      %v1181 = vpack.c.bf16 %v1014, %v1011
      %v1182 = vpack.c.bf16 %v1018, %v1015
      %v1183 = vpack.c.bf16 %v1019, %v1016
      %v1184 = vpack.c.bf16 %v1020, %v1017
      %v1185 = vpack.c.bf16 %v1024, %v1021
      %v1186 = vpack.c.bf16 %v1025, %v1022
      %v1187 = vpack.c.bf16 %v1026, %v1023
      %v1188 = vpack.c.bf16 %v1030, %v1027
      %v1189 = vpack.c.bf16 %v1031, %v1028
      %v1190 = vpack.c.bf16 %v1032, %v1029
      %v1191 = vpack.c.bf16 %v1036, %v1033
      %v1192 = vpack.c.bf16 %v1037, %v1034
      %v1193 = vpack.c.bf16 %v1038, %v1035
      %v1194 = vpack.c.bf16 %v1042, %v1039
      %v1195 = vpack.c.bf16 %v1043, %v1040
      %v1196 = vpack.c.bf16 %v1044, %v1041
      %v1197 = vld [vmem:[%s6] sm:$0xff]
      %v1198 = vld [vmem:[%s6 + $0x8] sm:$0xff]
      %v1199 = vld [vmem:[%s6 + $0x10] sm:$0xff]
      %v1200 = vld [vmem:[%s6 + $0x18] sm:$0xff]
      %v1201 = vld [vmem:[%s6 + $0x20] sm:$0xff]
      %v1202 = vld [vmem:[%s6 + $0x28] sm:$0xff]
      %v1203 = vld [vmem:[%s6 + $0x30] sm:$0xff]
      %v1204 = vld [vmem:[%s6 + $0x38] sm:$0xff]
      %v1205 = vld [vmem:[%s6 + $0x40] sm:$0xff]
      %v1206 = vld [vmem:[%s6 + $0x48] sm:$0xff]
      %v1207 = vld [vmem:[%s6 + $0x50] sm:$0xff]
      %v1208 = vld [vmem:[%s6 + $0x58] sm:$0xff]
      %v1209 = vld [vmem:[%s6 + $0x60] sm:$0xff]
      %v1210 = vld [vmem:[%s6 + $0x68] sm:$0xff]
      %v1211 = vld [vmem:[%s6 + $0x70] sm:$0xff]
      %v1212 = vld [vmem:[%s6 + $0x78] sm:$0xff]
      %v1213 = vld [vmem:[%s6 + $0x80] sm:$0xff]
      %v1214 = vld [vmem:[%s6 + $0x88] sm:$0xff]
      %v1215 = vld [vmem:[%s6 + $0x90] sm:$0xff]
      %v1216 = vld [vmem:[%s6 + $0x98] sm:$0xff]
      %v1217 = vld [vmem:[%s6 + $0xa0] sm:$0xff]
      %v1218 = vld [vmem:[%s6 + $0xa8] sm:$0xff]
      %v1219 = vld [vmem:[%s6 + $0xb0] sm:$0xff]
      %v1220 = vld [vmem:[%s6 + $0xb8] sm:$0xff]
      %v1221 = vld [vmem:[%s6 + $0xc0] sm:$0xff]
      %v1222 = vld [vmem:[%s6 + $0xc8] sm:$0xff]
      %v1223 = vld [vmem:[%s6 + $0xd0] sm:$0xff]
      %v1224 = vld [vmem:[%s6 + $0xd8] sm:$0xff]
      %v1225 = vld [vmem:[%s6 + $0xe0] sm:$0xff]
      %v1226 = vld [vmem:[%s6 + $0xe8] sm:$0xff]
      %v1227 = vld [vmem:[%s6 + $0xf0] sm:$0xff]
      %v1228 = vld [vmem:[%s6 + $0xf8] sm:$0xff]
      %v1229 = vld [vmem:[%s6 + $0x100] sm:$0xff]
      %v1230 = vld [vmem:[%s6 + $0x108] sm:$0xff]
      %v1231 = vld [vmem:[%s6 + $0x110] sm:$0xff]
      %v1232 = vld [vmem:[%s6 + $0x118] sm:$0xff]
      %v1233 = vld [vmem:[%s6 + $0x120] sm:$0xff]
      %v1234 = vld [vmem:[%s6 + $0x128] sm:$0xff]
      %v1235 = vld [vmem:[%s6 + $0x130] sm:$0xff]
      %v1236 = vld [vmem:[%s6 + $0x138] sm:$0xff]
      %v1237 = vld [vmem:[%s6 + $0x140] sm:$0xff]
      %v1238 = vld [vmem:[%s6 + $0x148] sm:$0xff]
      %v1239 = vld [vmem:[%s6 + $0x150] sm:$0xff]
      %v1240 = vld [vmem:[%s6 + $0x158] sm:$0xff]
      %v1241 = vld [vmem:[%s6 + $0x160] sm:$0xff]
      %v1242 = vld [vmem:[%s6 + $0x168] sm:$0xff]
      %v1243 = vld [vmem:[%s6 + $0x170] sm:$0xff]
      %v1244 = vld [vmem:[%s6 + $0x178] sm:$0xff]
      %v1245 = vld [vmem:[%s6 + $0x180] sm:$0xff]
      %v1246 = vld [vmem:[%s6 + $0x188] sm:$0xff]
      %v1247 = vld [vmem:[%s6 + $0x190] sm:$0xff]
      %v1248 = vld [vmem:[%s6 + $0x198] sm:$0xff]
      %v1249 = vld [vmem:[%s6 + $0x1a0] sm:$0xff]
      %v1250 = vld [vmem:[%s6 + $0x1a8] sm:$0xff]
      %v1251 = vld [vmem:[%s6 + $0x1b0] sm:$0xff]
      %v1252 = vld [vmem:[%s6 + $0x1b8] sm:$0xff]
      %v1253 = vld [vmem:[%s6 + $0x1c0] sm:$0xff]
      %v1254 = vld [vmem:[%s6 + $0x1c8] sm:$0xff]
      %v1255 = vld [vmem:[%s6 + $0x1d0] sm:$0xff]
      %v1256 = vld [vmem:[%s6 + $0x1d8] sm:$0xff]
      %v1257 = vld [vmem:[%s6 + $0x1e0] sm:$0xff]
      %v1258 = vld [vmem:[%s6 + $0x1e8] sm:$0xff]
      %v1259 = vld [vmem:[%s6 + $0x1f0] sm:$0xff]
      %v1260 = vld [vmem:[%s6 + $0x1f8] sm:$0xff]
      %v1261 = vld [vmem:[%s6 + $0x200] sm:$0xff]
      %v1262 = vld [vmem:[%s6 + $0x208] sm:$0xff]
      %v1263 = vld [vmem:[%s6 + $0x210] sm:$0xff]
      %v1264 = vld [vmem:[%s6 + $0x218] sm:$0xff]
      %v1265 = vld [vmem:[%s6 + $0x220] sm:$0xff]
      %v1266 = vld [vmem:[%s6 + $0x228] sm:$0xff]
      %v1267 = vld [vmem:[%s6 + $0x230] sm:$0xff]
      %v1268 = vld [vmem:[%s6 + $0x238] sm:$0xff]
      %v1269 = vld [vmem:[%s6 + $0x240] sm:$0xff]
      %v1270 = vld [vmem:[%s6 + $0x248] sm:$0xff]
      %v1271 = vld [vmem:[%s6 + $0x250] sm:$0xff]
      %v1272 = vld [vmem:[%s6 + $0x258] sm:$0xff]
      %v1273 = vld [vmem:[%s6 + $0x260] sm:$0xff]
      %v1274 = vld [vmem:[%s6 + $0x268] sm:$0xff]
      %v1275 = vld [vmem:[%s6 + $0x270] sm:$0xff]
      %v1276 = vld [vmem:[%s6 + $0x278] sm:$0xff]
      %v1277 = vld [vmem:[%s6 + $0x280] sm:$0xff]
      %v1278 = vld [vmem:[%s6 + $0x288] sm:$0xff]
      %v1279 = vld [vmem:[%s6 + $0x290] sm:$0xff]
      %v1280 = vld [vmem:[%s6 + $0x298] sm:$0xff]
      %v1281 = vld [vmem:[%s6 + $0x2a0] sm:$0xff]
      %v1282 = vld [vmem:[%s6 + $0x2a8] sm:$0xff]
      %v1283 = vld [vmem:[%s6 + $0x2b0] sm:$0xff]
      %v1284 = vld [vmem:[%s6 + $0x2b8] sm:$0xff]
      %v1285 = vld [vmem:[%s6 + $0x2c0] sm:$0xff]
      %v1286 = vld [vmem:[%s6 + $0x2c8] sm:$0xff]
      %v1287 = vld [vmem:[%s6 + $0x2d0] sm:$0xff]
      %v1288 = vld [vmem:[%s6 + $0x2d8] sm:$0xff]
      %v1289 = vld [vmem:[%s6 + $0x2e0] sm:$0xff]
      %v1290 = vld [vmem:[%s6 + $0x2e8] sm:$0xff]
      %v1291 = vld [vmem:[%s6 + $0x2f0] sm:$0xff]
      %v1292 = vld [vmem:[%s6 + $0x2f8] sm:$0xff]
      %v1293 = vld [vmem:[%s6 + $0x300] sm:$0xff]
      %v1294 = vld [vmem:[%s6 + $0x308] sm:$0xff]
      %v1295 = vld [vmem:[%s6 + $0x310] sm:$0xff]
      %v1296 = vld [vmem:[%s6 + $0x318] sm:$0xff]
      %v1297 = vld [vmem:[%s6 + $0x320] sm:$0xff]
      %v1298 = vld [vmem:[%s6 + $0x328] sm:$0xff]
      %v1299 = vld [vmem:[%s6 + $0x330] sm:$0xff]
      %v1300 = vld [vmem:[%s6 + $0x338] sm:$0xff]
      %v1301 = vld [vmem:[%s6 + $0x340] sm:$0xff]
      %v1302 = vld [vmem:[%s6 + $0x348] sm:$0xff]
      %v1303 = vld [vmem:[%s6 + $0x350] sm:$0xff]
      %v1304 = vld [vmem:[%s6 + $0x358] sm:$0xff]
      %v1305 = vld [vmem:[%s6 + $0x360] sm:$0xff]
      %v1306 = vld [vmem:[%s6 + $0x368] sm:$0xff]
      %v1307 = vld [vmem:[%s6 + $0x370] sm:$0xff]
      %v1308 = vld [vmem:[%s6 + $0x378] sm:$0xff]
      %v1309 = vld [vmem:[%s6 + $0x380] sm:$0xff]
      %v1310 = vld [vmem:[%s6 + $0x388] sm:$0xff]
      %v1311 = vld [vmem:[%s6 + $0x390] sm:$0xff]
      %v1312 = vld [vmem:[%s6 + $0x398] sm:$0xff]
      %v1313 = vld [vmem:[%s6 + $0x3a0] sm:$0xff]
      %v1314 = vld [vmem:[%s6 + $0x3a8] sm:$0xff]
      %v1315 = vld [vmem:[%s6 + $0x3b0] sm:$0xff]
      %v1316 = vld [vmem:[%s6 + $0x3b8] sm:$0xff]
      %v1317 = vld [vmem:[%s6 + $0x3c0] sm:$0xff]
      %v1318 = vld [vmem:[%s6 + $0x3c8] sm:$0xff]
      %v1319 = vld [vmem:[%s6 + $0x3d0] sm:$0xff]
      %v1320 = vld [vmem:[%s6 + $0x3d8] sm:$0xff]
      %v1321 = vld [vmem:[%s6 + $0x3e0] sm:$0xff]
      %v1322 = vld [vmem:[%s6 + $0x3e8] sm:$0xff]
      %v1323 = vld [vmem:[%s6 + $0x3f0] sm:$0xff]
      %v1324 = vld [vmem:[%s6 + $0x3f8] sm:$0xff]
      %1326 = vset.pattern.permute.xlu0 0
      %1327 = vperm.xlu0 %1326, %v1197
      %v1328 = vpop.permute.xlu0 %1327
      %1331 = vset.pattern.permute.xlu0 0
      %1332 = vperm.xlu0 %1331, %v1198
      %v1333 = vpop.permute.xlu0 %1332
      %1336 = vset.pattern.permute.xlu0 0
      %1337 = vperm.xlu0 %1336, %v1199
      %v1338 = vpop.permute.xlu0 %1337
      %1341 = vset.pattern.permute.xlu0 0
      %1342 = vperm.xlu0 %1341, %v1200
      %v1343 = vpop.permute.xlu0 %1342
      %1346 = vset.pattern.permute.xlu0 0
      %1347 = vperm.xlu0 %1346, %v1201
      %v1348 = vpop.permute.xlu0 %1347
      %1351 = vset.pattern.permute.xlu0 0
      %1352 = vperm.xlu0 %1351, %v1202
      %v1353 = vpop.permute.xlu0 %1352
      %1356 = vset.pattern.permute.xlu0 0
      %1357 = vperm.xlu0 %1356, %v1203
      %v1358 = vpop.permute.xlu0 %1357
      %1361 = vset.pattern.permute.xlu0 0
      %1362 = vperm.xlu0 %1361, %v1204
      %v1363 = vpop.permute.xlu0 %1362
      %1366 = vset.pattern.permute.xlu0 0
      %1367 = vperm.xlu0 %1366, %v1205
      %v1368 = vpop.permute.xlu0 %1367
      %1371 = vset.pattern.permute.xlu0 0
      %1372 = vperm.xlu0 %1371, %v1206
      %v1373 = vpop.permute.xlu0 %1372
      %1376 = vset.pattern.permute.xlu0 0
      %1377 = vperm.xlu0 %1376, %v1207
      %v1378 = vpop.permute.xlu0 %1377
      %1381 = vset.pattern.permute.xlu0 0
      %1382 = vperm.xlu0 %1381, %v1208
      %v1383 = vpop.permute.xlu0 %1382
      %1386 = vset.pattern.permute.xlu0 0
      %1387 = vperm.xlu0 %1386, %v1209
      %v1388 = vpop.permute.xlu0 %1387
      %1391 = vset.pattern.permute.xlu0 0
      %1392 = vperm.xlu0 %1391, %v1210
      %v1393 = vpop.permute.xlu0 %1392
      %1396 = vset.pattern.permute.xlu0 0
      %1397 = vperm.xlu0 %1396, %v1211
      %v1398 = vpop.permute.xlu0 %1397
      %1401 = vset.pattern.permute.xlu0 0
      %1402 = vperm.xlu0 %1401, %v1212
      %v1403 = vpop.permute.xlu0 %1402
      %1406 = vset.pattern.permute.xlu0 0
      %1407 = vperm.xlu0 %1406, %v1213
      %v1408 = vpop.permute.xlu0 %1407
      %1411 = vset.pattern.permute.xlu0 0
      %1412 = vperm.xlu0 %1411, %v1214
      %v1413 = vpop.permute.xlu0 %1412
      %1416 = vset.pattern.permute.xlu0 0
      %1417 = vperm.xlu0 %1416, %v1215
      %v1418 = vpop.permute.xlu0 %1417
      %1421 = vset.pattern.permute.xlu0 0
      %1422 = vperm.xlu0 %1421, %v1216
      %v1423 = vpop.permute.xlu0 %1422
      %1426 = vset.pattern.permute.xlu0 0
      %1427 = vperm.xlu0 %1426, %v1217
      %v1428 = vpop.permute.xlu0 %1427
      %1431 = vset.pattern.permute.xlu0 0
      %1432 = vperm.xlu0 %1431, %v1218
      %v1433 = vpop.permute.xlu0 %1432
      %1436 = vset.pattern.permute.xlu0 0
      %1437 = vperm.xlu0 %1436, %v1219
      %v1438 = vpop.permute.xlu0 %1437
      %1441 = vset.pattern.permute.xlu0 0
      %1442 = vperm.xlu0 %1441, %v1220
      %v1443 = vpop.permute.xlu0 %1442
      %1446 = vset.pattern.permute.xlu0 0
      %1447 = vperm.xlu0 %1446, %v1221
      %v1448 = vpop.permute.xlu0 %1447
      %1451 = vset.pattern.permute.xlu0 0
      %1452 = vperm.xlu0 %1451, %v1222
      %v1453 = vpop.permute.xlu0 %1452
      %1456 = vset.pattern.permute.xlu0 0
      %1457 = vperm.xlu0 %1456, %v1223
      %v1458 = vpop.permute.xlu0 %1457
      %1461 = vset.pattern.permute.xlu0 0
      %1462 = vperm.xlu0 %1461, %v1224
      %v1463 = vpop.permute.xlu0 %1462
      %1466 = vset.pattern.permute.xlu0 0
      %1467 = vperm.xlu0 %1466, %v1225
      %v1468 = vpop.permute.xlu0 %1467
      %1471 = vset.pattern.permute.xlu0 0
      %1472 = vperm.xlu0 %1471, %v1226
      %v1473 = vpop.permute.xlu0 %1472
      %1476 = vset.pattern.permute.xlu0 0
      %1477 = vperm.xlu0 %1476, %v1227
      %v1478 = vpop.permute.xlu0 %1477
      %1481 = vset.pattern.permute.xlu0 0
      %1482 = vperm.xlu0 %1481, %v1228
      %v1483 = vpop.permute.xlu0 %1482
      %1486 = vset.pattern.permute.xlu0 0
      %1487 = vperm.xlu0 %1486, %v1229
      %v1488 = vpop.permute.xlu0 %1487
      %1491 = vset.pattern.permute.xlu0 0
      %1492 = vperm.xlu0 %1491, %v1230
      %v1493 = vpop.permute.xlu0 %1492
      %1496 = vset.pattern.permute.xlu0 0
      %1497 = vperm.xlu0 %1496, %v1231
      %v1498 = vpop.permute.xlu0 %1497
      %1501 = vset.pattern.permute.xlu0 0
      %1502 = vperm.xlu0 %1501, %v1232
      %v1503 = vpop.permute.xlu0 %1502
      %1506 = vset.pattern.permute.xlu0 0
      %1507 = vperm.xlu0 %1506, %v1233
      %v1508 = vpop.permute.xlu0 %1507
      %1511 = vset.pattern.permute.xlu0 0
      %1512 = vperm.xlu0 %1511, %v1234
      %v1513 = vpop.permute.xlu0 %1512
      %1516 = vset.pattern.permute.xlu0 0
      %1517 = vperm.xlu0 %1516, %v1235
      %v1518 = vpop.permute.xlu0 %1517
      %1521 = vset.pattern.permute.xlu0 0
      %1522 = vperm.xlu0 %1521, %v1236
      %v1523 = vpop.permute.xlu0 %1522
      %1526 = vset.pattern.permute.xlu0 0
      %1527 = vperm.xlu0 %1526, %v1237
      %v1528 = vpop.permute.xlu0 %1527
      %1531 = vset.pattern.permute.xlu0 0
      %1532 = vperm.xlu0 %1531, %v1238
      %v1533 = vpop.permute.xlu0 %1532
      %1536 = vset.pattern.permute.xlu0 0
      %1537 = vperm.xlu0 %1536, %v1239
      %v1538 = vpop.permute.xlu0 %1537
      %1541 = vset.pattern.permute.xlu0 0
      %1542 = vperm.xlu0 %1541, %v1240
      %v1543 = vpop.permute.xlu0 %1542
      %1546 = vset.pattern.permute.xlu0 0
      %1547 = vperm.xlu0 %1546, %v1241
      %v1548 = vpop.permute.xlu0 %1547
      %1551 = vset.pattern.permute.xlu0 0
      %1552 = vperm.xlu0 %1551, %v1242
      %v1553 = vpop.permute.xlu0 %1552
      %1556 = vset.pattern.permute.xlu0 0
      %1557 = vperm.xlu0 %1556, %v1243
      %v1558 = vpop.permute.xlu0 %1557
      %1561 = vset.pattern.permute.xlu0 0
      %1562 = vperm.xlu0 %1561, %v1244
      %v1563 = vpop.permute.xlu0 %1562
      %1566 = vset.pattern.permute.xlu0 0
      %1567 = vperm.xlu0 %1566, %v1245
      %v1568 = vpop.permute.xlu0 %1567
      %1571 = vset.pattern.permute.xlu0 0
      %1572 = vperm.xlu0 %1571, %v1246
      %v1573 = vpop.permute.xlu0 %1572
      %1576 = vset.pattern.permute.xlu0 0
      %1577 = vperm.xlu0 %1576, %v1247
      %v1578 = vpop.permute.xlu0 %1577
      %1581 = vset.pattern.permute.xlu0 0
      %1582 = vperm.xlu0 %1581, %v1248
      %v1583 = vpop.permute.xlu0 %1582
      %1586 = vset.pattern.permute.xlu0 0
      %1587 = vperm.xlu0 %1586, %v1249
      %v1588 = vpop.permute.xlu0 %1587
      %1591 = vset.pattern.permute.xlu0 0
      %1592 = vperm.xlu0 %1591, %v1250
      %v1593 = vpop.permute.xlu0 %1592
      %1596 = vset.pattern.permute.xlu0 0
      %1597 = vperm.xlu0 %1596, %v1251
      %v1598 = vpop.permute.xlu0 %1597
      %1601 = vset.pattern.permute.xlu0 0
      %1602 = vperm.xlu0 %1601, %v1252
      %v1603 = vpop.permute.xlu0 %1602
      %1606 = vset.pattern.permute.xlu0 0
      %1607 = vperm.xlu0 %1606, %v1253
      %v1608 = vpop.permute.xlu0 %1607
      %1611 = vset.pattern.permute.xlu0 0
      %1612 = vperm.xlu0 %1611, %v1254
      %v1613 = vpop.permute.xlu0 %1612
      %1616 = vset.pattern.permute.xlu0 0
      %1617 = vperm.xlu0 %1616, %v1255
      %v1618 = vpop.permute.xlu0 %1617
      %1621 = vset.pattern.permute.xlu0 0
      %1622 = vperm.xlu0 %1621, %v1256
      %v1623 = vpop.permute.xlu0 %1622
      %1626 = vset.pattern.permute.xlu0 0
      %1627 = vperm.xlu0 %1626, %v1257
      %v1628 = vpop.permute.xlu0 %1627
      %1631 = vset.pattern.permute.xlu0 0
      %1632 = vperm.xlu0 %1631, %v1258
      %v1633 = vpop.permute.xlu0 %1632
      %1636 = vset.pattern.permute.xlu0 0
      %1637 = vperm.xlu0 %1636, %v1259
      %v1638 = vpop.permute.xlu0 %1637
      %1641 = vset.pattern.permute.xlu0 0
      %1642 = vperm.xlu0 %1641, %v1260
      %v1643 = vpop.permute.xlu0 %1642
      %1646 = vset.pattern.permute.xlu0 0
      %1647 = vperm.xlu0 %1646, %v1261
      %v1648 = vpop.permute.xlu0 %1647
      %1651 = vset.pattern.permute.xlu0 0
      %1652 = vperm.xlu0 %1651, %v1262
      %v1653 = vpop.permute.xlu0 %1652
      %1656 = vset.pattern.permute.xlu0 0
      %1657 = vperm.xlu0 %1656, %v1263
      %v1658 = vpop.permute.xlu0 %1657
      %1661 = vset.pattern.permute.xlu0 0
      %1662 = vperm.xlu0 %1661, %v1264
      %v1663 = vpop.permute.xlu0 %1662
      %1666 = vset.pattern.permute.xlu0 0
      %1667 = vperm.xlu0 %1666, %v1265
      %v1668 = vpop.permute.xlu0 %1667
      %1671 = vset.pattern.permute.xlu0 0
      %1672 = vperm.xlu0 %1671, %v1266
      %v1673 = vpop.permute.xlu0 %1672
      %1676 = vset.pattern.permute.xlu0 0
      %1677 = vperm.xlu0 %1676, %v1267
      %v1678 = vpop.permute.xlu0 %1677
      %1681 = vset.pattern.permute.xlu0 0
      %1682 = vperm.xlu0 %1681, %v1268
      %v1683 = vpop.permute.xlu0 %1682
      %1686 = vset.pattern.permute.xlu0 0
      %1687 = vperm.xlu0 %1686, %v1269
      %v1688 = vpop.permute.xlu0 %1687
      %1691 = vset.pattern.permute.xlu0 0
      %1692 = vperm.xlu0 %1691, %v1270
      %v1693 = vpop.permute.xlu0 %1692
      %1696 = vset.pattern.permute.xlu0 0
      %1697 = vperm.xlu0 %1696, %v1271
      %v1698 = vpop.permute.xlu0 %1697
      %1701 = vset.pattern.permute.xlu0 0
      %1702 = vperm.xlu0 %1701, %v1272
      %v1703 = vpop.permute.xlu0 %1702
      %1706 = vset.pattern.permute.xlu0 0
      %1707 = vperm.xlu0 %1706, %v1273
      %v1708 = vpop.permute.xlu0 %1707
      %1711 = vset.pattern.permute.xlu0 0
      %1712 = vperm.xlu0 %1711, %v1274
      %v1713 = vpop.permute.xlu0 %1712
      %1716 = vset.pattern.permute.xlu0 0
      %1717 = vperm.xlu0 %1716, %v1275
      %v1718 = vpop.permute.xlu0 %1717
      %1721 = vset.pattern.permute.xlu0 0
      %1722 = vperm.xlu0 %1721, %v1276
      %v1723 = vpop.permute.xlu0 %1722
      %1726 = vset.pattern.permute.xlu0 0
      %1727 = vperm.xlu0 %1726, %v1277
      %v1728 = vpop.permute.xlu0 %1727
      %1731 = vset.pattern.permute.xlu0 0
      %1732 = vperm.xlu0 %1731, %v1278
      %v1733 = vpop.permute.xlu0 %1732
      %1736 = vset.pattern.permute.xlu0 0
      %1737 = vperm.xlu0 %1736, %v1279
      %v1738 = vpop.permute.xlu0 %1737
      %1741 = vset.pattern.permute.xlu0 0
      %1742 = vperm.xlu0 %1741, %v1280
      %v1743 = vpop.permute.xlu0 %1742
      %1746 = vset.pattern.permute.xlu0 0
      %1747 = vperm.xlu0 %1746, %v1281
      %v1748 = vpop.permute.xlu0 %1747
      %1751 = vset.pattern.permute.xlu0 0
      %1752 = vperm.xlu0 %1751, %v1282
      %v1753 = vpop.permute.xlu0 %1752
      %1756 = vset.pattern.permute.xlu0 0
      %1757 = vperm.xlu0 %1756, %v1283
      %v1758 = vpop.permute.xlu0 %1757
      %1761 = vset.pattern.permute.xlu0 0
      %1762 = vperm.xlu0 %1761, %v1284
      %v1763 = vpop.permute.xlu0 %1762
      %1766 = vset.pattern.permute.xlu0 0
      %1767 = vperm.xlu0 %1766, %v1285
      %v1768 = vpop.permute.xlu0 %1767
      %1771 = vset.pattern.permute.xlu0 0
      %1772 = vperm.xlu0 %1771, %v1286
      %v1773 = vpop.permute.xlu0 %1772
      %1776 = vset.pattern.permute.xlu0 0
      %1777 = vperm.xlu0 %1776, %v1287
      %v1778 = vpop.permute.xlu0 %1777
      %1781 = vset.pattern.permute.xlu0 0
      %1782 = vperm.xlu0 %1781, %v1288
      %v1783 = vpop.permute.xlu0 %1782
      %1786 = vset.pattern.permute.xlu0 0
      %1787 = vperm.xlu0 %1786, %v1289
      %v1788 = vpop.permute.xlu0 %1787
      %1791 = vset.pattern.permute.xlu0 0
      %1792 = vperm.xlu0 %1791, %v1290
      %v1793 = vpop.permute.xlu0 %1792
      %1796 = vset.pattern.permute.xlu0 0
      %1797 = vperm.xlu0 %1796, %v1291
      %v1798 = vpop.permute.xlu0 %1797
      %1801 = vset.pattern.permute.xlu0 0
      %1802 = vperm.xlu0 %1801, %v1292
      %v1803 = vpop.permute.xlu0 %1802
      %1806 = vset.pattern.permute.xlu0 0
      %1807 = vperm.xlu0 %1806, %v1293
      %v1808 = vpop.permute.xlu0 %1807
      %1811 = vset.pattern.permute.xlu0 0
      %1812 = vperm.xlu0 %1811, %v1294
      %v1813 = vpop.permute.xlu0 %1812
      %1816 = vset.pattern.permute.xlu0 0
      %1817 = vperm.xlu0 %1816, %v1295
      %v1818 = vpop.permute.xlu0 %1817
      %1821 = vset.pattern.permute.xlu0 0
      %1822 = vperm.xlu0 %1821, %v1296
      %v1823 = vpop.permute.xlu0 %1822
      %1826 = vset.pattern.permute.xlu0 0
      %1827 = vperm.xlu0 %1826, %v1297
      %v1828 = vpop.permute.xlu0 %1827
      %1831 = vset.pattern.permute.xlu0 0
      %1832 = vperm.xlu0 %1831, %v1298
      %v1833 = vpop.permute.xlu0 %1832
      %1836 = vset.pattern.permute.xlu0 0
      %1837 = vperm.xlu0 %1836, %v1299
      %v1838 = vpop.permute.xlu0 %1837
      %1841 = vset.pattern.permute.xlu0 0
      %1842 = vperm.xlu0 %1841, %v1300
      %v1843 = vpop.permute.xlu0 %1842
      %1846 = vset.pattern.permute.xlu0 0
      %1847 = vperm.xlu0 %1846, %v1301
      %v1848 = vpop.permute.xlu0 %1847
      %1851 = vset.pattern.permute.xlu0 0
      %1852 = vperm.xlu0 %1851, %v1302
      %v1853 = vpop.permute.xlu0 %1852
      %1856 = vset.pattern.permute.xlu0 0
      %1857 = vperm.xlu0 %1856, %v1303
      %v1858 = vpop.permute.xlu0 %1857
      %1861 = vset.pattern.permute.xlu0 0
      %1862 = vperm.xlu0 %1861, %v1304
      %v1863 = vpop.permute.xlu0 %1862
      %1866 = vset.pattern.permute.xlu0 0
      %1867 = vperm.xlu0 %1866, %v1305
      %v1868 = vpop.permute.xlu0 %1867
      %1871 = vset.pattern.permute.xlu0 0
      %1872 = vperm.xlu0 %1871, %v1306
      %v1873 = vpop.permute.xlu0 %1872
      %1876 = vset.pattern.permute.xlu0 0
      %1877 = vperm.xlu0 %1876, %v1307
      %v1878 = vpop.permute.xlu0 %1877
      %1881 = vset.pattern.permute.xlu0 0
      %1882 = vperm.xlu0 %1881, %v1308
      %v1883 = vpop.permute.xlu0 %1882
      %1886 = vset.pattern.permute.xlu0 0
      %1887 = vperm.xlu0 %1886, %v1309
      %v1888 = vpop.permute.xlu0 %1887
      %1891 = vset.pattern.permute.xlu0 0
      %1892 = vperm.xlu0 %1891, %v1310
      %v1893 = vpop.permute.xlu0 %1892
      %1896 = vset.pattern.permute.xlu0 0
      %1897 = vperm.xlu0 %1896, %v1311
      %v1898 = vpop.permute.xlu0 %1897
      %1901 = vset.pattern.permute.xlu0 0
      %1902 = vperm.xlu0 %1901, %v1312
      %v1903 = vpop.permute.xlu0 %1902
      %1906 = vset.pattern.permute.xlu0 0
      %1907 = vperm.xlu0 %1906, %v1313
      %v1908 = vpop.permute.xlu0 %1907
      %1911 = vset.pattern.permute.xlu0 0
      %1912 = vperm.xlu0 %1911, %v1314
      %v1913 = vpop.permute.xlu0 %1912
      %1916 = vset.pattern.permute.xlu0 0
      %1917 = vperm.xlu0 %1916, %v1315
      %v1918 = vpop.permute.xlu0 %1917
      %1921 = vset.pattern.permute.xlu0 0
      %1922 = vperm.xlu0 %1921, %v1316
      %v1923 = vpop.permute.xlu0 %1922
      %1926 = vset.pattern.permute.xlu0 0
      %1927 = vperm.xlu0 %1926, %v1317
      %v1928 = vpop.permute.xlu0 %1927
      %1931 = vset.pattern.permute.xlu0 0
      %1932 = vperm.xlu0 %1931, %v1318
      %v1933 = vpop.permute.xlu0 %1932
      %1936 = vset.pattern.permute.xlu0 0
      %1937 = vperm.xlu0 %1936, %v1319
      %v1938 = vpop.permute.xlu0 %1937
      %1941 = vset.pattern.permute.xlu0 0
      %1942 = vperm.xlu0 %1941, %v1320
      %v1943 = vpop.permute.xlu0 %1942
      %1946 = vset.pattern.permute.xlu0 0
      %1947 = vperm.xlu0 %1946, %v1321
      %v1948 = vpop.permute.xlu0 %1947
      %1951 = vset.pattern.permute.xlu0 0
      %1952 = vperm.xlu0 %1951, %v1322
      %v1953 = vpop.permute.xlu0 %1952
      %1956 = vset.pattern.permute.xlu0 0
      %1957 = vperm.xlu0 %1956, %v1323
      %v1958 = vpop.permute.xlu0 %1957
      %1961 = vset.pattern.permute.xlu0 0
      %1962 = vperm.xlu0 %1961, %v1324
      %v1963 = vpop.permute.xlu0 %1962
      %v2093 = vunpack.c.l.b16 %v1045
      %v2094 = vunpack.c.l.b16 %v1046
      %v2095 = vunpack.c.l.b16 %v1047
      %v2096 = vunpack.c.l.b16 %v1048
      %v2097 = vunpack.c.l.b16 %v1049
      %v2098 = vunpack.c.l.b16 %v1050
      %v2099 = vunpack.c.l.b16 %v1051
      %v2100 = vunpack.c.l.b16 %v1052
      %v2101 = vunpack.c.l.b16 %v1053
      %v2102 = vunpack.c.l.b16 %v1054
      %v2103 = vunpack.c.l.b16 %v1055
      %v2104 = vunpack.c.l.b16 %v1056
      %v2105 = vunpack.c.l.b16 %v1057
      %v2106 = vunpack.c.l.b16 %v1058
      %v2107 = vunpack.c.l.b16 %v1059
      %v2108 = vunpack.c.l.b16 %v1060
      %v2109 = vunpack.c.l.b16 %v1061
      %v2110 = vunpack.c.l.b16 %v1062
      %v2111 = vunpack.c.l.b16 %v1063
      %v2112 = vunpack.c.l.b16 %v1064
      %v2113 = vunpack.c.l.b16 %v1065
      %v2114 = vunpack.c.l.b16 %v1066
      %v2115 = vunpack.c.l.b16 %v1067
      %v2116 = vunpack.c.l.b16 %v1068
      %v2117 = vunpack.c.l.b16 %v1069
      %v2118 = vunpack.c.l.b16 %v1070
      %v2119 = vunpack.c.l.b16 %v1071
      %v2120 = vunpack.c.l.b16 %v1072
      %v2121 = vunpack.c.l.b16 %v1073
      %v2122 = vunpack.c.l.b16 %v1074
      %v2123 = vunpack.c.l.b16 %v1075
      %v2124 = vunpack.c.l.b16 %v1076
      %v2125 = vunpack.c.l.b16 %v1077
      %v2126 = vunpack.c.l.b16 %v1078
      %v2127 = vunpack.c.l.b16 %v1079
      %v2128 = vunpack.c.l.b16 %v1080
      %v2129 = vunpack.c.l.b16 %v1081
      %v2130 = vunpack.c.l.b16 %v1082
      %v2131 = vunpack.c.l.b16 %v1083
      %v2132 = vunpack.c.l.b16 %v1084
      %v2133 = vunpack.c.l.b16 %v1085
      %v2134 = vunpack.c.l.b16 %v1086
      %v2135 = vunpack.c.l.b16 %v1087
      %v2136 = vunpack.c.l.b16 %v1088
      %v2137 = vunpack.c.l.b16 %v1089
      %v2138 = vunpack.c.l.b16 %v1090
      %v2139 = vunpack.c.l.b16 %v1091
      %v2140 = vunpack.c.l.b16 %v1092
      %v2141 = vunpack.c.l.b16 %v1093
      %v2142 = vunpack.c.l.b16 %v1094
      %v2143 = vunpack.c.l.b16 %v1095
      %v2144 = vunpack.c.l.b16 %v1096
      %v2145 = vunpack.c.l.b16 %v1097
      %v2146 = vunpack.c.l.b16 %v1098
      %v2147 = vunpack.c.l.b16 %v1099
      %v2148 = vunpack.c.l.b16 %v1100
      %v2149 = vunpack.c.l.b16 %v1101
      %v2150 = vunpack.c.l.b16 %v1102
      %v2151 = vunpack.c.l.b16 %v1103
      %v2152 = vunpack.c.l.b16 %v1104
      %v2153 = vunpack.c.l.b16 %v1105
      %v2154 = vunpack.c.l.b16 %v1106
      %v2155 = vunpack.c.l.b16 %v1107
      %v2156 = vunpack.c.l.b16 %v1108
      %v2157 = vunpack.c.l.b16 %v1109
      %v2158 = vunpack.c.l.b16 %v1110
      %v2159 = vunpack.c.l.b16 %v1111
      %v2160 = vunpack.c.l.b16 %v1112
      %v2161 = vunpack.c.l.b16 %v1113
      %v2162 = vunpack.c.l.b16 %v1114
      %v2163 = vunpack.c.l.b16 %v1115
      %v2164 = vunpack.c.l.b16 %v1116
      %v2165 = vunpack.c.l.b16 %v1117
      %v2166 = vunpack.c.l.b16 %v1118
      %v2167 = vunpack.c.l.b16 %v1119
      %v2168 = vunpack.c.l.b16 %v1120
      %v2169 = vunpack.c.l.b16 %v1121
      %v2170 = vunpack.c.l.b16 %v1122
      %v2171 = vunpack.c.l.b16 %v1123
      %v2172 = vunpack.c.l.b16 %v1124
      %v2173 = vunpack.c.l.b16 %v1125
      %v2174 = vunpack.c.l.b16 %v1126
      %v2175 = vunpack.c.l.b16 %v1127
      %v2176 = vunpack.c.l.b16 %v1128
      %v2177 = vunpack.c.l.b16 %v1129
      %v2178 = vunpack.c.l.b16 %v1130
      %v2179 = vunpack.c.l.b16 %v1131
      %v2180 = vunpack.c.l.b16 %v1132
      %v2181 = vunpack.c.l.b16 %v1133
      %v2182 = vunpack.c.l.b16 %v1134
      %v2183 = vunpack.c.l.b16 %v1135
      %v2184 = vunpack.c.l.b16 %v1136
      %v2185 = vunpack.c.l.b16 %v1137
      %v2186 = vunpack.c.l.b16 %v1138
      %v2187 = vunpack.c.l.b16 %v1139
      %v2188 = vunpack.c.l.b16 %v1140
      %v2189 = vunpack.c.l.b16 %v1141
      %v2190 = vunpack.c.l.b16 %v1142
      %v2191 = vunpack.c.l.b16 %v1143
      %v2192 = vunpack.c.l.b16 %v1144
      %v2193 = vunpack.c.l.b16 %v1145
      %v2194 = vunpack.c.l.b16 %v1146
      %v2195 = vunpack.c.l.b16 %v1147
      %v2196 = vunpack.c.l.b16 %v1148
      %v2197 = vunpack.c.l.b16 %v1149
      %v2198 = vunpack.c.l.b16 %v1150
      %v2199 = vunpack.c.l.b16 %v1151
      %v2200 = vunpack.c.l.b16 %v1152
      %v2201 = vunpack.c.l.b16 %v1153
      %v2202 = vunpack.c.l.b16 %v1154
      %v2203 = vunpack.c.l.b16 %v1155
      %v2204 = vunpack.c.l.b16 %v1156
      %v2205 = vunpack.c.l.b16 %v1157
      %v2206 = vunpack.c.l.b16 %v1158
      %v2207 = vunpack.c.l.b16 %v1159
      %v2208 = vunpack.c.l.b16 %v1160
      %v2209 = vunpack.c.l.b16 %v1161
      %v2210 = vunpack.c.l.b16 %v1162
      %v2211 = vunpack.c.l.b16 %v1163
      %v2212 = vunpack.c.l.b16 %v1164
      %v2213 = vunpack.c.l.b16 %v1165
      %v2214 = vunpack.c.l.b16 %v1166
      %v2215 = vunpack.c.l.b16 %v1167
      %v2216 = vunpack.c.l.b16 %v1168
      %v2217 = vunpack.c.l.b16 %v1169
      %v2218 = vunpack.c.l.b16 %v1170
      %v2219 = vunpack.c.l.b16 %v1171
      %v2220 = vunpack.c.l.b16 %v1172
      %v2221 = vpack.c.b16 %v2094, %v2093
      %v2222 = vpack.c.b16 %v2096, %v2095
      %v2223 = vpack.c.b16 %v2098, %v2097
      %v2224 = vpack.c.b16 %v2100, %v2099
      %v2225 = vpack.c.b16 %v2102, %v2101
      %v2226 = vpack.c.b16 %v2104, %v2103
      %v2227 = vpack.c.b16 %v2106, %v2105
      %v2228 = vpack.c.b16 %v2108, %v2107
      %v2229 = vpack.c.b16 %v2110, %v2109
      %v2230 = vpack.c.b16 %v2112, %v2111
      %v2231 = vpack.c.b16 %v2114, %v2113
      %v2232 = vpack.c.b16 %v2116, %v2115
      %v2233 = vpack.c.b16 %v2118, %v2117
      %v2234 = vpack.c.b16 %v2120, %v2119
      %v2235 = vpack.c.b16 %v2122, %v2121
      %v2236 = vpack.c.b16 %v2124, %v2123
      %v2237 = vpack.c.b16 %v2126, %v2125
      %v2238 = vpack.c.b16 %v2128, %v2127
      %v2239 = vpack.c.b16 %v2130, %v2129
      %v2240 = vpack.c.b16 %v2132, %v2131
      %v2241 = vpack.c.b16 %v2134, %v2133
      %v2242 = vpack.c.b16 %v2136, %v2135
      %v2243 = vpack.c.b16 %v2138, %v2137
      %v2244 = vpack.c.b16 %v2140, %v2139
      %v2245 = vpack.c.b16 %v2142, %v2141
      %v2246 = vpack.c.b16 %v2144, %v2143
      %v2247 = vpack.c.b16 %v2146, %v2145
      %v2248 = vpack.c.b16 %v2148, %v2147
      %v2249 = vpack.c.b16 %v2150, %v2149
      %v2250 = vpack.c.b16 %v2152, %v2151
      %v2251 = vpack.c.b16 %v2154, %v2153
      %v2252 = vpack.c.b16 %v2156, %v2155
      %v2253 = vpack.c.b16 %v2158, %v2157
      %v2254 = vpack.c.b16 %v2160, %v2159
      %v2255 = vpack.c.b16 %v2162, %v2161
      %v2256 = vpack.c.b16 %v2164, %v2163
      %v2257 = vpack.c.b16 %v2166, %v2165
      %v2258 = vpack.c.b16 %v2168, %v2167
      %v2259 = vpack.c.b16 %v2170, %v2169
      %v2260 = vpack.c.b16 %v2172, %v2171
      %v2261 = vpack.c.b16 %v2174, %v2173
      %v2262 = vpack.c.b16 %v2176, %v2175
      %v2263 = vpack.c.b16 %v2178, %v2177
      %v2264 = vpack.c.b16 %v2180, %v2179
      %v2265 = vpack.c.b16 %v2182, %v2181
      %v2266 = vpack.c.b16 %v2184, %v2183
      %v2267 = vpack.c.b16 %v2186, %v2185
      %v2268 = vpack.c.b16 %v2188, %v2187
      %v2269 = vpack.c.b16 %v2190, %v2189
      %v2270 = vpack.c.b16 %v2192, %v2191
      %v2271 = vpack.c.b16 %v2194, %v2193
      %v2272 = vpack.c.b16 %v2196, %v2195
      %v2273 = vpack.c.b16 %v2198, %v2197
      %v2274 = vpack.c.b16 %v2200, %v2199
      %v2275 = vpack.c.b16 %v2202, %v2201
      %v2276 = vpack.c.b16 %v2204, %v2203
      %v2277 = vpack.c.b16 %v2206, %v2205
      %v2278 = vpack.c.b16 %v2208, %v2207
      %v2279 = vpack.c.b16 %v2210, %v2209
      %v2280 = vpack.c.b16 %v2212, %v2211
      %v2281 = vpack.c.b16 %v2214, %v2213
      %v2282 = vpack.c.b16 %v2216, %v2215
      %v2283 = vpack.c.b16 %v2218, %v2217
      %v2284 = vpack.c.b16 %v2220, %v2219
      %2349 = vmatpush.bf16.msra.mxu0 %v1194
      %2350 = vmatpush.bf16.msra.mxu0 %v1191
      %2351 = vmatpush.bf16.msra.mxu0 %v1188
      %2352 = vmatpush.bf16.msra.mxu0 %v1185
      %2353 = vmatpush.bf16.msra.mxu0 %v1182
      %2354 = vmatpush.bf16.msra.mxu0 %v1179
      %2355 = vmatpush.bf16.msra.mxu0 %v1176
      %2356 = vmatpush.bf16.msra.mxu0 %v1173
      %2357 = vmatmul.bf16.gmra.mxu0 %v2221
      %v2358 = vpop.f32.mrf.mxu0
      %v2359 = vadd.f32 %v1328, %v2358
      %v2360 = vpop.f32.mrf.mxu0
      %v2361 = vadd.f32 %v1333, %v2360
      %2362 = vmatmul.bf16.gmra.mxu0 %v2222
      %v2363 = vpop.f32.mrf.mxu0
      %v2364 = vadd.f32 %v1338, %v2363
      %v2365 = vpop.f32.mrf.mxu0
      %v2366 = vadd.f32 %v1343, %v2365
      %2367 = vmatmul.bf16.gmra.mxu0 %v2223
      %v2368 = vpop.f32.mrf.mxu0
      %v2369 = vadd.f32 %v1348, %v2368
      %v2370 = vpop.f32.mrf.mxu0
      %v2371 = vadd.f32 %v1353, %v2370
      %2372 = vmatmul.bf16.gmra.mxu0 %v2224
      %v2373 = vpop.f32.mrf.mxu0
      %v2374 = vadd.f32 %v1358, %v2373
      %v2375 = vpop.f32.mrf.mxu0
      %v2376 = vadd.f32 %v1363, %v2375
      %2377 = vmatmul.bf16.gmra.mxu0 %v2225
      %v2378 = vpop.f32.mrf.mxu0
      %v2379 = vadd.f32 %v1368, %v2378
      %v2380 = vpop.f32.mrf.mxu0
      %v2381 = vadd.f32 %v1373, %v2380
      %2382 = vmatmul.bf16.gmra.mxu0 %v2226
      %v2383 = vpop.f32.mrf.mxu0
      %v2384 = vadd.f32 %v1378, %v2383
      %v2385 = vpop.f32.mrf.mxu0
      %v2386 = vadd.f32 %v1383, %v2385
      %2387 = vmatmul.bf16.gmra.mxu0 %v2227
      %v2388 = vpop.f32.mrf.mxu0
      %v2389 = vadd.f32 %v1388, %v2388
      %v2390 = vpop.f32.mrf.mxu0
      %v2391 = vadd.f32 %v1393, %v2390
      %2392 = vmatmul.bf16.gmra.mxu0 %v2228
      %v2393 = vpop.f32.mrf.mxu0
      %v2394 = vadd.f32 %v1398, %v2393
      %v2395 = vpop.f32.mrf.mxu0
      %v2396 = vadd.f32 %v1403, %v2395
      %2397 = vmatmul.bf16.gmra.mxu0 %v2229
      %v2398 = vpop.f32.mrf.mxu0
      %v2399 = vadd.f32 %v1408, %v2398
      %v2400 = vpop.f32.mrf.mxu0
      %v2401 = vadd.f32 %v1413, %v2400
      %2402 = vmatmul.bf16.gmra.mxu0 %v2230
      %v2403 = vpop.f32.mrf.mxu0
      %v2404 = vadd.f32 %v1418, %v2403
      %v2405 = vpop.f32.mrf.mxu0
      %v2406 = vadd.f32 %v1423, %v2405
      %2407 = vmatmul.bf16.gmra.mxu0 %v2231
      %v2408 = vpop.f32.mrf.mxu0
      %v2409 = vadd.f32 %v1428, %v2408
      %v2410 = vpop.f32.mrf.mxu0
      %v2411 = vadd.f32 %v1433, %v2410
      %2412 = vmatmul.bf16.gmra.mxu0 %v2232
      %v2413 = vpop.f32.mrf.mxu0
      %v2414 = vadd.f32 %v1438, %v2413
      %v2415 = vpop.f32.mrf.mxu0
      %v2416 = vadd.f32 %v1443, %v2415
      %2417 = vmatmul.bf16.gmra.mxu0 %v2233
      %v2418 = vpop.f32.mrf.mxu0
      %v2419 = vadd.f32 %v1448, %v2418
      %v2420 = vpop.f32.mrf.mxu0
      %v2421 = vadd.f32 %v1453, %v2420
      %2422 = vmatmul.bf16.gmra.mxu0 %v2234
      %v2423 = vpop.f32.mrf.mxu0
      %v2424 = vadd.f32 %v1458, %v2423
      %v2425 = vpop.f32.mrf.mxu0
      %v2426 = vadd.f32 %v1463, %v2425
      %2427 = vmatmul.bf16.gmra.mxu0 %v2235
      %v2428 = vpop.f32.mrf.mxu0
      %v2429 = vadd.f32 %v1468, %v2428
      %v2430 = vpop.f32.mrf.mxu0
      %v2431 = vadd.f32 %v1473, %v2430
      %2432 = vmatmul.bf16.gmra.mxu0 %v2236
      %v2433 = vpop.f32.mrf.mxu0
      %v2434 = vadd.f32 %v1478, %v2433
      %v2435 = vpop.f32.mrf.mxu0
      %v2436 = vadd.f32 %v1483, %v2435
      %2437 = vmatmul.bf16.gmra.mxu0 %v2237
      %v2438 = vpop.f32.mrf.mxu0
      %v2439 = vadd.f32 %v1488, %v2438
      %v2440 = vpop.f32.mrf.mxu0
      %v2441 = vadd.f32 %v1493, %v2440
      %2442 = vmatmul.bf16.gmra.mxu0 %v2238
      %v2443 = vpop.f32.mrf.mxu0
      %v2444 = vadd.f32 %v1498, %v2443
      %v2445 = vpop.f32.mrf.mxu0
      %v2446 = vadd.f32 %v1503, %v2445
      %2447 = vmatmul.bf16.gmra.mxu0 %v2239
      %v2448 = vpop.f32.mrf.mxu0
      %v2449 = vadd.f32 %v1508, %v2448
      %v2450 = vpop.f32.mrf.mxu0
      %v2451 = vadd.f32 %v1513, %v2450
      %2452 = vmatmul.bf16.gmra.mxu0 %v2240
      %v2453 = vpop.f32.mrf.mxu0
      %v2454 = vadd.f32 %v1518, %v2453
      %v2455 = vpop.f32.mrf.mxu0
      %v2456 = vadd.f32 %v1523, %v2455
      %2457 = vmatmul.bf16.gmra.mxu0 %v2241
      %v2458 = vpop.f32.mrf.mxu0
      %v2459 = vadd.f32 %v1528, %v2458
      %v2460 = vpop.f32.mrf.mxu0
      %v2461 = vadd.f32 %v1533, %v2460
      %2462 = vmatmul.bf16.gmra.mxu0 %v2242
      %v2463 = vpop.f32.mrf.mxu0
      %v2464 = vadd.f32 %v1538, %v2463
      %v2465 = vpop.f32.mrf.mxu0
      %v2466 = vadd.f32 %v1543, %v2465
      %2467 = vmatmul.bf16.gmra.mxu0 %v2243
      %v2468 = vpop.f32.mrf.mxu0
      %v2469 = vadd.f32 %v1548, %v2468
      %v2470 = vpop.f32.mrf.mxu0
      %v2471 = vadd.f32 %v1553, %v2470
      %2472 = vmatmul.bf16.gmra.mxu0 %v2244
      %v2473 = vpop.f32.mrf.mxu0
      %v2474 = vadd.f32 %v1558, %v2473
      %v2475 = vpop.f32.mrf.mxu0
      %v2476 = vadd.f32 %v1563, %v2475
      %2477 = vmatmul.bf16.gmra.mxu0 %v2245
      %v2478 = vpop.f32.mrf.mxu0
      %v2479 = vadd.f32 %v1568, %v2478
      %v2480 = vpop.f32.mrf.mxu0
      %v2481 = vadd.f32 %v1573, %v2480
      %2482 = vmatmul.bf16.gmra.mxu0 %v2246
      %v2483 = vpop.f32.mrf.mxu0
      %v2484 = vadd.f32 %v1578, %v2483
      %v2485 = vpop.f32.mrf.mxu0
      %v2486 = vadd.f32 %v1583, %v2485
      %2487 = vmatmul.bf16.gmra.mxu0 %v2247
      %v2488 = vpop.f32.mrf.mxu0
      %v2489 = vadd.f32 %v1588, %v2488
      %v2490 = vpop.f32.mrf.mxu0
      %v2491 = vadd.f32 %v1593, %v2490
      %2492 = vmatmul.bf16.gmra.mxu0 %v2248
      %v2493 = vpop.f32.mrf.mxu0
      %v2494 = vadd.f32 %v1598, %v2493
      %v2495 = vpop.f32.mrf.mxu0
      %v2496 = vadd.f32 %v1603, %v2495
      %2497 = vmatmul.bf16.gmra.mxu0 %v2249
      %v2498 = vpop.f32.mrf.mxu0
      %v2499 = vadd.f32 %v1608, %v2498
      %v2500 = vpop.f32.mrf.mxu0
      %v2501 = vadd.f32 %v1613, %v2500
      %2502 = vmatmul.bf16.gmra.mxu0 %v2250
      %v2503 = vpop.f32.mrf.mxu0
      %v2504 = vadd.f32 %v1618, %v2503
      %v2505 = vpop.f32.mrf.mxu0
      %v2506 = vadd.f32 %v1623, %v2505
      %2507 = vmatmul.bf16.gmra.mxu0 %v2251
      %v2508 = vpop.f32.mrf.mxu0
      %v2509 = vadd.f32 %v1628, %v2508
      %v2510 = vpop.f32.mrf.mxu0
      %v2511 = vadd.f32 %v1633, %v2510
      %2512 = vmatmul.bf16.gmra.mxu0 %v2252
      %v2513 = vpop.f32.mrf.mxu0
      %v2514 = vadd.f32 %v1638, %v2513
      %v2515 = vpop.f32.mrf.mxu0
      %v2516 = vadd.f32 %v1643, %v2515
      %2517 = vmatmul.bf16.gmra.mxu0 %v2253
      %v2518 = vpop.f32.mrf.mxu0
      %v2519 = vadd.f32 %v1648, %v2518
      %v2520 = vpop.f32.mrf.mxu0
      %v2521 = vadd.f32 %v1653, %v2520
      %2522 = vmatmul.bf16.gmra.mxu0 %v2254
      %v2523 = vpop.f32.mrf.mxu0
      %v2524 = vadd.f32 %v1658, %v2523
      %v2525 = vpop.f32.mrf.mxu0
      %v2526 = vadd.f32 %v1663, %v2525
      %2527 = vmatmul.bf16.gmra.mxu0 %v2255
      %v2528 = vpop.f32.mrf.mxu0
      %v2529 = vadd.f32 %v1668, %v2528
      %v2530 = vpop.f32.mrf.mxu0
      %v2531 = vadd.f32 %v1673, %v2530
      %2532 = vmatmul.bf16.gmra.mxu0 %v2256
      %v2533 = vpop.f32.mrf.mxu0
      %v2534 = vadd.f32 %v1678, %v2533
      %v2535 = vpop.f32.mrf.mxu0
      %v2536 = vadd.f32 %v1683, %v2535
      %2537 = vmatmul.bf16.gmra.mxu0 %v2257
      %v2538 = vpop.f32.mrf.mxu0
      %v2539 = vadd.f32 %v1688, %v2538
      %v2540 = vpop.f32.mrf.mxu0
      %v2541 = vadd.f32 %v1693, %v2540
      %2542 = vmatmul.bf16.gmra.mxu0 %v2258
      %v2543 = vpop.f32.mrf.mxu0
      %v2544 = vadd.f32 %v1698, %v2543
      %v2545 = vpop.f32.mrf.mxu0
      %v2546 = vadd.f32 %v1703, %v2545
      %2547 = vmatmul.bf16.gmra.mxu0 %v2259
      %v2548 = vpop.f32.mrf.mxu0
      %v2549 = vadd.f32 %v1708, %v2548
      %v2550 = vpop.f32.mrf.mxu0
      %v2551 = vadd.f32 %v1713, %v2550
      %2552 = vmatmul.bf16.gmra.mxu0 %v2260
      %v2553 = vpop.f32.mrf.mxu0
      %v2554 = vadd.f32 %v1718, %v2553
      %v2555 = vpop.f32.mrf.mxu0
      %v2556 = vadd.f32 %v1723, %v2555
      %2557 = vmatmul.bf16.gmra.mxu0 %v2261
      %v2558 = vpop.f32.mrf.mxu0
      %v2559 = vadd.f32 %v1728, %v2558
      %v2560 = vpop.f32.mrf.mxu0
      %v2561 = vadd.f32 %v1733, %v2560
      %2562 = vmatmul.bf16.gmra.mxu0 %v2262
      %v2563 = vpop.f32.mrf.mxu0
      %v2564 = vadd.f32 %v1738, %v2563
      %v2565 = vpop.f32.mrf.mxu0
      %v2566 = vadd.f32 %v1743, %v2565
      %2567 = vmatmul.bf16.gmra.mxu0 %v2263
      %v2568 = vpop.f32.mrf.mxu0
      %v2569 = vadd.f32 %v1748, %v2568
      %v2570 = vpop.f32.mrf.mxu0
      %v2571 = vadd.f32 %v1753, %v2570
      %2572 = vmatmul.bf16.gmra.mxu0 %v2264
      %v2573 = vpop.f32.mrf.mxu0
      %v2574 = vadd.f32 %v1758, %v2573
      %v2575 = vpop.f32.mrf.mxu0
      %v2576 = vadd.f32 %v1763, %v2575
      %2577 = vmatmul.bf16.gmra.mxu0 %v2265
      %v2578 = vpop.f32.mrf.mxu0
      %v2579 = vadd.f32 %v1768, %v2578
      %v2580 = vpop.f32.mrf.mxu0
      %v2581 = vadd.f32 %v1773, %v2580
      %2582 = vmatmul.bf16.gmra.mxu0 %v2266
      %v2583 = vpop.f32.mrf.mxu0
      %v2584 = vadd.f32 %v1778, %v2583
      %v2585 = vpop.f32.mrf.mxu0
      %v2586 = vadd.f32 %v1783, %v2585
      %2587 = vmatmul.bf16.gmra.mxu0 %v2267
      %v2588 = vpop.f32.mrf.mxu0
      %v2589 = vadd.f32 %v1788, %v2588
      %v2590 = vpop.f32.mrf.mxu0
      %v2591 = vadd.f32 %v1793, %v2590
      %2592 = vmatmul.bf16.gmra.mxu0 %v2268
      %v2593 = vpop.f32.mrf.mxu0
      %v2594 = vadd.f32 %v1798, %v2593
      %v2595 = vpop.f32.mrf.mxu0
      %v2596 = vadd.f32 %v1803, %v2595
      %2597 = vmatmul.bf16.gmra.mxu0 %v2269
      %v2598 = vpop.f32.mrf.mxu0
      %v2599 = vadd.f32 %v1808, %v2598
      %v2600 = vpop.f32.mrf.mxu0
      %v2601 = vadd.f32 %v1813, %v2600
      %2602 = vmatmul.bf16.gmra.mxu0 %v2270
      %v2603 = vpop.f32.mrf.mxu0
      %v2604 = vadd.f32 %v1818, %v2603
      %v2605 = vpop.f32.mrf.mxu0
      %v2606 = vadd.f32 %v1823, %v2605
      %2607 = vmatmul.bf16.gmra.mxu0 %v2271
      %v2608 = vpop.f32.mrf.mxu0
      %v2609 = vadd.f32 %v1828, %v2608
      %v2610 = vpop.f32.mrf.mxu0
      %v2611 = vadd.f32 %v1833, %v2610
      %2612 = vmatmul.bf16.gmra.mxu0 %v2272
      %v2613 = vpop.f32.mrf.mxu0
      %v2614 = vadd.f32 %v1838, %v2613
      %v2615 = vpop.f32.mrf.mxu0
      %v2616 = vadd.f32 %v1843, %v2615
      %2617 = vmatmul.bf16.gmra.mxu0 %v2273
      %v2618 = vpop.f32.mrf.mxu0
      %v2619 = vadd.f32 %v1848, %v2618
      %v2620 = vpop.f32.mrf.mxu0
      %v2621 = vadd.f32 %v1853, %v2620
      %2622 = vmatmul.bf16.gmra.mxu0 %v2274
      %v2623 = vpop.f32.mrf.mxu0
      %v2624 = vadd.f32 %v1858, %v2623
      %v2625 = vpop.f32.mrf.mxu0
      %v2626 = vadd.f32 %v1863, %v2625
      %2627 = vmatmul.bf16.gmra.mxu0 %v2275
      %v2628 = vpop.f32.mrf.mxu0
      %v2629 = vadd.f32 %v1868, %v2628
      %v2630 = vpop.f32.mrf.mxu0
      %v2631 = vadd.f32 %v1873, %v2630
      %2632 = vmatmul.bf16.gmra.mxu0 %v2276
      %v2633 = vpop.f32.mrf.mxu0
      %v2634 = vadd.f32 %v1878, %v2633
      %v2635 = vpop.f32.mrf.mxu0
      %v2636 = vadd.f32 %v1883, %v2635
      %2637 = vmatmul.bf16.gmra.mxu0 %v2277
      %v2638 = vpop.f32.mrf.mxu0
      %v2639 = vadd.f32 %v1888, %v2638
      %v2640 = vpop.f32.mrf.mxu0
      %v2641 = vadd.f32 %v1893, %v2640
      %2642 = vmatmul.bf16.gmra.mxu0 %v2278
      %v2643 = vpop.f32.mrf.mxu0
      %v2644 = vadd.f32 %v1898, %v2643
      %v2645 = vpop.f32.mrf.mxu0
      %v2646 = vadd.f32 %v1903, %v2645
      %2647 = vmatmul.bf16.gmra.mxu0 %v2279
      %v2648 = vpop.f32.mrf.mxu0
      %v2649 = vadd.f32 %v1908, %v2648
      %v2650 = vpop.f32.mrf.mxu0
      %v2651 = vadd.f32 %v1913, %v2650
      %2652 = vmatmul.bf16.gmra.mxu0 %v2280
      %v2653 = vpop.f32.mrf.mxu0
      %v2654 = vadd.f32 %v1918, %v2653
      %v2655 = vpop.f32.mrf.mxu0
      %v2656 = vadd.f32 %v1923, %v2655
      %2657 = vmatmul.bf16.gmra.mxu0 %v2281
      %v2658 = vpop.f32.mrf.mxu0
      %v2659 = vadd.f32 %v1928, %v2658
      %v2660 = vpop.f32.mrf.mxu0
      %v2661 = vadd.f32 %v1933, %v2660
      %2662 = vmatmul.bf16.gmra.mxu0 %v2282
      %v2663 = vpop.f32.mrf.mxu0
      %v2664 = vadd.f32 %v1938, %v2663
      %v2665 = vpop.f32.mrf.mxu0
      %v2666 = vadd.f32 %v1943, %v2665
      %2667 = vmatmul.bf16.gmra.mxu0 %v2283
      %v2668 = vpop.f32.mrf.mxu0
      %v2669 = vadd.f32 %v1948, %v2668
      %v2670 = vpop.f32.mrf.mxu0
      %v2671 = vadd.f32 %v1953, %v2670
      %2672 = vmatmul.bf16.gmra.mxu0 %v2284
      %v2673 = vpop.f32.mrf.mxu0
      %v2674 = vadd.f32 %v1958, %v2673
      %v2675 = vpop.f32.mrf.mxu0
      %v2676 = vadd.f32 %v1963, %v2675
      %2677 = vdwg.mxu0
      %2678 = vmatpush.bf16.msra.mxu0 %v1195
      %2679 = vmatpush.bf16.msra.mxu0 %v1192
      %2680 = vmatpush.bf16.msra.mxu0 %v1189
      %2681 = vmatpush.bf16.msra.mxu0 %v1186
      %2682 = vmatpush.bf16.msra.mxu0 %v1183
      %2683 = vmatpush.bf16.msra.mxu0 %v1180
      %2684 = vmatpush.bf16.msra.mxu0 %v1177
      %2685 = vmatpush.bf16.msra.mxu0 %v1174
      %2686 = vmatmul.bf16.gmra.mxu0 %v2221
      %v2687 = vpop.f32.mrf.mxu0
      %v2688 = vadd.f32 %v1328, %v2687
      %v2689 = vpop.f32.mrf.mxu0
      %v2690 = vadd.f32 %v1333, %v2689
      %2691 = vmatmul.bf16.gmra.mxu0 %v2222
      %v2692 = vpop.f32.mrf.mxu0
      %v2693 = vadd.f32 %v1338, %v2692
      %v2694 = vpop.f32.mrf.mxu0
      %v2695 = vadd.f32 %v1343, %v2694
      %2696 = vmatmul.bf16.gmra.mxu0 %v2223
      %v2697 = vpop.f32.mrf.mxu0
      %v2698 = vadd.f32 %v1348, %v2697
      %v2699 = vpop.f32.mrf.mxu0
      %v2700 = vadd.f32 %v1353, %v2699
      %2701 = vmatmul.bf16.gmra.mxu0 %v2224
      %v2702 = vpop.f32.mrf.mxu0
      %v2703 = vadd.f32 %v1358, %v2702
      %v2704 = vpop.f32.mrf.mxu0
      %v2705 = vadd.f32 %v1363, %v2704
      %2706 = vmatmul.bf16.gmra.mxu0 %v2225
      %v2707 = vpop.f32.mrf.mxu0
      %v2708 = vadd.f32 %v1368, %v2707
      %v2709 = vpop.f32.mrf.mxu0
      %v2710 = vadd.f32 %v1373, %v2709
      %2711 = vmatmul.bf16.gmra.mxu0 %v2226
      %v2712 = vpop.f32.mrf.mxu0
      %v2713 = vadd.f32 %v1378, %v2712
      %v2714 = vpop.f32.mrf.mxu0
      %v2715 = vadd.f32 %v1383, %v2714
      %2716 = vmatmul.bf16.gmra.mxu0 %v2227
      %v2717 = vpop.f32.mrf.mxu0
      %v2718 = vadd.f32 %v1388, %v2717
      %v2719 = vpop.f32.mrf.mxu0
      %v2720 = vadd.f32 %v1393, %v2719
      %2721 = vmatmul.bf16.gmra.mxu0 %v2228
      %v2722 = vpop.f32.mrf.mxu0
      %v2723 = vadd.f32 %v1398, %v2722
      %v2724 = vpop.f32.mrf.mxu0
      %v2725 = vadd.f32 %v1403, %v2724
      %2726 = vmatmul.bf16.gmra.mxu0 %v2229
      %v2727 = vpop.f32.mrf.mxu0
      %v2728 = vadd.f32 %v1408, %v2727
      %v2729 = vpop.f32.mrf.mxu0
      %v2730 = vadd.f32 %v1413, %v2729
      %2731 = vmatmul.bf16.gmra.mxu0 %v2230
      %v2732 = vpop.f32.mrf.mxu0
      %v2733 = vadd.f32 %v1418, %v2732
      %v2734 = vpop.f32.mrf.mxu0
      %v2735 = vadd.f32 %v1423, %v2734
      %2736 = vmatmul.bf16.gmra.mxu0 %v2231
      %v2737 = vpop.f32.mrf.mxu0
      %v2738 = vadd.f32 %v1428, %v2737
      %v2739 = vpop.f32.mrf.mxu0
      %v2740 = vadd.f32 %v1433, %v2739
      %2741 = vmatmul.bf16.gmra.mxu0 %v2232
      %v2742 = vpop.f32.mrf.mxu0
      %v2743 = vadd.f32 %v1438, %v2742
      %v2744 = vpop.f32.mrf.mxu0
      %v2745 = vadd.f32 %v1443, %v2744
      %2746 = vmatmul.bf16.gmra.mxu0 %v2233
      %v2747 = vpop.f32.mrf.mxu0
      %v2748 = vadd.f32 %v1448, %v2747
      %v2749 = vpop.f32.mrf.mxu0
      %v2750 = vadd.f32 %v1453, %v2749
      %2751 = vmatmul.bf16.gmra.mxu0 %v2234
      %v2752 = vpop.f32.mrf.mxu0
      %v2753 = vadd.f32 %v1458, %v2752
      %v2754 = vpop.f32.mrf.mxu0
      %v2755 = vadd.f32 %v1463, %v2754
      %2756 = vmatmul.bf16.gmra.mxu0 %v2235
      %v2757 = vpop.f32.mrf.mxu0
      %v2758 = vadd.f32 %v1468, %v2757
      %v2759 = vpop.f32.mrf.mxu0
      %v2760 = vadd.f32 %v1473, %v2759
      %2761 = vmatmul.bf16.gmra.mxu0 %v2236
      %v2762 = vpop.f32.mrf.mxu0
      %v2763 = vadd.f32 %v1478, %v2762
      %v2764 = vpop.f32.mrf.mxu0
      %v2765 = vadd.f32 %v1483, %v2764
      %2766 = vmatmul.bf16.gmra.mxu0 %v2237
      %v2767 = vpop.f32.mrf.mxu0
      %v2768 = vadd.f32 %v1488, %v2767
      %v2769 = vpop.f32.mrf.mxu0
      %v2770 = vadd.f32 %v1493, %v2769
      %2771 = vmatmul.bf16.gmra.mxu0 %v2238
      %v2772 = vpop.f32.mrf.mxu0
      %v2773 = vadd.f32 %v1498, %v2772
      %v2774 = vpop.f32.mrf.mxu0
      %v2775 = vadd.f32 %v1503, %v2774
      %2776 = vmatmul.bf16.gmra.mxu0 %v2239
      %v2777 = vpop.f32.mrf.mxu0
      %v2778 = vadd.f32 %v1508, %v2777
      %v2779 = vpop.f32.mrf.mxu0
      %v2780 = vadd.f32 %v1513, %v2779
      %2781 = vmatmul.bf16.gmra.mxu0 %v2240
      %v2782 = vpop.f32.mrf.mxu0
      %v2783 = vadd.f32 %v1518, %v2782
      %v2784 = vpop.f32.mrf.mxu0
      %v2785 = vadd.f32 %v1523, %v2784
      %2786 = vmatmul.bf16.gmra.mxu0 %v2241
      %v2787 = vpop.f32.mrf.mxu0
      %v2788 = vadd.f32 %v1528, %v2787
      %v2789 = vpop.f32.mrf.mxu0
      %v2790 = vadd.f32 %v1533, %v2789
      %2791 = vmatmul.bf16.gmra.mxu0 %v2242
      %v2792 = vpop.f32.mrf.mxu0
      %v2793 = vadd.f32 %v1538, %v2792
      %v2794 = vpop.f32.mrf.mxu0
      %v2795 = vadd.f32 %v1543, %v2794
      %2796 = vmatmul.bf16.gmra.mxu0 %v2243
      %v2797 = vpop.f32.mrf.mxu0
      %v2798 = vadd.f32 %v1548, %v2797
      %v2799 = vpop.f32.mrf.mxu0
      %v2800 = vadd.f32 %v1553, %v2799
      %2801 = vmatmul.bf16.gmra.mxu0 %v2244
      %v2802 = vpop.f32.mrf.mxu0
      %v2803 = vadd.f32 %v1558, %v2802
      %v2804 = vpop.f32.mrf.mxu0
      %v2805 = vadd.f32 %v1563, %v2804
      %2806 = vmatmul.bf16.gmra.mxu0 %v2245
      %v2807 = vpop.f32.mrf.mxu0
      %v2808 = vadd.f32 %v1568, %v2807
      %v2809 = vpop.f32.mrf.mxu0
      %v2810 = vadd.f32 %v1573, %v2809
      %2811 = vmatmul.bf16.gmra.mxu0 %v2246
      %v2812 = vpop.f32.mrf.mxu0
      %v2813 = vadd.f32 %v1578, %v2812
      %v2814 = vpop.f32.mrf.mxu0
      %v2815 = vadd.f32 %v1583, %v2814
      %2816 = vmatmul.bf16.gmra.mxu0 %v2247
      %v2817 = vpop.f32.mrf.mxu0
      %v2818 = vadd.f32 %v1588, %v2817
      %v2819 = vpop.f32.mrf.mxu0
      %v2820 = vadd.f32 %v1593, %v2819
      %2821 = vmatmul.bf16.gmra.mxu0 %v2248
      %v2822 = vpop.f32.mrf.mxu0
      %v2823 = vadd.f32 %v1598, %v2822
      %v2824 = vpop.f32.mrf.mxu0
      %v2825 = vadd.f32 %v1603, %v2824
      %2826 = vmatmul.bf16.gmra.mxu0 %v2249
      %v2827 = vpop.f32.mrf.mxu0
      %v2828 = vadd.f32 %v1608, %v2827
      %v2829 = vpop.f32.mrf.mxu0
      %v2830 = vadd.f32 %v1613, %v2829
      %2831 = vmatmul.bf16.gmra.mxu0 %v2250
      %v2832 = vpop.f32.mrf.mxu0
      %v2833 = vadd.f32 %v1618, %v2832
      %v2834 = vpop.f32.mrf.mxu0
      %v2835 = vadd.f32 %v1623, %v2834
      %2836 = vmatmul.bf16.gmra.mxu0 %v2251
      %v2837 = vpop.f32.mrf.mxu0
      %v2838 = vadd.f32 %v1628, %v2837
      %v2839 = vpop.f32.mrf.mxu0
      %v2840 = vadd.f32 %v1633, %v2839
      %2841 = vmatmul.bf16.gmra.mxu0 %v2252
      %v2842 = vpop.f32.mrf.mxu0
      %v2843 = vadd.f32 %v1638, %v2842
      %v2844 = vpop.f32.mrf.mxu0
      %v2845 = vadd.f32 %v1643, %v2844
      %2846 = vmatmul.bf16.gmra.mxu0 %v2253
      %v2847 = vpop.f32.mrf.mxu0
      %v2848 = vadd.f32 %v1648, %v2847
      %v2849 = vpop.f32.mrf.mxu0
      %v2850 = vadd.f32 %v1653, %v2849
      %2851 = vmatmul.bf16.gmra.mxu0 %v2254
      %v2852 = vpop.f32.mrf.mxu0
      %v2853 = vadd.f32 %v1658, %v2852
      %v2854 = vpop.f32.mrf.mxu0
      %v2855 = vadd.f32 %v1663, %v2854
      %2856 = vmatmul.bf16.gmra.mxu0 %v2255
      %v2857 = vpop.f32.mrf.mxu0
      %v2858 = vadd.f32 %v1668, %v2857
      %v2859 = vpop.f32.mrf.mxu0
      %v2860 = vadd.f32 %v1673, %v2859
      %2861 = vmatmul.bf16.gmra.mxu0 %v2256
      %v2862 = vpop.f32.mrf.mxu0
      %v2863 = vadd.f32 %v1678, %v2862
      %v2864 = vpop.f32.mrf.mxu0
      %v2865 = vadd.f32 %v1683, %v2864
      %2866 = vmatmul.bf16.gmra.mxu0 %v2257
      %v2867 = vpop.f32.mrf.mxu0
      %v2868 = vadd.f32 %v1688, %v2867
      %v2869 = vpop.f32.mrf.mxu0
      %v2870 = vadd.f32 %v1693, %v2869
      %2871 = vmatmul.bf16.gmra.mxu0 %v2258
      %v2872 = vpop.f32.mrf.mxu0
      %v2873 = vadd.f32 %v1698, %v2872
      %v2874 = vpop.f32.mrf.mxu0
      %v2875 = vadd.f32 %v1703, %v2874
      %2876 = vmatmul.bf16.gmra.mxu0 %v2259
      %v2877 = vpop.f32.mrf.mxu0
      %v2878 = vadd.f32 %v1708, %v2877
      %v2879 = vpop.f32.mrf.mxu0
      %v2880 = vadd.f32 %v1713, %v2879
      %2881 = vmatmul.bf16.gmra.mxu0 %v2260
      %v2882 = vpop.f32.mrf.mxu0
      %v2883 = vadd.f32 %v1718, %v2882
      %v2884 = vpop.f32.mrf.mxu0
      %v2885 = vadd.f32 %v1723, %v2884
      %2886 = vmatmul.bf16.gmra.mxu0 %v2261
      %v2887 = vpop.f32.mrf.mxu0
      %v2888 = vadd.f32 %v1728, %v2887
      %v2889 = vpop.f32.mrf.mxu0
      %v2890 = vadd.f32 %v1733, %v2889
      %2891 = vmatmul.bf16.gmra.mxu0 %v2262
      %v2892 = vpop.f32.mrf.mxu0
      %v2893 = vadd.f32 %v1738, %v2892
      %v2894 = vpop.f32.mrf.mxu0
      %v2895 = vadd.f32 %v1743, %v2894
      %2896 = vmatmul.bf16.gmra.mxu0 %v2263
      %v2897 = vpop.f32.mrf.mxu0
      %v2898 = vadd.f32 %v1748, %v2897
      %v2899 = vpop.f32.mrf.mxu0
      %v2900 = vadd.f32 %v1753, %v2899
      %2901 = vmatmul.bf16.gmra.mxu0 %v2264
      %v2902 = vpop.f32.mrf.mxu0
      %v2903 = vadd.f32 %v1758, %v2902
      %v2904 = vpop.f32.mrf.mxu0
      %v2905 = vadd.f32 %v1763, %v2904
      %2906 = vmatmul.bf16.gmra.mxu0 %v2265
      %v2907 = vpop.f32.mrf.mxu0
      %v2908 = vadd.f32 %v1768, %v2907
      %v2909 = vpop.f32.mrf.mxu0
      %v2910 = vadd.f32 %v1773, %v2909
      %2911 = vmatmul.bf16.gmra.mxu0 %v2266
      %v2912 = vpop.f32.mrf.mxu0
      %v2913 = vadd.f32 %v1778, %v2912
      %v2914 = vpop.f32.mrf.mxu0
      %v2915 = vadd.f32 %v1783, %v2914
      %2916 = vmatmul.bf16.gmra.mxu0 %v2267
      %v2917 = vpop.f32.mrf.mxu0
      %v2918 = vadd.f32 %v1788, %v2917
      %v2919 = vpop.f32.mrf.mxu0
      %v2920 = vadd.f32 %v1793, %v2919
      %2921 = vmatmul.bf16.gmra.mxu0 %v2268
      %v2922 = vpop.f32.mrf.mxu0
      %v2923 = vadd.f32 %v1798, %v2922
      %v2924 = vpop.f32.mrf.mxu0
      %v2925 = vadd.f32 %v1803, %v2924
      %2926 = vmatmul.bf16.gmra.mxu0 %v2269
      %v2927 = vpop.f32.mrf.mxu0
      %v2928 = vadd.f32 %v1808, %v2927
      %v2929 = vpop.f32.mrf.mxu0
      %v2930 = vadd.f32 %v1813, %v2929
      %2931 = vmatmul.bf16.gmra.mxu0 %v2270
      %v2932 = vpop.f32.mrf.mxu0
      %v2933 = vadd.f32 %v1818, %v2932
      %v2934 = vpop.f32.mrf.mxu0
      %v2935 = vadd.f32 %v1823, %v2934
      %2936 = vmatmul.bf16.gmra.mxu0 %v2271
      %v2937 = vpop.f32.mrf.mxu0
      %v2938 = vadd.f32 %v1828, %v2937
      %v2939 = vpop.f32.mrf.mxu0
      %v2940 = vadd.f32 %v1833, %v2939
      %2941 = vmatmul.bf16.gmra.mxu0 %v2272
      %v2942 = vpop.f32.mrf.mxu0
      %v2943 = vadd.f32 %v1838, %v2942
      %v2944 = vpop.f32.mrf.mxu0
      %v2945 = vadd.f32 %v1843, %v2944
      %2946 = vmatmul.bf16.gmra.mxu0 %v2273
      %v2947 = vpop.f32.mrf.mxu0
      %v2948 = vadd.f32 %v1848, %v2947
      %v2949 = vpop.f32.mrf.mxu0
      %v2950 = vadd.f32 %v1853, %v2949
      %2951 = vmatmul.bf16.gmra.mxu0 %v2274
      %v2952 = vpop.f32.mrf.mxu0
      %v2953 = vadd.f32 %v1858, %v2952
      %v2954 = vpop.f32.mrf.mxu0
      %v2955 = vadd.f32 %v1863, %v2954
      %2956 = vmatmul.bf16.gmra.mxu0 %v2275
      %v2957 = vpop.f32.mrf.mxu0
      %v2958 = vadd.f32 %v1868, %v2957
      %v2959 = vpop.f32.mrf.mxu0
      %v2960 = vadd.f32 %v1873, %v2959
      %2961 = vmatmul.bf16.gmra.mxu0 %v2276
      %v2962 = vpop.f32.mrf.mxu0
      %v2963 = vadd.f32 %v1878, %v2962
      %v2964 = vpop.f32.mrf.mxu0
      %v2965 = vadd.f32 %v1883, %v2964
      %2966 = vmatmul.bf16.gmra.mxu0 %v2277
      %v2967 = vpop.f32.mrf.mxu0
      %v2968 = vadd.f32 %v1888, %v2967
      %v2969 = vpop.f32.mrf.mxu0
      %v2970 = vadd.f32 %v1893, %v2969
      %2971 = vmatmul.bf16.gmra.mxu0 %v2278
      %v2972 = vpop.f32.mrf.mxu0
      %v2973 = vadd.f32 %v1898, %v2972
      %v2974 = vpop.f32.mrf.mxu0
      %v2975 = vadd.f32 %v1903, %v2974
      %2976 = vmatmul.bf16.gmra.mxu0 %v2279
      %v2977 = vpop.f32.mrf.mxu0
      %v2978 = vadd.f32 %v1908, %v2977
      %v2979 = vpop.f32.mrf.mxu0
      %v2980 = vadd.f32 %v1913, %v2979
      %2981 = vmatmul.bf16.gmra.mxu0 %v2280
      %v2982 = vpop.f32.mrf.mxu0
      %v2983 = vadd.f32 %v1918, %v2982
      %v2984 = vpop.f32.mrf.mxu0
      %v2985 = vadd.f32 %v1923, %v2984
      %2986 = vmatmul.bf16.gmra.mxu0 %v2281
      %v2987 = vpop.f32.mrf.mxu0
      %v2988 = vadd.f32 %v1928, %v2987
      %v2989 = vpop.f32.mrf.mxu0
      %v2990 = vadd.f32 %v1933, %v2989
      %2991 = vmatmul.bf16.gmra.mxu0 %v2282
      %v2992 = vpop.f32.mrf.mxu0
      %v2993 = vadd.f32 %v1938, %v2992
      %v2994 = vpop.f32.mrf.mxu0
      %v2995 = vadd.f32 %v1943, %v2994
      %2996 = vmatmul.bf16.gmra.mxu0 %v2283
      %v2997 = vpop.f32.mrf.mxu0
      %v2998 = vadd.f32 %v1948, %v2997
      %v2999 = vpop.f32.mrf.mxu0
      %v3000 = vadd.f32 %v1953, %v2999
      %3001 = vmatmul.bf16.gmra.mxu0 %v2284
      %v3002 = vpop.f32.mrf.mxu0
      %v3003 = vadd.f32 %v1958, %v3002
      %v3004 = vpop.f32.mrf.mxu0
      %v3005 = vadd.f32 %v1963, %v3004
      %3006 = vdwg.mxu0
      %3007 = vmatpush.bf16.msra.mxu0 %v1196
      %3008 = vmatpush.bf16.msra.mxu0 %v1193
      %3009 = vmatpush.bf16.msra.mxu0 %v1190
      %3010 = vmatpush.bf16.msra.mxu0 %v1187
      %3011 = vmatpush.bf16.msra.mxu0 %v1184
      %3012 = vmatpush.bf16.msra.mxu0 %v1181
      %3013 = vmatpush.bf16.msra.mxu0 %v1178
      %3014 = vmatpush.bf16.msra.mxu0 %v1175
      %3015 = vmatmul.bf16.gmra.mxu0 %v2221
      %v3016 = vpop.f32.mrf.mxu0
      %v3017 = vadd.f32 %v1328, %v3016
      %v3018 = vpop.f32.mrf.mxu0
      %v3019 = vadd.f32 %v1333, %v3018
      %3020 = vmatmul.bf16.gmra.mxu0 %v2222
      %v3021 = vpop.f32.mrf.mxu0
      %v3022 = vadd.f32 %v1338, %v3021
      %v3023 = vpop.f32.mrf.mxu0
      %v3024 = vadd.f32 %v1343, %v3023
      %3025 = vmatmul.bf16.gmra.mxu0 %v2223
      %v3026 = vpop.f32.mrf.mxu0
      %v3027 = vadd.f32 %v1348, %v3026
      %v3028 = vpop.f32.mrf.mxu0
      %v3029 = vadd.f32 %v1353, %v3028
      %3030 = vmatmul.bf16.gmra.mxu0 %v2224
      %v3031 = vpop.f32.mrf.mxu0
      %v3032 = vadd.f32 %v1358, %v3031
      %v3033 = vpop.f32.mrf.mxu0
      %v3034 = vadd.f32 %v1363, %v3033
      %3035 = vmatmul.bf16.gmra.mxu0 %v2225
      %v3036 = vpop.f32.mrf.mxu0
      %v3037 = vadd.f32 %v1368, %v3036
      %v3038 = vpop.f32.mrf.mxu0
      %v3039 = vadd.f32 %v1373, %v3038
      %3040 = vmatmul.bf16.gmra.mxu0 %v2226
      %v3041 = vpop.f32.mrf.mxu0
      %v3042 = vadd.f32 %v1378, %v3041
      %v3043 = vpop.f32.mrf.mxu0
      %v3044 = vadd.f32 %v1383, %v3043
      %3045 = vmatmul.bf16.gmra.mxu0 %v2227
      %v3046 = vpop.f32.mrf.mxu0
      %v3047 = vadd.f32 %v1388, %v3046
      %v3048 = vpop.f32.mrf.mxu0
      %v3049 = vadd.f32 %v1393, %v3048
      %3050 = vmatmul.bf16.gmra.mxu0 %v2228
      %v3051 = vpop.f32.mrf.mxu0
      %v3052 = vadd.f32 %v1398, %v3051
      %v3053 = vpop.f32.mrf.mxu0
      %v3054 = vadd.f32 %v1403, %v3053
      %3055 = vmatmul.bf16.gmra.mxu0 %v2229
      %v3056 = vpop.f32.mrf.mxu0
      %v3057 = vadd.f32 %v1408, %v3056
      %v3058 = vpop.f32.mrf.mxu0
      %v3059 = vadd.f32 %v1413, %v3058
      %3060 = vmatmul.bf16.gmra.mxu0 %v2230
      %v3061 = vpop.f32.mrf.mxu0
      %v3062 = vadd.f32 %v1418, %v3061
      %v3063 = vpop.f32.mrf.mxu0
      %v3064 = vadd.f32 %v1423, %v3063
      %3065 = vmatmul.bf16.gmra.mxu0 %v2231
      %v3066 = vpop.f32.mrf.mxu0
      %v3067 = vadd.f32 %v1428, %v3066
      %v3068 = vpop.f32.mrf.mxu0
      %v3069 = vadd.f32 %v1433, %v3068
      %3070 = vmatmul.bf16.gmra.mxu0 %v2232
      %v3071 = vpop.f32.mrf.mxu0
      %v3072 = vadd.f32 %v1438, %v3071
      %v3073 = vpop.f32.mrf.mxu0
      %v3074 = vadd.f32 %v1443, %v3073
      %3075 = vmatmul.bf16.gmra.mxu0 %v2233
      %v3076 = vpop.f32.mrf.mxu0
      %v3077 = vadd.f32 %v1448, %v3076
      %v3078 = vpop.f32.mrf.mxu0
      %v3079 = vadd.f32 %v1453, %v3078
      %3080 = vmatmul.bf16.gmra.mxu0 %v2234
      %v3081 = vpop.f32.mrf.mxu0
      %v3082 = vadd.f32 %v1458, %v3081
      %v3083 = vpop.f32.mrf.mxu0
      %v3084 = vadd.f32 %v1463, %v3083
      %3085 = vmatmul.bf16.gmra.mxu0 %v2235
      %v3086 = vpop.f32.mrf.mxu0
      %v3087 = vadd.f32 %v1468, %v3086
      %v3088 = vpop.f32.mrf.mxu0
      %v3089 = vadd.f32 %v1473, %v3088
      %3090 = vmatmul.bf16.gmra.mxu0 %v2236
      %v3091 = vpop.f32.mrf.mxu0
      %v3092 = vadd.f32 %v1478, %v3091
      %v3093 = vpop.f32.mrf.mxu0
      %v3094 = vadd.f32 %v1483, %v3093
      %3095 = vmatmul.bf16.gmra.mxu0 %v2237
      %v3096 = vpop.f32.mrf.mxu0
      %v3097 = vadd.f32 %v1488, %v3096
      %v3098 = vpop.f32.mrf.mxu0
      %v3099 = vadd.f32 %v1493, %v3098
      %3100 = vmatmul.bf16.gmra.mxu0 %v2238
      %v3101 = vpop.f32.mrf.mxu0
      %v3102 = vadd.f32 %v1498, %v3101
      %v3103 = vpop.f32.mrf.mxu0
      %v3104 = vadd.f32 %v1503, %v3103
      %3105 = vmatmul.bf16.gmra.mxu0 %v2239
      %v3106 = vpop.f32.mrf.mxu0
      %v3107 = vadd.f32 %v1508, %v3106
      %v3108 = vpop.f32.mrf.mxu0
      %v3109 = vadd.f32 %v1513, %v3108
      %3110 = vmatmul.bf16.gmra.mxu0 %v2240
      %v3111 = vpop.f32.mrf.mxu0
      %v3112 = vadd.f32 %v1518, %v3111
      %v3113 = vpop.f32.mrf.mxu0
      %v3114 = vadd.f32 %v1523, %v3113
      %3115 = vmatmul.bf16.gmra.mxu0 %v2241
      %v3116 = vpop.f32.mrf.mxu0
      %v3117 = vadd.f32 %v1528, %v3116
      %v3118 = vpop.f32.mrf.mxu0
      %v3119 = vadd.f32 %v1533, %v3118
      %3120 = vmatmul.bf16.gmra.mxu0 %v2242
      %v3121 = vpop.f32.mrf.mxu0
      %v3122 = vadd.f32 %v1538, %v3121
      %v3123 = vpop.f32.mrf.mxu0
      %v3124 = vadd.f32 %v1543, %v3123
      %3125 = vmatmul.bf16.gmra.mxu0 %v2243
      %v3126 = vpop.f32.mrf.mxu0
      %v3127 = vadd.f32 %v1548, %v3126
      %v3128 = vpop.f32.mrf.mxu0
      %v3129 = vadd.f32 %v1553, %v3128
      %3130 = vmatmul.bf16.gmra.mxu0 %v2244
      %v3131 = vpop.f32.mrf.mxu0
      %v3132 = vadd.f32 %v1558, %v3131
      %v3133 = vpop.f32.mrf.mxu0
      %v3134 = vadd.f32 %v1563, %v3133
      %3135 = vmatmul.bf16.gmra.mxu0 %v2245
      %v3136 = vpop.f32.mrf.mxu0
      %v3137 = vadd.f32 %v1568, %v3136
      %v3138 = vpop.f32.mrf.mxu0
      %v3139 = vadd.f32 %v1573, %v3138
      %3140 = vmatmul.bf16.gmra.mxu0 %v2246
      %v3141 = vpop.f32.mrf.mxu0
      %v3142 = vadd.f32 %v1578, %v3141
      %v3143 = vpop.f32.mrf.mxu0
      %v3144 = vadd.f32 %v1583, %v3143
      %3145 = vmatmul.bf16.gmra.mxu0 %v2247
      %v3146 = vpop.f32.mrf.mxu0
      %v3147 = vadd.f32 %v1588, %v3146
      %v3148 = vpop.f32.mrf.mxu0
      %v3149 = vadd.f32 %v1593, %v3148
      %3150 = vmatmul.bf16.gmra.mxu0 %v2248
      %v3151 = vpop.f32.mrf.mxu0
      %v3152 = vadd.f32 %v1598, %v3151
      %v3153 = vpop.f32.mrf.mxu0
      %v3154 = vadd.f32 %v1603, %v3153
      %3155 = vmatmul.bf16.gmra.mxu0 %v2249
      %v3156 = vpop.f32.mrf.mxu0
      %v3157 = vadd.f32 %v1608, %v3156
      %v3158 = vpop.f32.mrf.mxu0
      %v3159 = vadd.f32 %v1613, %v3158
      %3160 = vmatmul.bf16.gmra.mxu0 %v2250
      %v3161 = vpop.f32.mrf.mxu0
      %v3162 = vadd.f32 %v1618, %v3161
      %v3163 = vpop.f32.mrf.mxu0
      %v3164 = vadd.f32 %v1623, %v3163
      %3165 = vmatmul.bf16.gmra.mxu0 %v2251
      %v3166 = vpop.f32.mrf.mxu0
      %v3167 = vadd.f32 %v1628, %v3166
      %v3168 = vpop.f32.mrf.mxu0
      %v3169 = vadd.f32 %v1633, %v3168
      %3170 = vmatmul.bf16.gmra.mxu0 %v2252
      %v3171 = vpop.f32.mrf.mxu0
      %v3172 = vadd.f32 %v1638, %v3171
      %v3173 = vpop.f32.mrf.mxu0
      %v3174 = vadd.f32 %v1643, %v3173
      %3175 = vmatmul.bf16.gmra.mxu0 %v2253
      %v3176 = vpop.f32.mrf.mxu0
      %v3177 = vadd.f32 %v1648, %v3176
      %v3178 = vpop.f32.mrf.mxu0
      %v3179 = vadd.f32 %v1653, %v3178
      %3180 = vmatmul.bf16.gmra.mxu0 %v2254
      %v3181 = vpop.f32.mrf.mxu0
      %v3182 = vadd.f32 %v1658, %v3181
      %v3183 = vpop.f32.mrf.mxu0
      %v3184 = vadd.f32 %v1663, %v3183
      %3185 = vmatmul.bf16.gmra.mxu0 %v2255
      %v3186 = vpop.f32.mrf.mxu0
      %v3187 = vadd.f32 %v1668, %v3186
      %v3188 = vpop.f32.mrf.mxu0
      %v3189 = vadd.f32 %v1673, %v3188
      %3190 = vmatmul.bf16.gmra.mxu0 %v2256
      %v3191 = vpop.f32.mrf.mxu0
      %v3192 = vadd.f32 %v1678, %v3191
      %v3193 = vpop.f32.mrf.mxu0
      %v3194 = vadd.f32 %v1683, %v3193
      %3195 = vmatmul.bf16.gmra.mxu0 %v2257
      %v3196 = vpop.f32.mrf.mxu0
      %v3197 = vadd.f32 %v1688, %v3196
      %v3198 = vpop.f32.mrf.mxu0
      %v3199 = vadd.f32 %v1693, %v3198
      %3200 = vmatmul.bf16.gmra.mxu0 %v2258
      %v3201 = vpop.f32.mrf.mxu0
      %v3202 = vadd.f32 %v1698, %v3201
      %v3203 = vpop.f32.mrf.mxu0
      %v3204 = vadd.f32 %v1703, %v3203
      %3205 = vmatmul.bf16.gmra.mxu0 %v2259
      %v3206 = vpop.f32.mrf.mxu0
      %v3207 = vadd.f32 %v1708, %v3206
      %v3208 = vpop.f32.mrf.mxu0
      %v3209 = vadd.f32 %v1713, %v3208
      %3210 = vmatmul.bf16.gmra.mxu0 %v2260
      %v3211 = vpop.f32.mrf.mxu0
      %v3212 = vadd.f32 %v1718, %v3211
      %v3213 = vpop.f32.mrf.mxu0
      %v3214 = vadd.f32 %v1723, %v3213
      %3215 = vmatmul.bf16.gmra.mxu0 %v2261
      %v3216 = vpop.f32.mrf.mxu0
      %v3217 = vadd.f32 %v1728, %v3216
      %v3218 = vpop.f32.mrf.mxu0
      %v3219 = vadd.f32 %v1733, %v3218
      %3220 = vmatmul.bf16.gmra.mxu0 %v2262
      %v3221 = vpop.f32.mrf.mxu0
      %v3222 = vadd.f32 %v1738, %v3221
      %v3223 = vpop.f32.mrf.mxu0
      %v3224 = vadd.f32 %v1743, %v3223
      %3225 = vmatmul.bf16.gmra.mxu0 %v2263
      %v3226 = vpop.f32.mrf.mxu0
      %v3227 = vadd.f32 %v1748, %v3226
      %v3228 = vpop.f32.mrf.mxu0
      %v3229 = vadd.f32 %v1753, %v3228
      %3230 = vmatmul.bf16.gmra.mxu0 %v2264
      %v3231 = vpop.f32.mrf.mxu0
      %v3232 = vadd.f32 %v1758, %v3231
      %v3233 = vpop.f32.mrf.mxu0
      %v3234 = vadd.f32 %v1763, %v3233
      %3235 = vmatmul.bf16.gmra.mxu0 %v2265
      %v3236 = vpop.f32.mrf.mxu0
      %v3237 = vadd.f32 %v1768, %v3236
      %v3238 = vpop.f32.mrf.mxu0
      %v3239 = vadd.f32 %v1773, %v3238
      %3240 = vmatmul.bf16.gmra.mxu0 %v2266
      %v3241 = vpop.f32.mrf.mxu0
      %v3242 = vadd.f32 %v1778, %v3241
      %v3243 = vpop.f32.mrf.mxu0
      %v3244 = vadd.f32 %v1783, %v3243
      %3245 = vmatmul.bf16.gmra.mxu0 %v2267
      %v3246 = vpop.f32.mrf.mxu0
      %v3247 = vadd.f32 %v1788, %v3246
      %v3248 = vpop.f32.mrf.mxu0
      %v3249 = vadd.f32 %v1793, %v3248
      %3250 = vmatmul.bf16.gmra.mxu0 %v2268
      %v3251 = vpop.f32.mrf.mxu0
      %v3252 = vadd.f32 %v1798, %v3251
      %v3253 = vpop.f32.mrf.mxu0
      %v3254 = vadd.f32 %v1803, %v3253
      %3255 = vmatmul.bf16.gmra.mxu0 %v2269
      %v3256 = vpop.f32.mrf.mxu0
      %v3257 = vadd.f32 %v1808, %v3256
      %v3258 = vpop.f32.mrf.mxu0
      %v3259 = vadd.f32 %v1813, %v3258
      %3260 = vmatmul.bf16.gmra.mxu0 %v2270
      %v3261 = vpop.f32.mrf.mxu0
      %v3262 = vadd.f32 %v1818, %v3261
      %v3263 = vpop.f32.mrf.mxu0
      %v3264 = vadd.f32 %v1823, %v3263
      %3265 = vmatmul.bf16.gmra.mxu0 %v2271
      %v3266 = vpop.f32.mrf.mxu0
      %v3267 = vadd.f32 %v1828, %v3266
      %v3268 = vpop.f32.mrf.mxu0
      %v3269 = vadd.f32 %v1833, %v3268
      %3270 = vmatmul.bf16.gmra.mxu0 %v2272
      %v3271 = vpop.f32.mrf.mxu0
      %v3272 = vadd.f32 %v1838, %v3271
      %v3273 = vpop.f32.mrf.mxu0
      %v3274 = vadd.f32 %v1843, %v3273
      %3275 = vmatmul.bf16.gmra.mxu0 %v2273
      %v3276 = vpop.f32.mrf.mxu0
      %v3277 = vadd.f32 %v1848, %v3276
      %v3278 = vpop.f32.mrf.mxu0
      %v3279 = vadd.f32 %v1853, %v3278
      %3280 = vmatmul.bf16.gmra.mxu0 %v2274
      %v3281 = vpop.f32.mrf.mxu0
      %v3282 = vadd.f32 %v1858, %v3281
      %v3283 = vpop.f32.mrf.mxu0
      %v3284 = vadd.f32 %v1863, %v3283
      %3285 = vmatmul.bf16.gmra.mxu0 %v2275
      %v3286 = vpop.f32.mrf.mxu0
      %v3287 = vadd.f32 %v1868, %v3286
      %v3288 = vpop.f32.mrf.mxu0
      %v3289 = vadd.f32 %v1873, %v3288
      %3290 = vmatmul.bf16.gmra.mxu0 %v2276
      %v3291 = vpop.f32.mrf.mxu0
      %v3292 = vadd.f32 %v1878, %v3291
      %v3293 = vpop.f32.mrf.mxu0
      %v3294 = vadd.f32 %v1883, %v3293
      %3295 = vmatmul.bf16.gmra.mxu0 %v2277
      %v3296 = vpop.f32.mrf.mxu0
      %v3297 = vadd.f32 %v1888, %v3296
      %v3298 = vpop.f32.mrf.mxu0
      %v3299 = vadd.f32 %v1893, %v3298
      %3300 = vmatmul.bf16.gmra.mxu0 %v2278
      %v3301 = vpop.f32.mrf.mxu0
      %v3302 = vadd.f32 %v1898, %v3301
      %v3303 = vpop.f32.mrf.mxu0
      %v3304 = vadd.f32 %v1903, %v3303
      %3305 = vmatmul.bf16.gmra.mxu0 %v2279
      %v3306 = vpop.f32.mrf.mxu0
      %v3307 = vadd.f32 %v1908, %v3306
      %v3308 = vpop.f32.mrf.mxu0
      %v3309 = vadd.f32 %v1913, %v3308
      %3310 = vmatmul.bf16.gmra.mxu0 %v2280
      %v3311 = vpop.f32.mrf.mxu0
      %v3312 = vadd.f32 %v1918, %v3311
      %v3313 = vpop.f32.mrf.mxu0
      %v3314 = vadd.f32 %v1923, %v3313
      %3315 = vmatmul.bf16.gmra.mxu0 %v2281
      %v3316 = vpop.f32.mrf.mxu0
      %v3317 = vadd.f32 %v1928, %v3316
      %v3318 = vpop.f32.mrf.mxu0
      %v3319 = vadd.f32 %v1933, %v3318
      %3320 = vmatmul.bf16.gmra.mxu0 %v2282
      %v3321 = vpop.f32.mrf.mxu0
      %v3322 = vadd.f32 %v1938, %v3321
      %v3323 = vpop.f32.mrf.mxu0
      %v3324 = vadd.f32 %v1943, %v3323
      %3325 = vmatmul.bf16.gmra.mxu0 %v2283
      %v3326 = vpop.f32.mrf.mxu0
      %v3327 = vadd.f32 %v1948, %v3326
      %v3328 = vpop.f32.mrf.mxu0
      %v3329 = vadd.f32 %v1953, %v3328
      %3330 = vmatmul.bf16.gmra.mxu0 %v2284
      %v3331 = vpop.f32.mrf.mxu0
      %v3332 = vadd.f32 %v1958, %v3331
      %v3333 = vpop.f32.mrf.mxu0
      %v3334 = vadd.f32 %v1963, %v3333
      %3335 = vdwg.mxu0
      %v3336 = vld [vmem:[#allocation2] sm:$0xff]
      %v3337 = vld [vmem:[#allocation2 + $0x8] sm:$0xff]
      %v3338 = vld [vmem:[#allocation2 + $0x10] sm:$0xff]
      %v3339 = vld [vmem:[#allocation2 + $0x18] sm:$0xff]
      %v3340 = vld [vmem:[#allocation2 + $0x20] sm:$0xff]
      %v3341 = vld [vmem:[#allocation2 + $0x28] sm:$0xff]
      %v3342 = vld [vmem:[#allocation2 + $0x30] sm:$0xff]
      %v3343 = vld [vmem:[#allocation2 + $0x38] sm:$0xff]
      %v3344 = vld [vmem:[#allocation2 + $0x40] sm:$0xff]
      %v3345 = vld [vmem:[#allocation2 + $0x48] sm:$0xff]
      %v3346 = vld [vmem:[#allocation2 + $0x50] sm:$0xff]
      %v3347 = vld [vmem:[#allocation2 + $0x58] sm:$0xff]
      %v3348 = vld [vmem:[#allocation2 + $0x60] sm:$0xff]
      %v3349 = vld [vmem:[#allocation2 + $0x68] sm:$0xff]
      %v3350 = vld [vmem:[#allocation2 + $0x70] sm:$0xff]
      %v3351 = vld [vmem:[#allocation2 + $0x78] sm:$0xff]
      %v3352 = vld [vmem:[#allocation2 + $0x80] sm:$0xff]
      %v3353 = vld [vmem:[#allocation2 + $0x88] sm:$0xff]
      %v3354 = vld [vmem:[#allocation2 + $0x90] sm:$0xff]
      %v3355 = vld [vmem:[#allocation2 + $0x98] sm:$0xff]
      %v3356 = vld [vmem:[#allocation2 + $0xa0] sm:$0xff]
      %v3357 = vld [vmem:[#allocation2 + $0xa8] sm:$0xff]
      %v3358 = vld [vmem:[#allocation2 + $0xb0] sm:$0xff]
      %v3359 = vld [vmem:[#allocation2 + $0xb8] sm:$0xff]
      %v3360 = vld [vmem:[#allocation2 + $0xc0] sm:$0xff]
      %v3361 = vld [vmem:[#allocation2 + $0xc8] sm:$0xff]
      %v3362 = vld [vmem:[#allocation2 + $0xd0] sm:$0xff]
      %v3363 = vld [vmem:[#allocation2 + $0xd8] sm:$0xff]
      %v3364 = vld [vmem:[#allocation2 + $0xe0] sm:$0xff]
      %v3365 = vld [vmem:[#allocation2 + $0xe8] sm:$0xff]
      %v3366 = vld [vmem:[#allocation2 + $0xf0] sm:$0xff]
      %v3367 = vld [vmem:[#allocation2 + $0xf8] sm:$0xff]
      %v3368 = vld [vmem:[#allocation2 + $0x100] sm:$0xff]
      %v3369 = vld [vmem:[#allocation2 + $0x108] sm:$0xff]
      %v3370 = vld [vmem:[#allocation2 + $0x110] sm:$0xff]
      %v3371 = vld [vmem:[#allocation2 + $0x118] sm:$0xff]
      %v3372 = vld [vmem:[#allocation2 + $0x120] sm:$0xff]
      %v3373 = vld [vmem:[#allocation2 + $0x128] sm:$0xff]
      %v3374 = vld [vmem:[#allocation2 + $0x130] sm:$0xff]
      %v3375 = vld [vmem:[#allocation2 + $0x138] sm:$0xff]
      %v3376 = vld [vmem:[#allocation2 + $0x140] sm:$0xff]
      %v3377 = vld [vmem:[#allocation2 + $0x148] sm:$0xff]
      %v3378 = vld [vmem:[#allocation2 + $0x150] sm:$0xff]
      %v3379 = vld [vmem:[#allocation2 + $0x158] sm:$0xff]
      %v3380 = vld [vmem:[#allocation2 + $0x160] sm:$0xff]
      %v3381 = vld [vmem:[#allocation2 + $0x168] sm:$0xff]
      %v3382 = vld [vmem:[#allocation2 + $0x170] sm:$0xff]
      %v3383 = vld [vmem:[#allocation2 + $0x178] sm:$0xff]
      %v3384 = vld [vmem:[#allocation2 + $0x180] sm:$0xff]
      %v3385 = vld [vmem:[#allocation2 + $0x188] sm:$0xff]
      %v3386 = vld [vmem:[#allocation2 + $0x190] sm:$0xff]
      %v3387 = vld [vmem:[#allocation2 + $0x198] sm:$0xff]
      %v3388 = vld [vmem:[#allocation2 + $0x1a0] sm:$0xff]
      %v3389 = vld [vmem:[#allocation2 + $0x1a8] sm:$0xff]
      %v3390 = vld [vmem:[#allocation2 + $0x1b0] sm:$0xff]
      %v3391 = vld [vmem:[#allocation2 + $0x1b8] sm:$0xff]
      %v3392 = vld [vmem:[#allocation2 + $0x1c0] sm:$0xff]
      %v3393 = vld [vmem:[#allocation2 + $0x1c8] sm:$0xff]
      %v3394 = vld [vmem:[#allocation2 + $0x1d0] sm:$0xff]
      %v3395 = vld [vmem:[#allocation2 + $0x1d8] sm:$0xff]
      %v3396 = vld [vmem:[#allocation2 + $0x1e0] sm:$0xff]
      %v3397 = vld [vmem:[#allocation2 + $0x1e8] sm:$0xff]
      %v3398 = vld [vmem:[#allocation2 + $0x1f0] sm:$0xff]
      %v3399 = vld [vmem:[#allocation2 + $0x1f8] sm:$0xff]
      %v3400 = vld [vmem:[#allocation2 + $0x200] sm:$0xff]
      %v3401 = vld [vmem:[#allocation2 + $0x208] sm:$0xff]
      %v3402 = vld [vmem:[#allocation2 + $0x210] sm:$0xff]
      %v3403 = vld [vmem:[#allocation2 + $0x218] sm:$0xff]
      %v3404 = vld [vmem:[#allocation2 + $0x220] sm:$0xff]
      %v3405 = vld [vmem:[#allocation2 + $0x228] sm:$0xff]
      %v3406 = vld [vmem:[#allocation2 + $0x230] sm:$0xff]
      %v3407 = vld [vmem:[#allocation2 + $0x238] sm:$0xff]
      %v3408 = vld [vmem:[#allocation2 + $0x240] sm:$0xff]
      %v3409 = vld [vmem:[#allocation2 + $0x248] sm:$0xff]
      %v3410 = vld [vmem:[#allocation2 + $0x250] sm:$0xff]
      %v3411 = vld [vmem:[#allocation2 + $0x258] sm:$0xff]
      %v3412 = vld [vmem:[#allocation2 + $0x260] sm:$0xff]
      %v3413 = vld [vmem:[#allocation2 + $0x268] sm:$0xff]
      %v3414 = vld [vmem:[#allocation2 + $0x270] sm:$0xff]
      %v3415 = vld [vmem:[#allocation2 + $0x278] sm:$0xff]
      %v3416 = vld [vmem:[#allocation2 + $0x280] sm:$0xff]
      %v3417 = vld [vmem:[#allocation2 + $0x288] sm:$0xff]
      %v3418 = vld [vmem:[#allocation2 + $0x290] sm:$0xff]
      %v3419 = vld [vmem:[#allocation2 + $0x298] sm:$0xff]
      %v3420 = vld [vmem:[#allocation2 + $0x2a0] sm:$0xff]
      %v3421 = vld [vmem:[#allocation2 + $0x2a8] sm:$0xff]
      %v3422 = vld [vmem:[#allocation2 + $0x2b0] sm:$0xff]
      %v3423 = vld [vmem:[#allocation2 + $0x2b8] sm:$0xff]
      %v3424 = vld [vmem:[#allocation2 + $0x2c0] sm:$0xff]
      %v3425 = vld [vmem:[#allocation2 + $0x2c8] sm:$0xff]
      %v3426 = vld [vmem:[#allocation2 + $0x2d0] sm:$0xff]
      %v3427 = vld [vmem:[#allocation2 + $0x2d8] sm:$0xff]
      %v3428 = vld [vmem:[#allocation2 + $0x2e0] sm:$0xff]
      %v3429 = vld [vmem:[#allocation2 + $0x2e8] sm:$0xff]
      %v3430 = vld [vmem:[#allocation2 + $0x2f0] sm:$0xff]
      %v3431 = vld [vmem:[#allocation2 + $0x2f8] sm:$0xff]
      %v3432 = vld [vmem:[#allocation2 + $0x300] sm:$0xff]
      %v3433 = vld [vmem:[#allocation2 + $0x308] sm:$0xff]
      %v3434 = vld [vmem:[#allocation2 + $0x310] sm:$0xff]
      %v3435 = vld [vmem:[#allocation2 + $0x318] sm:$0xff]
      %v3436 = vld [vmem:[#allocation2 + $0x320] sm:$0xff]
      %v3437 = vld [vmem:[#allocation2 + $0x328] sm:$0xff]
      %v3438 = vld [vmem:[#allocation2 + $0x330] sm:$0xff]
      %v3439 = vld [vmem:[#allocation2 + $0x338] sm:$0xff]
      %v3440 = vld [vmem:[#allocation2 + $0x340] sm:$0xff]
      %v3441 = vld [vmem:[#allocation2 + $0x348] sm:$0xff]
      %v3442 = vld [vmem:[#allocation2 + $0x350] sm:$0xff]
      %v3443 = vld [vmem:[#allocation2 + $0x358] sm:$0xff]
      %v3444 = vld [vmem:[#allocation2 + $0x360] sm:$0xff]
      %v3445 = vld [vmem:[#allocation2 + $0x368] sm:$0xff]
      %v3446 = vld [vmem:[#allocation2 + $0x370] sm:$0xff]
      %v3447 = vld [vmem:[#allocation2 + $0x378] sm:$0xff]
      %v3448 = vld [vmem:[#allocation2 + $0x380] sm:$0xff]
      %v3449 = vld [vmem:[#allocation2 + $0x388] sm:$0xff]
      %v3450 = vld [vmem:[#allocation2 + $0x390] sm:$0xff]
      %v3451 = vld [vmem:[#allocation2 + $0x398] sm:$0xff]
      %v3452 = vld [vmem:[#allocation2 + $0x3a0] sm:$0xff]
      %v3453 = vld [vmem:[#allocation2 + $0x3a8] sm:$0xff]
      %v3454 = vld [vmem:[#allocation2 + $0x3b0] sm:$0xff]
      %v3455 = vld [vmem:[#allocation2 + $0x3b8] sm:$0xff]
      %v3456 = vld [vmem:[#allocation2 + $0x3c0] sm:$0xff]
      %v3457 = vld [vmem:[#allocation2 + $0x3c8] sm:$0xff]
      %v3458 = vld [vmem:[#allocation2 + $0x3d0] sm:$0xff]
      %v3459 = vld [vmem:[#allocation2 + $0x3d8] sm:$0xff]
      %v3460 = vld [vmem:[#allocation2 + $0x3e0] sm:$0xff]
      %v3461 = vld [vmem:[#allocation2 + $0x3e8] sm:$0xff]
      %v3462 = vld [vmem:[#allocation2 + $0x3f0] sm:$0xff]
      %v3463 = vld [vmem:[#allocation2 + $0x3f8] sm:$0xff]
      %v3464 = vmax.f32 %v2359, %v2688
      %v3465 = vmax.f32 %v3464, %v3017
      %3466 = vmax.xlane.f32.xlu0 %v3465
      %v3467 = vpop.xlane.xlu0 %3466
      %v3468 = vmax.f32 %v2361, %v2690
      %v3469 = vmax.f32 %v3468, %v3019
      %3470 = vmax.xlane.f32.xlu0 %v3469
      %v3471 = vpop.xlane.xlu0 %3470
      %v3472 = vmax.f32 %v2364, %v2693
      %v3473 = vmax.f32 %v3472, %v3022
      %3474 = vmax.xlane.f32.xlu0 %v3473
      %v3475 = vpop.xlane.xlu0 %3474
      %v3476 = vmax.f32 %v2366, %v2695
      %v3477 = vmax.f32 %v3476, %v3024
      %3478 = vmax.xlane.f32.xlu0 %v3477
      %v3479 = vpop.xlane.xlu0 %3478
      %v3480 = vmax.f32 %v2369, %v2698
      %v3481 = vmax.f32 %v3480, %v3027
      %3482 = vmax.xlane.f32.xlu0 %v3481
      %v3483 = vpop.xlane.xlu0 %3482
      %v3484 = vmax.f32 %v2371, %v2700
      %v3485 = vmax.f32 %v3484, %v3029
      %3486 = vmax.xlane.f32.xlu0 %v3485
      %v3487 = vpop.xlane.xlu0 %3486
      %v3488 = vmax.f32 %v2374, %v2703
      %v3489 = vmax.f32 %v3488, %v3032
      %3490 = vmax.xlane.f32.xlu0 %v3489
      %v3491 = vpop.xlane.xlu0 %3490
      %v3492 = vmax.f32 %v2376, %v2705
      %v3493 = vmax.f32 %v3492, %v3034
      %3494 = vmax.xlane.f32.xlu0 %v3493
      %v3495 = vpop.xlane.xlu0 %3494
      %v3496 = vmax.f32 %v2379, %v2708
      %v3497 = vmax.f32 %v3496, %v3037
      %3498 = vmax.xlane.f32.xlu0 %v3497
      %v3499 = vpop.xlane.xlu0 %3498
      %v3500 = vmax.f32 %v2381, %v2710
      %v3501 = vmax.f32 %v3500, %v3039
      %3502 = vmax.xlane.f32.xlu0 %v3501
      %v3503 = vpop.xlane.xlu0 %3502
      %v3504 = vmax.f32 %v2384, %v2713
      %v3505 = vmax.f32 %v3504, %v3042
      %3506 = vmax.xlane.f32.xlu0 %v3505
      %v3507 = vpop.xlane.xlu0 %3506
      %v3508 = vmax.f32 %v2386, %v2715
      %v3509 = vmax.f32 %v3508, %v3044
      %3510 = vmax.xlane.f32.xlu0 %v3509
      %v3511 = vpop.xlane.xlu0 %3510
      %v3512 = vmax.f32 %v2389, %v2718
      %v3513 = vmax.f32 %v3512, %v3047
      %3514 = vmax.xlane.f32.xlu0 %v3513
      %v3515 = vpop.xlane.xlu0 %3514
      %v3516 = vmax.f32 %v2391, %v2720
      %v3517 = vmax.f32 %v3516, %v3049
      %3518 = vmax.xlane.f32.xlu0 %v3517
      %v3519 = vpop.xlane.xlu0 %3518
      %v3520 = vmax.f32 %v2394, %v2723
      %v3521 = vmax.f32 %v3520, %v3052
      %3522 = vmax.xlane.f32.xlu0 %v3521
      %v3523 = vpop.xlane.xlu0 %3522
      %v3524 = vmax.f32 %v2396, %v2725
      %v3525 = vmax.f32 %v3524, %v3054
      %3526 = vmax.xlane.f32.xlu0 %v3525
      %v3527 = vpop.xlane.xlu0 %3526
      %v3528 = vmax.f32 %v2399, %v2728
      %v3529 = vmax.f32 %v3528, %v3057
      %3530 = vmax.xlane.f32.xlu0 %v3529
      %v3531 = vpop.xlane.xlu0 %3530
      %v3532 = vmax.f32 %v2401, %v2730
      %v3533 = vmax.f32 %v3532, %v3059
      %3534 = vmax.xlane.f32.xlu0 %v3533
      %v3535 = vpop.xlane.xlu0 %3534
      %v3536 = vmax.f32 %v2404, %v2733
      %v3537 = vmax.f32 %v3536, %v3062
      %3538 = vmax.xlane.f32.xlu0 %v3537
      %v3539 = vpop.xlane.xlu0 %3538
      %v3540 = vmax.f32 %v2406, %v2735
      %v3541 = vmax.f32 %v3540, %v3064
      %3542 = vmax.xlane.f32.xlu0 %v3541
      %v3543 = vpop.xlane.xlu0 %3542
      %v3544 = vmax.f32 %v2409, %v2738
      %v3545 = vmax.f32 %v3544, %v3067
      %3546 = vmax.xlane.f32.xlu0 %v3545
      %v3547 = vpop.xlane.xlu0 %3546
      %v3548 = vmax.f32 %v2411, %v2740
      %v3549 = vmax.f32 %v3548, %v3069
      %3550 = vmax.xlane.f32.xlu0 %v3549
      %v3551 = vpop.xlane.xlu0 %3550
      %v3552 = vmax.f32 %v2414, %v2743
      %v3553 = vmax.f32 %v3552, %v3072
      %3554 = vmax.xlane.f32.xlu0 %v3553
      %v3555 = vpop.xlane.xlu0 %3554
      %v3556 = vmax.f32 %v2416, %v2745
      %v3557 = vmax.f32 %v3556, %v3074
      %3558 = vmax.xlane.f32.xlu0 %v3557
      %v3559 = vpop.xlane.xlu0 %3558
      %v3560 = vmax.f32 %v2419, %v2748
      %v3561 = vmax.f32 %v3560, %v3077
      %3562 = vmax.xlane.f32.xlu0 %v3561
      %v3563 = vpop.xlane.xlu0 %3562
      %v3564 = vmax.f32 %v2421, %v2750
      %v3565 = vmax.f32 %v3564, %v3079
      %3566 = vmax.xlane.f32.xlu0 %v3565
      %v3567 = vpop.xlane.xlu0 %3566
      %v3568 = vmax.f32 %v2424, %v2753
      %v3569 = vmax.f32 %v3568, %v3082
      %3570 = vmax.xlane.f32.xlu0 %v3569
      %v3571 = vpop.xlane.xlu0 %3570
      %v3572 = vmax.f32 %v2426, %v2755
      %v3573 = vmax.f32 %v3572, %v3084
      %3574 = vmax.xlane.f32.xlu0 %v3573
      %v3575 = vpop.xlane.xlu0 %3574
      %v3576 = vmax.f32 %v2429, %v2758
      %v3577 = vmax.f32 %v3576, %v3087
      %3578 = vmax.xlane.f32.xlu0 %v3577
      %v3579 = vpop.xlane.xlu0 %3578
      %v3580 = vmax.f32 %v2431, %v2760
      %v3581 = vmax.f32 %v3580, %v3089
      %3582 = vmax.xlane.f32.xlu0 %v3581
      %v3583 = vpop.xlane.xlu0 %3582
      %v3584 = vmax.f32 %v2434, %v2763
      %v3585 = vmax.f32 %v3584, %v3092
      %3586 = vmax.xlane.f32.xlu0 %v3585
      %v3587 = vpop.xlane.xlu0 %3586
      %v3588 = vmax.f32 %v2436, %v2765
      %v3589 = vmax.f32 %v3588, %v3094
      %3590 = vmax.xlane.f32.xlu0 %v3589
      %v3591 = vpop.xlane.xlu0 %3590
      %v3592 = vmax.f32 %v2439, %v2768
      %v3593 = vmax.f32 %v3592, %v3097
      %3594 = vmax.xlane.f32.xlu0 %v3593
      %v3595 = vpop.xlane.xlu0 %3594
      %v3596 = vmax.f32 %v2441, %v2770
      %v3597 = vmax.f32 %v3596, %v3099
      %3598 = vmax.xlane.f32.xlu0 %v3597
      %v3599 = vpop.xlane.xlu0 %3598
      %v3600 = vmax.f32 %v2444, %v2773
      %v3601 = vmax.f32 %v3600, %v3102
      %3602 = vmax.xlane.f32.xlu0 %v3601
      %v3603 = vpop.xlane.xlu0 %3602
      %v3604 = vmax.f32 %v2446, %v2775
      %v3605 = vmax.f32 %v3604, %v3104
      %3606 = vmax.xlane.f32.xlu0 %v3605
      %v3607 = vpop.xlane.xlu0 %3606
      %v3608 = vmax.f32 %v2449, %v2778
      %v3609 = vmax.f32 %v3608, %v3107
      %3610 = vmax.xlane.f32.xlu0 %v3609
      %v3611 = vpop.xlane.xlu0 %3610
      %v3612 = vmax.f32 %v2451, %v2780
      %v3613 = vmax.f32 %v3612, %v3109
      %3614 = vmax.xlane.f32.xlu0 %v3613
      %v3615 = vpop.xlane.xlu0 %3614
      %v3616 = vmax.f32 %v2454, %v2783
      %v3617 = vmax.f32 %v3616, %v3112
      %3618 = vmax.xlane.f32.xlu0 %v3617
      %v3619 = vpop.xlane.xlu0 %3618
      %v3620 = vmax.f32 %v2456, %v2785
      %v3621 = vmax.f32 %v3620, %v3114
      %3622 = vmax.xlane.f32.xlu0 %v3621
      %v3623 = vpop.xlane.xlu0 %3622
      %v3624 = vmax.f32 %v2459, %v2788
      %v3625 = vmax.f32 %v3624, %v3117
      %3626 = vmax.xlane.f32.xlu0 %v3625
      %v3627 = vpop.xlane.xlu0 %3626
      %v3628 = vmax.f32 %v2461, %v2790
      %v3629 = vmax.f32 %v3628, %v3119
      %3630 = vmax.xlane.f32.xlu0 %v3629
      %v3631 = vpop.xlane.xlu0 %3630
      %v3632 = vmax.f32 %v2464, %v2793
      %v3633 = vmax.f32 %v3632, %v3122
      %3634 = vmax.xlane.f32.xlu0 %v3633
      %v3635 = vpop.xlane.xlu0 %3634
      %v3636 = vmax.f32 %v2466, %v2795
      %v3637 = vmax.f32 %v3636, %v3124
      %3638 = vmax.xlane.f32.xlu0 %v3637
      %v3639 = vpop.xlane.xlu0 %3638
      %v3640 = vmax.f32 %v2469, %v2798
      %v3641 = vmax.f32 %v3640, %v3127
      %3642 = vmax.xlane.f32.xlu0 %v3641
      %v3643 = vpop.xlane.xlu0 %3642
      %v3644 = vmax.f32 %v2471, %v2800
      %v3645 = vmax.f32 %v3644, %v3129
      %3646 = vmax.xlane.f32.xlu0 %v3645
      %v3647 = vpop.xlane.xlu0 %3646
      %v3648 = vmax.f32 %v2474, %v2803
      %v3649 = vmax.f32 %v3648, %v3132
      %3650 = vmax.xlane.f32.xlu0 %v3649
      %v3651 = vpop.xlane.xlu0 %3650
      %v3652 = vmax.f32 %v2476, %v2805
      %v3653 = vmax.f32 %v3652, %v3134
      %3654 = vmax.xlane.f32.xlu0 %v3653
      %v3655 = vpop.xlane.xlu0 %3654
      %v3656 = vmax.f32 %v2479, %v2808
      %v3657 = vmax.f32 %v3656, %v3137
      %3658 = vmax.xlane.f32.xlu0 %v3657
      %v3659 = vpop.xlane.xlu0 %3658
      %v3660 = vmax.f32 %v2481, %v2810
      %v3661 = vmax.f32 %v3660, %v3139
      %3662 = vmax.xlane.f32.xlu0 %v3661
      %v3663 = vpop.xlane.xlu0 %3662
      %v3664 = vmax.f32 %v2484, %v2813
      %v3665 = vmax.f32 %v3664, %v3142
      %3666 = vmax.xlane.f32.xlu0 %v3665
      %v3667 = vpop.xlane.xlu0 %3666
      %v3668 = vmax.f32 %v2486, %v2815
      %v3669 = vmax.f32 %v3668, %v3144
      %3670 = vmax.xlane.f32.xlu0 %v3669
      %v3671 = vpop.xlane.xlu0 %3670
      %v3672 = vmax.f32 %v2489, %v2818
      %v3673 = vmax.f32 %v3672, %v3147
      %3674 = vmax.xlane.f32.xlu0 %v3673
      %v3675 = vpop.xlane.xlu0 %3674
      %v3676 = vmax.f32 %v2491, %v2820
      %v3677 = vmax.f32 %v3676, %v3149
      %3678 = vmax.xlane.f32.xlu0 %v3677
      %v3679 = vpop.xlane.xlu0 %3678
      %v3680 = vmax.f32 %v2494, %v2823
      %v3681 = vmax.f32 %v3680, %v3152
      %3682 = vmax.xlane.f32.xlu0 %v3681
      %v3683 = vpop.xlane.xlu0 %3682
      %v3684 = vmax.f32 %v2496, %v2825
      %v3685 = vmax.f32 %v3684, %v3154
      %3686 = vmax.xlane.f32.xlu0 %v3685
      %v3687 = vpop.xlane.xlu0 %3686
      %v3688 = vmax.f32 %v2499, %v2828
      %v3689 = vmax.f32 %v3688, %v3157
      %3690 = vmax.xlane.f32.xlu0 %v3689
      %v3691 = vpop.xlane.xlu0 %3690
      %v3692 = vmax.f32 %v2501, %v2830
      %v3693 = vmax.f32 %v3692, %v3159
      %3694 = vmax.xlane.f32.xlu0 %v3693
      %v3695 = vpop.xlane.xlu0 %3694
      %v3696 = vmax.f32 %v2504, %v2833
      %v3697 = vmax.f32 %v3696, %v3162
      %3698 = vmax.xlane.f32.xlu0 %v3697
      %v3699 = vpop.xlane.xlu0 %3698
      %v3700 = vmax.f32 %v2506, %v2835
      %v3701 = vmax.f32 %v3700, %v3164
      %3702 = vmax.xlane.f32.xlu0 %v3701
      %v3703 = vpop.xlane.xlu0 %3702
      %v3704 = vmax.f32 %v2509, %v2838
      %v3705 = vmax.f32 %v3704, %v3167
      %3706 = vmax.xlane.f32.xlu0 %v3705
      %v3707 = vpop.xlane.xlu0 %3706
      %v3708 = vmax.f32 %v2511, %v2840
      %v3709 = vmax.f32 %v3708, %v3169
      %3710 = vmax.xlane.f32.xlu0 %v3709
      %v3711 = vpop.xlane.xlu0 %3710
      %v3712 = vmax.f32 %v2514, %v2843
      %v3713 = vmax.f32 %v3712, %v3172
      %3714 = vmax.xlane.f32.xlu0 %v3713
      %v3715 = vpop.xlane.xlu0 %3714
      %v3716 = vmax.f32 %v2516, %v2845
      %v3717 = vmax.f32 %v3716, %v3174
      %3718 = vmax.xlane.f32.xlu0 %v3717
      %v3719 = vpop.xlane.xlu0 %3718
      %v3720 = vmax.f32 %v2519, %v2848
      %v3721 = vmax.f32 %v3720, %v3177
      %3722 = vmax.xlane.f32.xlu0 %v3721
      %v3723 = vpop.xlane.xlu0 %3722
      %v3724 = vmax.f32 %v2521, %v2850
      %v3725 = vmax.f32 %v3724, %v3179
      %3726 = vmax.xlane.f32.xlu0 %v3725
      %v3727 = vpop.xlane.xlu0 %3726
      %v3728 = vmax.f32 %v2524, %v2853
      %v3729 = vmax.f32 %v3728, %v3182
      %3730 = vmax.xlane.f32.xlu0 %v3729
      %v3731 = vpop.xlane.xlu0 %3730
      %v3732 = vmax.f32 %v2526, %v2855
      %v3733 = vmax.f32 %v3732, %v3184
      %3734 = vmax.xlane.f32.xlu0 %v3733
      %v3735 = vpop.xlane.xlu0 %3734
      %v3736 = vmax.f32 %v2529, %v2858
      %v3737 = vmax.f32 %v3736, %v3187
      %3738 = vmax.xlane.f32.xlu0 %v3737
      %v3739 = vpop.xlane.xlu0 %3738
      %v3740 = vmax.f32 %v2531, %v2860
      %v3741 = vmax.f32 %v3740, %v3189
      %3742 = vmax.xlane.f32.xlu0 %v3741
      %v3743 = vpop.xlane.xlu0 %3742
      %v3744 = vmax.f32 %v2534, %v2863
      %v3745 = vmax.f32 %v3744, %v3192
      %3746 = vmax.xlane.f32.xlu0 %v3745
      %v3747 = vpop.xlane.xlu0 %3746
      %v3748 = vmax.f32 %v2536, %v2865
      %v3749 = vmax.f32 %v3748, %v3194
      %3750 = vmax.xlane.f32.xlu0 %v3749
      %v3751 = vpop.xlane.xlu0 %3750
      %v3752 = vmax.f32 %v2539, %v2868
      %v3753 = vmax.f32 %v3752, %v3197
      %3754 = vmax.xlane.f32.xlu0 %v3753
      %v3755 = vpop.xlane.xlu0 %3754
      %v3756 = vmax.f32 %v2541, %v2870
      %v3757 = vmax.f32 %v3756, %v3199
      %3758 = vmax.xlane.f32.xlu0 %v3757
      %v3759 = vpop.xlane.xlu0 %3758
      %v3760 = vmax.f32 %v2544, %v2873
      %v3761 = vmax.f32 %v3760, %v3202
      %3762 = vmax.xlane.f32.xlu0 %v3761
      %v3763 = vpop.xlane.xlu0 %3762
      %v3764 = vmax.f32 %v2546, %v2875
      %v3765 = vmax.f32 %v3764, %v3204
      %3766 = vmax.xlane.f32.xlu0 %v3765
      %v3767 = vpop.xlane.xlu0 %3766
      %v3768 = vmax.f32 %v2549, %v2878
      %v3769 = vmax.f32 %v3768, %v3207
      %3770 = vmax.xlane.f32.xlu0 %v3769
      %v3771 = vpop.xlane.xlu0 %3770
      %v3772 = vmax.f32 %v2551, %v2880
      %v3773 = vmax.f32 %v3772, %v3209
      %3774 = vmax.xlane.f32.xlu0 %v3773
      %v3775 = vpop.xlane.xlu0 %3774
      %v3776 = vmax.f32 %v2554, %v2883
      %v3777 = vmax.f32 %v3776, %v3212
      %3778 = vmax.xlane.f32.xlu0 %v3777
      %v3779 = vpop.xlane.xlu0 %3778
      %v3780 = vmax.f32 %v2556, %v2885
      %v3781 = vmax.f32 %v3780, %v3214
      %3782 = vmax.xlane.f32.xlu0 %v3781
      %v3783 = vpop.xlane.xlu0 %3782
      %v3784 = vmax.f32 %v2559, %v2888
      %v3785 = vmax.f32 %v3784, %v3217
      %3786 = vmax.xlane.f32.xlu0 %v3785
      %v3787 = vpop.xlane.xlu0 %3786
      %v3788 = vmax.f32 %v2561, %v2890
      %v3789 = vmax.f32 %v3788, %v3219
      %3790 = vmax.xlane.f32.xlu0 %v3789
      %v3791 = vpop.xlane.xlu0 %3790
      %v3792 = vmax.f32 %v2564, %v2893
      %v3793 = vmax.f32 %v3792, %v3222
      %3794 = vmax.xlane.f32.xlu0 %v3793
      %v3795 = vpop.xlane.xlu0 %3794
      %v3796 = vmax.f32 %v2566, %v2895
      %v3797 = vmax.f32 %v3796, %v3224
      %3798 = vmax.xlane.f32.xlu0 %v3797
      %v3799 = vpop.xlane.xlu0 %3798
      %v3800 = vmax.f32 %v2569, %v2898
      %v3801 = vmax.f32 %v3800, %v3227
      %3802 = vmax.xlane.f32.xlu0 %v3801
      %v3803 = vpop.xlane.xlu0 %3802
      %v3804 = vmax.f32 %v2571, %v2900
      %v3805 = vmax.f32 %v3804, %v3229
      %3806 = vmax.xlane.f32.xlu0 %v3805
      %v3807 = vpop.xlane.xlu0 %3806
      %v3808 = vmax.f32 %v2574, %v2903
      %v3809 = vmax.f32 %v3808, %v3232
      %3810 = vmax.xlane.f32.xlu0 %v3809
      %v3811 = vpop.xlane.xlu0 %3810
      %v3812 = vmax.f32 %v2576, %v2905
      %v3813 = vmax.f32 %v3812, %v3234
      %3814 = vmax.xlane.f32.xlu0 %v3813
      %v3815 = vpop.xlane.xlu0 %3814
      %v3816 = vmax.f32 %v2579, %v2908
      %v3817 = vmax.f32 %v3816, %v3237
      %3818 = vmax.xlane.f32.xlu0 %v3817
      %v3819 = vpop.xlane.xlu0 %3818
      %v3820 = vmax.f32 %v2581, %v2910
      %v3821 = vmax.f32 %v3820, %v3239
      %3822 = vmax.xlane.f32.xlu0 %v3821
      %v3823 = vpop.xlane.xlu0 %3822
      %v3824 = vmax.f32 %v2584, %v2913
      %v3825 = vmax.f32 %v3824, %v3242
      %3826 = vmax.xlane.f32.xlu0 %v3825
      %v3827 = vpop.xlane.xlu0 %3826
      %v3828 = vmax.f32 %v2586, %v2915
      %v3829 = vmax.f32 %v3828, %v3244
      %3830 = vmax.xlane.f32.xlu0 %v3829
      %v3831 = vpop.xlane.xlu0 %3830
      %v3832 = vmax.f32 %v2589, %v2918
      %v3833 = vmax.f32 %v3832, %v3247
      %3834 = vmax.xlane.f32.xlu0 %v3833
      %v3835 = vpop.xlane.xlu0 %3834
      %v3836 = vmax.f32 %v2591, %v2920
      %v3837 = vmax.f32 %v3836, %v3249
      %3838 = vmax.xlane.f32.xlu0 %v3837
      %v3839 = vpop.xlane.xlu0 %3838
      %v3840 = vmax.f32 %v2594, %v2923
      %v3841 = vmax.f32 %v3840, %v3252
      %3842 = vmax.xlane.f32.xlu0 %v3841
      %v3843 = vpop.xlane.xlu0 %3842
      %v3844 = vmax.f32 %v2596, %v2925
      %v3845 = vmax.f32 %v3844, %v3254
      %3846 = vmax.xlane.f32.xlu0 %v3845
      %v3847 = vpop.xlane.xlu0 %3846
      %v3848 = vmax.f32 %v2599, %v2928
      %v3849 = vmax.f32 %v3848, %v3257
      %3850 = vmax.xlane.f32.xlu0 %v3849
      %v3851 = vpop.xlane.xlu0 %3850
      %v3852 = vmax.f32 %v2601, %v2930
      %v3853 = vmax.f32 %v3852, %v3259
      %3854 = vmax.xlane.f32.xlu0 %v3853
      %v3855 = vpop.xlane.xlu0 %3854
      %v3856 = vmax.f32 %v2604, %v2933
      %v3857 = vmax.f32 %v3856, %v3262
      %3858 = vmax.xlane.f32.xlu0 %v3857
      %v3859 = vpop.xlane.xlu0 %3858
      %v3860 = vmax.f32 %v2606, %v2935
      %v3861 = vmax.f32 %v3860, %v3264
      %3862 = vmax.xlane.f32.xlu0 %v3861
      %v3863 = vpop.xlane.xlu0 %3862
      %v3864 = vmax.f32 %v2609, %v2938
      %v3865 = vmax.f32 %v3864, %v3267
      %3866 = vmax.xlane.f32.xlu0 %v3865
      %v3867 = vpop.xlane.xlu0 %3866
      %v3868 = vmax.f32 %v2611, %v2940
      %v3869 = vmax.f32 %v3868, %v3269
      %3870 = vmax.xlane.f32.xlu0 %v3869
      %v3871 = vpop.xlane.xlu0 %3870
      %v3872 = vmax.f32 %v2614, %v2943
      %v3873 = vmax.f32 %v3872, %v3272
      %3874 = vmax.xlane.f32.xlu0 %v3873
      %v3875 = vpop.xlane.xlu0 %3874
      %v3876 = vmax.f32 %v2616, %v2945
      %v3877 = vmax.f32 %v3876, %v3274
      %3878 = vmax.xlane.f32.xlu0 %v3877
      %v3879 = vpop.xlane.xlu0 %3878
      %v3880 = vmax.f32 %v2619, %v2948
      %v3881 = vmax.f32 %v3880, %v3277
      %3882 = vmax.xlane.f32.xlu0 %v3881
      %v3883 = vpop.xlane.xlu0 %3882
      %v3884 = vmax.f32 %v2621, %v2950
      %v3885 = vmax.f32 %v3884, %v3279
      %3886 = vmax.xlane.f32.xlu0 %v3885
      %v3887 = vpop.xlane.xlu0 %3886
      %v3888 = vmax.f32 %v2624, %v2953
      %v3889 = vmax.f32 %v3888, %v3282
      %3890 = vmax.xlane.f32.xlu0 %v3889
      %v3891 = vpop.xlane.xlu0 %3890
      %v3892 = vmax.f32 %v2626, %v2955
      %v3893 = vmax.f32 %v3892, %v3284
      %3894 = vmax.xlane.f32.xlu0 %v3893
      %v3895 = vpop.xlane.xlu0 %3894
      %v3896 = vmax.f32 %v2629, %v2958
      %v3897 = vmax.f32 %v3896, %v3287
      %3898 = vmax.xlane.f32.xlu0 %v3897
      %v3899 = vpop.xlane.xlu0 %3898
      %v3900 = vmax.f32 %v2631, %v2960
      %v3901 = vmax.f32 %v3900, %v3289
      %3902 = vmax.xlane.f32.xlu0 %v3901
      %v3903 = vpop.xlane.xlu0 %3902
      %v3904 = vmax.f32 %v2634, %v2963
      %v3905 = vmax.f32 %v3904, %v3292
      %3906 = vmax.xlane.f32.xlu0 %v3905
      %v3907 = vpop.xlane.xlu0 %3906
      %v3908 = vmax.f32 %v2636, %v2965
      %v3909 = vmax.f32 %v3908, %v3294
      %3910 = vmax.xlane.f32.xlu0 %v3909
      %v3911 = vpop.xlane.xlu0 %3910
      %v3912 = vmax.f32 %v2639, %v2968
      %v3913 = vmax.f32 %v3912, %v3297
      %3914 = vmax.xlane.f32.xlu0 %v3913
      %v3915 = vpop.xlane.xlu0 %3914
      %v3916 = vmax.f32 %v2641, %v2970
      %v3917 = vmax.f32 %v3916, %v3299
      %3918 = vmax.xlane.f32.xlu0 %v3917
      %v3919 = vpop.xlane.xlu0 %3918
      %v3920 = vmax.f32 %v2644, %v2973
      %v3921 = vmax.f32 %v3920, %v3302
      %3922 = vmax.xlane.f32.xlu0 %v3921
      %v3923 = vpop.xlane.xlu0 %3922
      %v3924 = vmax.f32 %v2646, %v2975
      %v3925 = vmax.f32 %v3924, %v3304
      %3926 = vmax.xlane.f32.xlu0 %v3925
      %v3927 = vpop.xlane.xlu0 %3926
      %v3928 = vmax.f32 %v2649, %v2978
      %v3929 = vmax.f32 %v3928, %v3307
      %3930 = vmax.xlane.f32.xlu0 %v3929
      %v3931 = vpop.xlane.xlu0 %3930
      %v3932 = vmax.f32 %v2651, %v2980
      %v3933 = vmax.f32 %v3932, %v3309
      %3934 = vmax.xlane.f32.xlu0 %v3933
      %v3935 = vpop.xlane.xlu0 %3934
      %v3936 = vmax.f32 %v2654, %v2983
      %v3937 = vmax.f32 %v3936, %v3312
      %3938 = vmax.xlane.f32.xlu0 %v3937
      %v3939 = vpop.xlane.xlu0 %3938
      %v3940 = vmax.f32 %v2656, %v2985
      %v3941 = vmax.f32 %v3940, %v3314
      %3942 = vmax.xlane.f32.xlu0 %v3941
      %v3943 = vpop.xlane.xlu0 %3942
      %v3944 = vmax.f32 %v2659, %v2988
      %v3945 = vmax.f32 %v3944, %v3317
      %3946 = vmax.xlane.f32.xlu0 %v3945
      %v3947 = vpop.xlane.xlu0 %3946
      %v3948 = vmax.f32 %v2661, %v2990
      %v3949 = vmax.f32 %v3948, %v3319
      %3950 = vmax.xlane.f32.xlu0 %v3949
      %v3951 = vpop.xlane.xlu0 %3950
      %v3952 = vmax.f32 %v2664, %v2993
      %v3953 = vmax.f32 %v3952, %v3322
      %3954 = vmax.xlane.f32.xlu0 %v3953
      %v3955 = vpop.xlane.xlu0 %3954
      %v3956 = vmax.f32 %v2666, %v2995
      %v3957 = vmax.f32 %v3956, %v3324
      %3958 = vmax.xlane.f32.xlu0 %v3957
      %v3959 = vpop.xlane.xlu0 %3958
      %v3960 = vmax.f32 %v2669, %v2998
      %v3961 = vmax.f32 %v3960, %v3327
      %3962 = vmax.xlane.f32.xlu0 %v3961
      %v3963 = vpop.xlane.xlu0 %3962
      %v3964 = vmax.f32 %v2671, %v3000
      %v3965 = vmax.f32 %v3964, %v3329
      %3966 = vmax.xlane.f32.xlu0 %v3965
      %v3967 = vpop.xlane.xlu0 %3966
      %v3968 = vmax.f32 %v2674, %v3003
      %v3969 = vmax.f32 %v3968, %v3332
      %3970 = vmax.xlane.f32.xlu0 %v3969
      %v3971 = vpop.xlane.xlu0 %3970
      %v3972 = vmax.f32 %v2676, %v3005
      %v3973 = vmax.f32 %v3972, %v3334
      %3974 = vmax.xlane.f32.xlu0 %v3973
      %v3975 = vpop.xlane.xlu0 %3974
      %v3976 = vmax.f32 %v3336, %v3467
      %v3977 = vmax.f32 %v3337, %v3471
      %v3978 = vmax.f32 %v3338, %v3475
      %v3979 = vmax.f32 %v3339, %v3479
      %v3980 = vmax.f32 %v3340, %v3483
      %v3981 = vmax.f32 %v3341, %v3487
      %v3982 = vmax.f32 %v3342, %v3491
      %v3983 = vmax.f32 %v3343, %v3495
      %v3984 = vmax.f32 %v3344, %v3499
      %v3985 = vmax.f32 %v3345, %v3503
      %v3986 = vmax.f32 %v3346, %v3507
      %v3987 = vmax.f32 %v3347, %v3511
      %v3988 = vmax.f32 %v3348, %v3515
      %v3989 = vmax.f32 %v3349, %v3519
      %v3990 = vmax.f32 %v3350, %v3523
      %v3991 = vmax.f32 %v3351, %v3527
      %v3992 = vmax.f32 %v3352, %v3531
      %v3993 = vmax.f32 %v3353, %v3535
      %v3994 = vmax.f32 %v3354, %v3539
      %v3995 = vmax.f32 %v3355, %v3543
      %v3996 = vmax.f32 %v3356, %v3547
      %v3997 = vmax.f32 %v3357, %v3551
      %v3998 = vmax.f32 %v3358, %v3555
      %v3999 = vmax.f32 %v3359, %v3559
      %v4000 = vmax.f32 %v3360, %v3563
      %v4001 = vmax.f32 %v3361, %v3567
      %v4002 = vmax.f32 %v3362, %v3571
      %v4003 = vmax.f32 %v3363, %v3575
      %v4004 = vmax.f32 %v3364, %v3579
      %v4005 = vmax.f32 %v3365, %v3583
      %v4006 = vmax.f32 %v3366, %v3587
      %v4007 = vmax.f32 %v3367, %v3591
      %v4008 = vmax.f32 %v3368, %v3595
      %v4009 = vmax.f32 %v3369, %v3599
      %v4010 = vmax.f32 %v3370, %v3603
      %v4011 = vmax.f32 %v3371, %v3607
      %v4012 = vmax.f32 %v3372, %v3611
      %v4013 = vmax.f32 %v3373, %v3615
      %v4014 = vmax.f32 %v3374, %v3619
      %v4015 = vmax.f32 %v3375, %v3623
      %v4016 = vmax.f32 %v3376, %v3627
      %v4017 = vmax.f32 %v3377, %v3631
      %v4018 = vmax.f32 %v3378, %v3635
      %v4019 = vmax.f32 %v3379, %v3639
      %v4020 = vmax.f32 %v3380, %v3643
      %v4021 = vmax.f32 %v3381, %v3647
      %v4022 = vmax.f32 %v3382, %v3651
      %v4023 = vmax.f32 %v3383, %v3655
      %v4024 = vmax.f32 %v3384, %v3659
      %v4025 = vmax.f32 %v3385, %v3663
      %v4026 = vmax.f32 %v3386, %v3667
      %v4027 = vmax.f32 %v3387, %v3671
      %v4028 = vmax.f32 %v3388, %v3675
      %v4029 = vmax.f32 %v3389, %v3679
      %v4030 = vmax.f32 %v3390, %v3683
      %v4031 = vmax.f32 %v3391, %v3687
      %v4032 = vmax.f32 %v3392, %v3691
      %v4033 = vmax.f32 %v3393, %v3695
      %v4034 = vmax.f32 %v3394, %v3699
      %v4035 = vmax.f32 %v3395, %v3703
      %v4036 = vmax.f32 %v3396, %v3707
      %v4037 = vmax.f32 %v3397, %v3711
      %v4038 = vmax.f32 %v3398, %v3715
      %v4039 = vmax.f32 %v3399, %v3719
      %v4040 = vmax.f32 %v3400, %v3723
      %v4041 = vmax.f32 %v3401, %v3727
      %v4042 = vmax.f32 %v3402, %v3731
      %v4043 = vmax.f32 %v3403, %v3735
      %v4044 = vmax.f32 %v3404, %v3739
      %v4045 = vmax.f32 %v3405, %v3743
      %v4046 = vmax.f32 %v3406, %v3747
      %v4047 = vmax.f32 %v3407, %v3751
      %v4048 = vmax.f32 %v3408, %v3755
      %v4049 = vmax.f32 %v3409, %v3759
      %v4050 = vmax.f32 %v3410, %v3763
      %v4051 = vmax.f32 %v3411, %v3767
      %v4052 = vmax.f32 %v3412, %v3771
      %v4053 = vmax.f32 %v3413, %v3775
      %v4054 = vmax.f32 %v3414, %v3779
      %v4055 = vmax.f32 %v3415, %v3783
      %v4056 = vmax.f32 %v3416, %v3787
      %v4057 = vmax.f32 %v3417, %v3791
      %v4058 = vmax.f32 %v3418, %v3795
      %v4059 = vmax.f32 %v3419, %v3799
      %v4060 = vmax.f32 %v3420, %v3803
      %v4061 = vmax.f32 %v3421, %v3807
      %v4062 = vmax.f32 %v3422, %v3811
      %v4063 = vmax.f32 %v3423, %v3815
      %v4064 = vmax.f32 %v3424, %v3819
      %v4065 = vmax.f32 %v3425, %v3823
      %v4066 = vmax.f32 %v3426, %v3827
      %v4067 = vmax.f32 %v3427, %v3831
      %v4068 = vmax.f32 %v3428, %v3835
      %v4069 = vmax.f32 %v3429, %v3839
      %v4070 = vmax.f32 %v3430, %v3843
      %v4071 = vmax.f32 %v3431, %v3847
      %v4072 = vmax.f32 %v3432, %v3851
      %v4073 = vmax.f32 %v3433, %v3855
      %v4074 = vmax.f32 %v3434, %v3859
      %v4075 = vmax.f32 %v3435, %v3863
      %v4076 = vmax.f32 %v3436, %v3867
      %v4077 = vmax.f32 %v3437, %v3871
      %v4078 = vmax.f32 %v3438, %v3875
      %v4079 = vmax.f32 %v3439, %v3879
      %v4080 = vmax.f32 %v3440, %v3883
      %v4081 = vmax.f32 %v3441, %v3887
      %v4082 = vmax.f32 %v3442, %v3891
      %v4083 = vmax.f32 %v3443, %v3895
      %v4084 = vmax.f32 %v3444, %v3899
      %v4085 = vmax.f32 %v3445, %v3903
      %v4086 = vmax.f32 %v3446, %v3907
      %v4087 = vmax.f32 %v3447, %v3911
      %v4088 = vmax.f32 %v3448, %v3915
      %v4089 = vmax.f32 %v3449, %v3919
      %v4090 = vmax.f32 %v3450, %v3923
      %v4091 = vmax.f32 %v3451, %v3927
      %v4092 = vmax.f32 %v3452, %v3931
      %v4093 = vmax.f32 %v3453, %v3935
      %v4094 = vmax.f32 %v3454, %v3939
      %v4095 = vmax.f32 %v3455, %v3943
      %v4096 = vmax.f32 %v3456, %v3947
      %v4097 = vmax.f32 %v3457, %v3951
      %v4098 = vmax.f32 %v3458, %v3955
      %v4099 = vmax.f32 %v3459, %v3959
      %v4100 = vmax.f32 %v3460, %v3963
      %v4101 = vmax.f32 %v3461, %v3967
      %v4102 = vmax.f32 %v3462, %v3971
      %v4103 = vmax.f32 %v3463, %v3975
      %vm4104 = vcmask 7168
      %4105 = vst.msk [vmem:[#allocation2] sm:$0xff] %vm4104, %v3976
      %4106 = vst.msk [vmem:[#allocation2 + $0x8] sm:$0xff] %vm4104, %v3977
      %4107 = vst.msk [vmem:[#allocation2 + $0x10] sm:$0xff] %vm4104, %v3978
      %4108 = vst.msk [vmem:[#allocation2 + $0x18] sm:$0xff] %vm4104, %v3979
      %4109 = vst.msk [vmem:[#allocation2 + $0x20] sm:$0xff] %vm4104, %v3980
      %4110 = vst.msk [vmem:[#allocation2 + $0x28] sm:$0xff] %vm4104, %v3981
      %4111 = vst.msk [vmem:[#allocation2 + $0x30] sm:$0xff] %vm4104, %v3982
      %4112 = vst.msk [vmem:[#allocation2 + $0x38] sm:$0xff] %vm4104, %v3983
      %4113 = vst.msk [vmem:[#allocation2 + $0x40] sm:$0xff] %vm4104, %v3984
      %4114 = vst.msk [vmem:[#allocation2 + $0x48] sm:$0xff] %vm4104, %v3985
      %4115 = vst.msk [vmem:[#allocation2 + $0x50] sm:$0xff] %vm4104, %v3986
      %4116 = vst.msk [vmem:[#allocation2 + $0x58] sm:$0xff] %vm4104, %v3987
      %4117 = vst.msk [vmem:[#allocation2 + $0x60] sm:$0xff] %vm4104, %v3988
      %4118 = vst.msk [vmem:[#allocation2 + $0x68] sm:$0xff] %vm4104, %v3989
      %4119 = vst.msk [vmem:[#allocation2 + $0x70] sm:$0xff] %vm4104, %v3990
      %4120 = vst.msk [vmem:[#allocation2 + $0x78] sm:$0xff] %vm4104, %v3991
      %4121 = vst.msk [vmem:[#allocation2 + $0x80] sm:$0xff] %vm4104, %v3992
      %4122 = vst.msk [vmem:[#allocation2 + $0x88] sm:$0xff] %vm4104, %v3993
      %4123 = vst.msk [vmem:[#allocation2 + $0x90] sm:$0xff] %vm4104, %v3994
      %4124 = vst.msk [vmem:[#allocation2 + $0x98] sm:$0xff] %vm4104, %v3995
      %4125 = vst.msk [vmem:[#allocation2 + $0xa0] sm:$0xff] %vm4104, %v3996
      %4126 = vst.msk [vmem:[#allocation2 + $0xa8] sm:$0xff] %vm4104, %v3997
      %4127 = vst.msk [vmem:[#allocation2 + $0xb0] sm:$0xff] %vm4104, %v3998
      %4128 = vst.msk [vmem:[#allocation2 + $0xb8] sm:$0xff] %vm4104, %v3999
      %4129 = vst.msk [vmem:[#allocation2 + $0xc0] sm:$0xff] %vm4104, %v4000
      %4130 = vst.msk [vmem:[#allocation2 + $0xc8] sm:$0xff] %vm4104, %v4001
      %4131 = vst.msk [vmem:[#allocation2 + $0xd0] sm:$0xff] %vm4104, %v4002
      %4132 = vst.msk [vmem:[#allocation2 + $0xd8] sm:$0xff] %vm4104, %v4003
      %4133 = vst.msk [vmem:[#allocation2 + $0xe0] sm:$0xff] %vm4104, %v4004
      %4134 = vst.msk [vmem:[#allocation2 + $0xe8] sm:$0xff] %vm4104, %v4005
      %4135 = vst.msk [vmem:[#allocation2 + $0xf0] sm:$0xff] %vm4104, %v4006
      %4136 = vst.msk [vmem:[#allocation2 + $0xf8] sm:$0xff] %vm4104, %v4007
      %4137 = vst.msk [vmem:[#allocation2 + $0x100] sm:$0xff] %vm4104, %v4008
      %4138 = vst.msk [vmem:[#allocation2 + $0x108] sm:$0xff] %vm4104, %v4009
      %4139 = vst.msk [vmem:[#allocation2 + $0x110] sm:$0xff] %vm4104, %v4010
      %4140 = vst.msk [vmem:[#allocation2 + $0x118] sm:$0xff] %vm4104, %v4011
      %4141 = vst.msk [vmem:[#allocation2 + $0x120] sm:$0xff] %vm4104, %v4012
      %4142 = vst.msk [vmem:[#allocation2 + $0x128] sm:$0xff] %vm4104, %v4013
      %4143 = vst.msk [vmem:[#allocation2 + $0x130] sm:$0xff] %vm4104, %v4014
      %4144 = vst.msk [vmem:[#allocation2 + $0x138] sm:$0xff] %vm4104, %v4015
      %4145 = vst.msk [vmem:[#allocation2 + $0x140] sm:$0xff] %vm4104, %v4016
      %4146 = vst.msk [vmem:[#allocation2 + $0x148] sm:$0xff] %vm4104, %v4017
      %4147 = vst.msk [vmem:[#allocation2 + $0x150] sm:$0xff] %vm4104, %v4018
      %4148 = vst.msk [vmem:[#allocation2 + $0x158] sm:$0xff] %vm4104, %v4019
      %4149 = vst.msk [vmem:[#allocation2 + $0x160] sm:$0xff] %vm4104, %v4020
      %4150 = vst.msk [vmem:[#allocation2 + $0x168] sm:$0xff] %vm4104, %v4021
      %4151 = vst.msk [vmem:[#allocation2 + $0x170] sm:$0xff] %vm4104, %v4022
      %4152 = vst.msk [vmem:[#allocation2 + $0x178] sm:$0xff] %vm4104, %v4023
      %4153 = vst.msk [vmem:[#allocation2 + $0x180] sm:$0xff] %vm4104, %v4024
      %4154 = vst.msk [vmem:[#allocation2 + $0x188] sm:$0xff] %vm4104, %v4025
      %4155 = vst.msk [vmem:[#allocation2 + $0x190] sm:$0xff] %vm4104, %v4026
      %4156 = vst.msk [vmem:[#allocation2 + $0x198] sm:$0xff] %vm4104, %v4027
      %4157 = vst.msk [vmem:[#allocation2 + $0x1a0] sm:$0xff] %vm4104, %v4028
      %4158 = vst.msk [vmem:[#allocation2 + $0x1a8] sm:$0xff] %vm4104, %v4029
      %4159 = vst.msk [vmem:[#allocation2 + $0x1b0] sm:$0xff] %vm4104, %v4030
      %4160 = vst.msk [vmem:[#allocation2 + $0x1b8] sm:$0xff] %vm4104, %v4031
      %4161 = vst.msk [vmem:[#allocation2 + $0x1c0] sm:$0xff] %vm4104, %v4032
      %4162 = vst.msk [vmem:[#allocation2 + $0x1c8] sm:$0xff] %vm4104, %v4033
      %4163 = vst.msk [vmem:[#allocation2 + $0x1d0] sm:$0xff] %vm4104, %v4034
      %4164 = vst.msk [vmem:[#allocation2 + $0x1d8] sm:$0xff] %vm4104, %v4035
      %4165 = vst.msk [vmem:[#allocation2 + $0x1e0] sm:$0xff] %vm4104, %v4036
      %4166 = vst.msk [vmem:[#allocation2 + $0x1e8] sm:$0xff] %vm4104, %v4037
      %4167 = vst.msk [vmem:[#allocation2 + $0x1f0] sm:$0xff] %vm4104, %v4038
      %4168 = vst.msk [vmem:[#allocation2 + $0x1f8] sm:$0xff] %vm4104, %v4039
      %4169 = vst.msk [vmem:[#allocation2 + $0x200] sm:$0xff] %vm4104, %v4040
      %4170 = vst.msk [vmem:[#allocation2 + $0x208] sm:$0xff] %vm4104, %v4041
      %4171 = vst.msk [vmem:[#allocation2 + $0x210] sm:$0xff] %vm4104, %v4042
      %4172 = vst.msk [vmem:[#allocation2 + $0x218] sm:$0xff] %vm4104, %v4043
      %4173 = vst.msk [vmem:[#allocation2 + $0x220] sm:$0xff] %vm4104, %v4044
      %4174 = vst.msk [vmem:[#allocation2 + $0x228] sm:$0xff] %vm4104, %v4045
      %4175 = vst.msk [vmem:[#allocation2 + $0x230] sm:$0xff] %vm4104, %v4046
      %4176 = vst.msk [vmem:[#allocation2 + $0x238] sm:$0xff] %vm4104, %v4047
      %4177 = vst.msk [vmem:[#allocation2 + $0x240] sm:$0xff] %vm4104, %v4048
      %4178 = vst.msk [vmem:[#allocation2 + $0x248] sm:$0xff] %vm4104, %v4049
      %4179 = vst.msk [vmem:[#allocation2 + $0x250] sm:$0xff] %vm4104, %v4050
      %4180 = vst.msk [vmem:[#allocation2 + $0x258] sm:$0xff] %vm4104, %v4051
      %4181 = vst.msk [vmem:[#allocation2 + $0x260] sm:$0xff] %vm4104, %v4052
      %4182 = vst.msk [vmem:[#allocation2 + $0x268] sm:$0xff] %vm4104, %v4053
      %4183 = vst.msk [vmem:[#allocation2 + $0x270] sm:$0xff] %vm4104, %v4054
      %4184 = vst.msk [vmem:[#allocation2 + $0x278] sm:$0xff] %vm4104, %v4055
      %4185 = vst.msk [vmem:[#allocation2 + $0x280] sm:$0xff] %vm4104, %v4056
      %4186 = vst.msk [vmem:[#allocation2 + $0x288] sm:$0xff] %vm4104, %v4057
      %4187 = vst.msk [vmem:[#allocation2 + $0x290] sm:$0xff] %vm4104, %v4058
      %4188 = vst.msk [vmem:[#allocation2 + $0x298] sm:$0xff] %vm4104, %v4059
      %4189 = vst.msk [vmem:[#allocation2 + $0x2a0] sm:$0xff] %vm4104, %v4060
      %4190 = vst.msk [vmem:[#allocation2 + $0x2a8] sm:$0xff] %vm4104, %v4061
      %4191 = vst.msk [vmem:[#allocation2 + $0x2b0] sm:$0xff] %vm4104, %v4062
      %4192 = vst.msk [vmem:[#allocation2 + $0x2b8] sm:$0xff] %vm4104, %v4063
      %4193 = vst.msk [vmem:[#allocation2 + $0x2c0] sm:$0xff] %vm4104, %v4064
      %4194 = vst.msk [vmem:[#allocation2 + $0x2c8] sm:$0xff] %vm4104, %v4065
      %4195 = vst.msk [vmem:[#allocation2 + $0x2d0] sm:$0xff] %vm4104, %v4066
      %4196 = vst.msk [vmem:[#allocation2 + $0x2d8] sm:$0xff] %vm4104, %v4067
      %4197 = vst.msk [vmem:[#allocation2 + $0x2e0] sm:$0xff] %vm4104, %v4068
      %4198 = vst.msk [vmem:[#allocation2 + $0x2e8] sm:$0xff] %vm4104, %v4069
      %4199 = vst.msk [vmem:[#allocation2 + $0x2f0] sm:$0xff] %vm4104, %v4070
      %4200 = vst.msk [vmem:[#allocation2 + $0x2f8] sm:$0xff] %vm4104, %v4071
      %4201 = vst.msk [vmem:[#allocation2 + $0x300] sm:$0xff] %vm4104, %v4072
      %4202 = vst.msk [vmem:[#allocation2 + $0x308] sm:$0xff] %vm4104, %v4073
      %4203 = vst.msk [vmem:[#allocation2 + $0x310] sm:$0xff] %vm4104, %v4074
      %4204 = vst.msk [vmem:[#allocation2 + $0x318] sm:$0xff] %vm4104, %v4075
      %4205 = vst.msk [vmem:[#allocation2 + $0x320] sm:$0xff] %vm4104, %v4076
      %4206 = vst.msk [vmem:[#allocation2 + $0x328] sm:$0xff] %vm4104, %v4077
      %4207 = vst.msk [vmem:[#allocation2 + $0x330] sm:$0xff] %vm4104, %v4078
      %4208 = vst.msk [vmem:[#allocation2 + $0x338] sm:$0xff] %vm4104, %v4079
      %4209 = vst.msk [vmem:[#allocation2 + $0x340] sm:$0xff] %vm4104, %v4080
      %4210 = vst.msk [vmem:[#allocation2 + $0x348] sm:$0xff] %vm4104, %v4081
      %4211 = vst.msk [vmem:[#allocation2 + $0x350] sm:$0xff] %vm4104, %v4082
      %4212 = vst.msk [vmem:[#allocation2 + $0x358] sm:$0xff] %vm4104, %v4083
      %4213 = vst.msk [vmem:[#allocation2 + $0x360] sm:$0xff] %vm4104, %v4084
      %4214 = vst.msk [vmem:[#allocation2 + $0x368] sm:$0xff] %vm4104, %v4085
      %4215 = vst.msk [vmem:[#allocation2 + $0x370] sm:$0xff] %vm4104, %v4086
      %4216 = vst.msk [vmem:[#allocation2 + $0x378] sm:$0xff] %vm4104, %v4087
      %4217 = vst.msk [vmem:[#allocation2 + $0x380] sm:$0xff] %vm4104, %v4088
      %4218 = vst.msk [vmem:[#allocation2 + $0x388] sm:$0xff] %vm4104, %v4089
      %4219 = vst.msk [vmem:[#allocation2 + $0x390] sm:$0xff] %vm4104, %v4090
      %4220 = vst.msk [vmem:[#allocation2 + $0x398] sm:$0xff] %vm4104, %v4091
      %4221 = vst.msk [vmem:[#allocation2 + $0x3a0] sm:$0xff] %vm4104, %v4092
      %4222 = vst.msk [vmem:[#allocation2 + $0x3a8] sm:$0xff] %vm4104, %v4093
      %4223 = vst.msk [vmem:[#allocation2 + $0x3b0] sm:$0xff] %vm4104, %v4094
      %4224 = vst.msk [vmem:[#allocation2 + $0x3b8] sm:$0xff] %vm4104, %v4095
      %4225 = vst.msk [vmem:[#allocation2 + $0x3c0] sm:$0xff] %vm4104, %v4096
      %4226 = vst.msk [vmem:[#allocation2 + $0x3c8] sm:$0xff] %vm4104, %v4097
      %4227 = vst.msk [vmem:[#allocation2 + $0x3d0] sm:$0xff] %vm4104, %v4098
      %4228 = vst.msk [vmem:[#allocation2 + $0x3d8] sm:$0xff] %vm4104, %v4099
      %4229 = vst.msk [vmem:[#allocation2 + $0x3e0] sm:$0xff] %vm4104, %v4100
      %4230 = vst.msk [vmem:[#allocation2 + $0x3e8] sm:$0xff] %vm4104, %v4101
      %4231 = vst.msk [vmem:[#allocation2 + $0x3f0] sm:$0xff] %vm4104, %v4102
      %4232 = vst.msk [vmem:[#allocation2 + $0x3f8] sm:$0xff] %vm4104, %v4103
      // Predicated region
      $region53: #{ae_curskenet_forward.2} parent=47 // pred_check
        %p4233 = pneg %p308
      $region54: #{ae_curskenet_forward.2} parent=47 // pred_check_branch
        %4235 = sbr.rel (%p4233) target = $region56
      $region55: #{ae_curskenet_forward.2} parent=47 // pred_region
        %v4236 = vld [vmem:[#allocation2] sm:$0xff]
        %v4237 = vld [vmem:[#allocation2 + $0x8] sm:$0xff]
        %v4238 = vld [vmem:[#allocation2 + $0x10] sm:$0xff]
        %v4239 = vld [vmem:[#allocation2 + $0x18] sm:$0xff]
        %v4240 = vld [vmem:[#allocation2 + $0x20] sm:$0xff]
        %v4241 = vld [vmem:[#allocation2 + $0x28] sm:$0xff]
        %v4242 = vld [vmem:[#allocation2 + $0x30] sm:$0xff]
        %v4243 = vld [vmem:[#allocation2 + $0x38] sm:$0xff]
        %v4244 = vld [vmem:[#allocation2 + $0x40] sm:$0xff]
        %v4245 = vld [vmem:[#allocation2 + $0x48] sm:$0xff]
        %v4246 = vld [vmem:[#allocation2 + $0x50] sm:$0xff]
        %v4247 = vld [vmem:[#allocation2 + $0x58] sm:$0xff]
        %v4248 = vld [vmem:[#allocation2 + $0x60] sm:$0xff]
        %v4249 = vld [vmem:[#allocation2 + $0x68] sm:$0xff]
        %v4250 = vld [vmem:[#allocation2 + $0x70] sm:$0xff]
        %v4251 = vld [vmem:[#allocation2 + $0x78] sm:$0xff]
        %v4252 = vld [vmem:[#allocation2 + $0x80] sm:$0xff]
        %v4253 = vld [vmem:[#allocation2 + $0x88] sm:$0xff]
        %v4254 = vld [vmem:[#allocation2 + $0x90] sm:$0xff]
        %v4255 = vld [vmem:[#allocation2 + $0x98] sm:$0xff]
        %v4256 = vld [vmem:[#allocation2 + $0xa0] sm:$0xff]
        %v4257 = vld [vmem:[#allocation2 + $0xa8] sm:$0xff]
        %v4258 = vld [vmem:[#allocation2 + $0xb0] sm:$0xff]
        %v4259 = vld [vmem:[#allocation2 + $0xb8] sm:$0xff]
        %v4260 = vld [vmem:[#allocation2 + $0xc0] sm:$0xff]
        %v4261 = vld [vmem:[#allocation2 + $0xc8] sm:$0xff]
        %v4262 = vld [vmem:[#allocation2 + $0xd0] sm:$0xff]
        %v4263 = vld [vmem:[#allocation2 + $0xd8] sm:$0xff]
        %v4264 = vld [vmem:[#allocation2 + $0xe0] sm:$0xff]
        %v4265 = vld [vmem:[#allocation2 + $0xe8] sm:$0xff]
        %v4266 = vld [vmem:[#allocation2 + $0xf0] sm:$0xff]
        %v4267 = vld [vmem:[#allocation2 + $0xf8] sm:$0xff]
        %v4268 = vld [vmem:[#allocation2 + $0x100] sm:$0xff]
        %v4269 = vld [vmem:[#allocation2 + $0x108] sm:$0xff]
        %v4270 = vld [vmem:[#allocation2 + $0x110] sm:$0xff]
        %v4271 = vld [vmem:[#allocation2 + $0x118] sm:$0xff]
        %v4272 = vld [vmem:[#allocation2 + $0x120] sm:$0xff]
        %v4273 = vld [vmem:[#allocation2 + $0x128] sm:$0xff]
        %v4274 = vld [vmem:[#allocation2 + $0x130] sm:$0xff]
        %v4275 = vld [vmem:[#allocation2 + $0x138] sm:$0xff]
        %v4276 = vld [vmem:[#allocation2 + $0x140] sm:$0xff]
        %v4277 = vld [vmem:[#allocation2 + $0x148] sm:$0xff]
        %v4278 = vld [vmem:[#allocation2 + $0x150] sm:$0xff]
        %v4279 = vld [vmem:[#allocation2 + $0x158] sm:$0xff]
        %v4280 = vld [vmem:[#allocation2 + $0x160] sm:$0xff]
        %v4281 = vld [vmem:[#allocation2 + $0x168] sm:$0xff]
        %v4282 = vld [vmem:[#allocation2 + $0x170] sm:$0xff]
        %v4283 = vld [vmem:[#allocation2 + $0x178] sm:$0xff]
        %v4284 = vld [vmem:[#allocation2 + $0x180] sm:$0xff]
        %v4285 = vld [vmem:[#allocation2 + $0x188] sm:$0xff]
        %v4286 = vld [vmem:[#allocation2 + $0x190] sm:$0xff]
        %v4287 = vld [vmem:[#allocation2 + $0x198] sm:$0xff]
        %v4288 = vld [vmem:[#allocation2 + $0x1a0] sm:$0xff]
        %v4289 = vld [vmem:[#allocation2 + $0x1a8] sm:$0xff]
        %v4290 = vld [vmem:[#allocation2 + $0x1b0] sm:$0xff]
        %v4291 = vld [vmem:[#allocation2 + $0x1b8] sm:$0xff]
        %v4292 = vld [vmem:[#allocation2 + $0x1c0] sm:$0xff]
        %v4293 = vld [vmem:[#allocation2 + $0x1c8] sm:$0xff]
        %v4294 = vld [vmem:[#allocation2 + $0x1d0] sm:$0xff]
        %v4295 = vld [vmem:[#allocation2 + $0x1d8] sm:$0xff]
        %v4296 = vld [vmem:[#allocation2 + $0x1e0] sm:$0xff]
        %v4297 = vld [vmem:[#allocation2 + $0x1e8] sm:$0xff]
        %v4298 = vld [vmem:[#allocation2 + $0x1f0] sm:$0xff]
        %v4299 = vld [vmem:[#allocation2 + $0x1f8] sm:$0xff]
        %v4300 = vld [vmem:[#allocation2 + $0x200] sm:$0xff]
        %v4301 = vld [vmem:[#allocation2 + $0x208] sm:$0xff]
        %v4302 = vld [vmem:[#allocation2 + $0x210] sm:$0xff]
        %v4303 = vld [vmem:[#allocation2 + $0x218] sm:$0xff]
        %v4304 = vld [vmem:[#allocation2 + $0x220] sm:$0xff]
        %v4305 = vld [vmem:[#allocation2 + $0x228] sm:$0xff]
        %v4306 = vld [vmem:[#allocation2 + $0x230] sm:$0xff]
        %v4307 = vld [vmem:[#allocation2 + $0x238] sm:$0xff]
        %v4308 = vld [vmem:[#allocation2 + $0x240] sm:$0xff]
        %v4309 = vld [vmem:[#allocation2 + $0x248] sm:$0xff]
        %v4310 = vld [vmem:[#allocation2 + $0x250] sm:$0xff]
        %v4311 = vld [vmem:[#allocation2 + $0x258] sm:$0xff]
        %v4312 = vld [vmem:[#allocation2 + $0x260] sm:$0xff]
        %v4313 = vld [vmem:[#allocation2 + $0x268] sm:$0xff]
        %v4314 = vld [vmem:[#allocation2 + $0x270] sm:$0xff]
        %v4315 = vld [vmem:[#allocation2 + $0x278] sm:$0xff]
        %v4316 = vld [vmem:[#allocation2 + $0x280] sm:$0xff]
        %v4317 = vld [vmem:[#allocation2 + $0x288] sm:$0xff]
        %v4318 = vld [vmem:[#allocation2 + $0x290] sm:$0xff]
        %v4319 = vld [vmem:[#allocation2 + $0x298] sm:$0xff]
        %v4320 = vld [vmem:[#allocation2 + $0x2a0] sm:$0xff]
        %v4321 = vld [vmem:[#allocation2 + $0x2a8] sm:$0xff]
        %v4322 = vld [vmem:[#allocation2 + $0x2b0] sm:$0xff]
        %v4323 = vld [vmem:[#allocation2 + $0x2b8] sm:$0xff]
        %v4324 = vld [vmem:[#allocation2 + $0x2c0] sm:$0xff]
        %v4325 = vld [vmem:[#allocation2 + $0x2c8] sm:$0xff]
        %v4326 = vld [vmem:[#allocation2 + $0x2d0] sm:$0xff]
        %v4327 = vld [vmem:[#allocation2 + $0x2d8] sm:$0xff]
        %v4328 = vld [vmem:[#allocation2 + $0x2e0] sm:$0xff]
        %v4329 = vld [vmem:[#allocation2 + $0x2e8] sm:$0xff]
        %v4330 = vld [vmem:[#allocation2 + $0x2f0] sm:$0xff]
        %v4331 = vld [vmem:[#allocation2 + $0x2f8] sm:$0xff]
        %v4332 = vld [vmem:[#allocation2 + $0x300] sm:$0xff]
        %v4333 = vld [vmem:[#allocation2 + $0x308] sm:$0xff]
        %v4334 = vld [vmem:[#allocation2 + $0x310] sm:$0xff]
        %v4335 = vld [vmem:[#allocation2 + $0x318] sm:$0xff]
        %v4336 = vld [vmem:[#allocation2 + $0x320] sm:$0xff]
        %v4337 = vld [vmem:[#allocation2 + $0x328] sm:$0xff]
        %v4338 = vld [vmem:[#allocation2 + $0x330] sm:$0xff]
        %v4339 = vld [vmem:[#allocation2 + $0x338] sm:$0xff]
        %v4340 = vld [vmem:[#allocation2 + $0x340] sm:$0xff]
        %v4341 = vld [vmem:[#allocation2 + $0x348] sm:$0xff]
        %v4342 = vld [vmem:[#allocation2 + $0x350] sm:$0xff]
        %v4343 = vld [vmem:[#allocation2 + $0x358] sm:$0xff]
        %v4344 = vld [vmem:[#allocation2 + $0x360] sm:$0xff]
        %v4345 = vld [vmem:[#allocation2 + $0x368] sm:$0xff]
        %v4346 = vld [vmem:[#allocation2 + $0x370] sm:$0xff]
        %v4347 = vld [vmem:[#allocation2 + $0x378] sm:$0xff]
        %v4348 = vld [vmem:[#allocation2 + $0x380] sm:$0xff]
        %v4349 = vld [vmem:[#allocation2 + $0x388] sm:$0xff]
        %v4350 = vld [vmem:[#allocation2 + $0x390] sm:$0xff]
        %v4351 = vld [vmem:[#allocation2 + $0x398] sm:$0xff]
        %v4352 = vld [vmem:[#allocation2 + $0x3a0] sm:$0xff]
        %v4353 = vld [vmem:[#allocation2 + $0x3a8] sm:$0xff]
        %v4354 = vld [vmem:[#allocation2 + $0x3b0] sm:$0xff]
        %v4355 = vld [vmem:[#allocation2 + $0x3b8] sm:$0xff]
        %v4356 = vld [vmem:[#allocation2 + $0x3c0] sm:$0xff]
        %v4357 = vld [vmem:[#allocation2 + $0x3c8] sm:$0xff]
        %v4358 = vld [vmem:[#allocation2 + $0x3d0] sm:$0xff]
        %v4359 = vld [vmem:[#allocation2 + $0x3d8] sm:$0xff]
        %v4360 = vld [vmem:[#allocation2 + $0x3e0] sm:$0xff]
        %v4361 = vld [vmem:[#allocation2 + $0x3e8] sm:$0xff]
        %v4362 = vld [vmem:[#allocation2 + $0x3f0] sm:$0xff]
        %v4363 = vld [vmem:[#allocation2 + $0x3f8] sm:$0xff]
        %4364 = vst.msk [vmem:[%s306] sm:$0xff] %vm4104, %v4236
        %4365 = vst.msk [vmem:[%s306 + $0x8] sm:$0xff] %vm4104, %v4237
        %4366 = vst.msk [vmem:[%s306 + $0x10] sm:$0xff] %vm4104, %v4238
        %4367 = vst.msk [vmem:[%s306 + $0x18] sm:$0xff] %vm4104, %v4239
        %4368 = vst.msk [vmem:[%s306 + $0x20] sm:$0xff] %vm4104, %v4240
        %4369 = vst.msk [vmem:[%s306 + $0x28] sm:$0xff] %vm4104, %v4241
        %4370 = vst.msk [vmem:[%s306 + $0x30] sm:$0xff] %vm4104, %v4242
        %4371 = vst.msk [vmem:[%s306 + $0x38] sm:$0xff] %vm4104, %v4243
        %4372 = vst.msk [vmem:[%s306 + $0x40] sm:$0xff] %vm4104, %v4244
        %4373 = vst.msk [vmem:[%s306 + $0x48] sm:$0xff] %vm4104, %v4245
        %4374 = vst.msk [vmem:[%s306 + $0x50] sm:$0xff] %vm4104, %v4246
        %4375 = vst.msk [vmem:[%s306 + $0x58] sm:$0xff] %vm4104, %v4247
        %4376 = vst.msk [vmem:[%s306 + $0x60] sm:$0xff] %vm4104, %v4248
        %4377 = vst.msk [vmem:[%s306 + $0x68] sm:$0xff] %vm4104, %v4249
        %4378 = vst.msk [vmem:[%s306 + $0x70] sm:$0xff] %vm4104, %v4250
        %4379 = vst.msk [vmem:[%s306 + $0x78] sm:$0xff] %vm4104, %v4251
        %4380 = vst.msk [vmem:[%s306 + $0x80] sm:$0xff] %vm4104, %v4252
        %4381 = vst.msk [vmem:[%s306 + $0x88] sm:$0xff] %vm4104, %v4253
        %4382 = vst.msk [vmem:[%s306 + $0x90] sm:$0xff] %vm4104, %v4254
        %4383 = vst.msk [vmem:[%s306 + $0x98] sm:$0xff] %vm4104, %v4255
        %4384 = vst.msk [vmem:[%s306 + $0xa0] sm:$0xff] %vm4104, %v4256
        %4385 = vst.msk [vmem:[%s306 + $0xa8] sm:$0xff] %vm4104, %v4257
        %4386 = vst.msk [vmem:[%s306 + $0xb0] sm:$0xff] %vm4104, %v4258
        %4387 = vst.msk [vmem:[%s306 + $0xb8] sm:$0xff] %vm4104, %v4259
        %4388 = vst.msk [vmem:[%s306 + $0xc0] sm:$0xff] %vm4104, %v4260
        %4389 = vst.msk [vmem:[%s306 + $0xc8] sm:$0xff] %vm4104, %v4261
        %4390 = vst.msk [vmem:[%s306 + $0xd0] sm:$0xff] %vm4104, %v4262
        %4391 = vst.msk [vmem:[%s306 + $0xd8] sm:$0xff] %vm4104, %v4263
        %4392 = vst.msk [vmem:[%s306 + $0xe0] sm:$0xff] %vm4104, %v4264
        %4393 = vst.msk [vmem:[%s306 + $0xe8] sm:$0xff] %vm4104, %v4265
        %4394 = vst.msk [vmem:[%s306 + $0xf0] sm:$0xff] %vm4104, %v4266
        %4395 = vst.msk [vmem:[%s306 + $0xf8] sm:$0xff] %vm4104, %v4267
        %4396 = vst.msk [vmem:[%s306 + $0x100] sm:$0xff] %vm4104, %v4268
        %4397 = vst.msk [vmem:[%s306 + $0x108] sm:$0xff] %vm4104, %v4269
        %4398 = vst.msk [vmem:[%s306 + $0x110] sm:$0xff] %vm4104, %v4270
        %4399 = vst.msk [vmem:[%s306 + $0x118] sm:$0xff] %vm4104, %v4271
        %4400 = vst.msk [vmem:[%s306 + $0x120] sm:$0xff] %vm4104, %v4272
        %4401 = vst.msk [vmem:[%s306 + $0x128] sm:$0xff] %vm4104, %v4273
        %4402 = vst.msk [vmem:[%s306 + $0x130] sm:$0xff] %vm4104, %v4274
        %4403 = vst.msk [vmem:[%s306 + $0x138] sm:$0xff] %vm4104, %v4275
        %4404 = vst.msk [vmem:[%s306 + $0x140] sm:$0xff] %vm4104, %v4276
        %4405 = vst.msk [vmem:[%s306 + $0x148] sm:$0xff] %vm4104, %v4277
        %4406 = vst.msk [vmem:[%s306 + $0x150] sm:$0xff] %vm4104, %v4278
        %4407 = vst.msk [vmem:[%s306 + $0x158] sm:$0xff] %vm4104, %v4279
        %4408 = vst.msk [vmem:[%s306 + $0x160] sm:$0xff] %vm4104, %v4280
        %4409 = vst.msk [vmem:[%s306 + $0x168] sm:$0xff] %vm4104, %v4281
        %4410 = vst.msk [vmem:[%s306 + $0x170] sm:$0xff] %vm4104, %v4282
        %4411 = vst.msk [vmem:[%s306 + $0x178] sm:$0xff] %vm4104, %v4283
        %4412 = vst.msk [vmem:[%s306 + $0x180] sm:$0xff] %vm4104, %v4284
        %4413 = vst.msk [vmem:[%s306 + $0x188] sm:$0xff] %vm4104, %v4285
        %4414 = vst.msk [vmem:[%s306 + $0x190] sm:$0xff] %vm4104, %v4286
        %4415 = vst.msk [vmem:[%s306 + $0x198] sm:$0xff] %vm4104, %v4287
        %4416 = vst.msk [vmem:[%s306 + $0x1a0] sm:$0xff] %vm4104, %v4288
        %4417 = vst.msk [vmem:[%s306 + $0x1a8] sm:$0xff] %vm4104, %v4289
        %4418 = vst.msk [vmem:[%s306 + $0x1b0] sm:$0xff] %vm4104, %v4290
        %4419 = vst.msk [vmem:[%s306 + $0x1b8] sm:$0xff] %vm4104, %v4291
        %4420 = vst.msk [vmem:[%s306 + $0x1c0] sm:$0xff] %vm4104, %v4292
        %4421 = vst.msk [vmem:[%s306 + $0x1c8] sm:$0xff] %vm4104, %v4293
        %4422 = vst.msk [vmem:[%s306 + $0x1d0] sm:$0xff] %vm4104, %v4294
        %4423 = vst.msk [vmem:[%s306 + $0x1d8] sm:$0xff] %vm4104, %v4295
        %4424 = vst.msk [vmem:[%s306 + $0x1e0] sm:$0xff] %vm4104, %v4296
        %4425 = vst.msk [vmem:[%s306 + $0x1e8] sm:$0xff] %vm4104, %v4297
        %4426 = vst.msk [vmem:[%s306 + $0x1f0] sm:$0xff] %vm4104, %v4298
        %4427 = vst.msk [vmem:[%s306 + $0x1f8] sm:$0xff] %vm4104, %v4299
        %4428 = vst.msk [vmem:[%s306 + $0x200] sm:$0xff] %vm4104, %v4300
        %4429 = vst.msk [vmem:[%s306 + $0x208] sm:$0xff] %vm4104, %v4301
        %4430 = vst.msk [vmem:[%s306 + $0x210] sm:$0xff] %vm4104, %v4302
        %4431 = vst.msk [vmem:[%s306 + $0x218] sm:$0xff] %vm4104, %v4303
        %4432 = vst.msk [vmem:[%s306 + $0x220] sm:$0xff] %vm4104, %v4304
        %4433 = vst.msk [vmem:[%s306 + $0x228] sm:$0xff] %vm4104, %v4305
        %4434 = vst.msk [vmem:[%s306 + $0x230] sm:$0xff] %vm4104, %v4306
        %4435 = vst.msk [vmem:[%s306 + $0x238] sm:$0xff] %vm4104, %v4307
        %4436 = vst.msk [vmem:[%s306 + $0x240] sm:$0xff] %vm4104, %v4308
        %4437 = vst.msk [vmem:[%s306 + $0x248] sm:$0xff] %vm4104, %v4309
        %4438 = vst.msk [vmem:[%s306 + $0x250] sm:$0xff] %vm4104, %v4310
        %4439 = vst.msk [vmem:[%s306 + $0x258] sm:$0xff] %vm4104, %v4311
        %4440 = vst.msk [vmem:[%s306 + $0x260] sm:$0xff] %vm4104, %v4312
        %4441 = vst.msk [vmem:[%s306 + $0x268] sm:$0xff] %vm4104, %v4313
        %4442 = vst.msk [vmem:[%s306 + $0x270] sm:$0xff] %vm4104, %v4314
        %4443 = vst.msk [vmem:[%s306 + $0x278] sm:$0xff] %vm4104, %v4315
        %4444 = vst.msk [vmem:[%s306 + $0x280] sm:$0xff] %vm4104, %v4316
        %4445 = vst.msk [vmem:[%s306 + $0x288] sm:$0xff] %vm4104, %v4317
        %4446 = vst.msk [vmem:[%s306 + $0x290] sm:$0xff] %vm4104, %v4318
        %4447 = vst.msk [vmem:[%s306 + $0x298] sm:$0xff] %vm4104, %v4319
        %4448 = vst.msk [vmem:[%s306 + $0x2a0] sm:$0xff] %vm4104, %v4320
        %4449 = vst.msk [vmem:[%s306 + $0x2a8] sm:$0xff] %vm4104, %v4321
        %4450 = vst.msk [vmem:[%s306 + $0x2b0] sm:$0xff] %vm4104, %v4322
        %4451 = vst.msk [vmem:[%s306 + $0x2b8] sm:$0xff] %vm4104, %v4323
        %4452 = vst.msk [vmem:[%s306 + $0x2c0] sm:$0xff] %vm4104, %v4324
        %4453 = vst.msk [vmem:[%s306 + $0x2c8] sm:$0xff] %vm4104, %v4325
        %4454 = vst.msk [vmem:[%s306 + $0x2d0] sm:$0xff] %vm4104, %v4326
        %4455 = vst.msk [vmem:[%s306 + $0x2d8] sm:$0xff] %vm4104, %v4327
        %4456 = vst.msk [vmem:[%s306 + $0x2e0] sm:$0xff] %vm4104, %v4328
        %4457 = vst.msk [vmem:[%s306 + $0x2e8] sm:$0xff] %vm4104, %v4329
        %4458 = vst.msk [vmem:[%s306 + $0x2f0] sm:$0xff] %vm4104, %v4330
        %4459 = vst.msk [vmem:[%s306 + $0x2f8] sm:$0xff] %vm4104, %v4331
        %4460 = vst.msk [vmem:[%s306 + $0x300] sm:$0xff] %vm4104, %v4332
        %4461 = vst.msk [vmem:[%s306 + $0x308] sm:$0xff] %vm4104, %v4333
        %4462 = vst.msk [vmem:[%s306 + $0x310] sm:$0xff] %vm4104, %v4334
        %4463 = vst.msk [vmem:[%s306 + $0x318] sm:$0xff] %vm4104, %v4335
        %4464 = vst.msk [vmem:[%s306 + $0x320] sm:$0xff] %vm4104, %v4336
        %4465 = vst.msk [vmem:[%s306 + $0x328] sm:$0xff] %vm4104, %v4337
        %4466 = vst.msk [vmem:[%s306 + $0x330] sm:$0xff] %vm4104, %v4338
        %4467 = vst.msk [vmem:[%s306 + $0x338] sm:$0xff] %vm4104, %v4339
        %4468 = vst.msk [vmem:[%s306 + $0x340] sm:$0xff] %vm4104, %v4340
        %4469 = vst.msk [vmem:[%s306 + $0x348] sm:$0xff] %vm4104, %v4341
        %4470 = vst.msk [vmem:[%s306 + $0x350] sm:$0xff] %vm4104, %v4342
        %4471 = vst.msk [vmem:[%s306 + $0x358] sm:$0xff] %vm4104, %v4343
        %4472 = vst.msk [vmem:[%s306 + $0x360] sm:$0xff] %vm4104, %v4344
        %4473 = vst.msk [vmem:[%s306 + $0x368] sm:$0xff] %vm4104, %v4345
        %4474 = vst.msk [vmem:[%s306 + $0x370] sm:$0xff] %vm4104, %v4346
        %4475 = vst.msk [vmem:[%s306 + $0x378] sm:$0xff] %vm4104, %v4347
        %4476 = vst.msk [vmem:[%s306 + $0x380] sm:$0xff] %vm4104, %v4348
        %4477 = vst.msk [vmem:[%s306 + $0x388] sm:$0xff] %vm4104, %v4349
        %4478 = vst.msk [vmem:[%s306 + $0x390] sm:$0xff] %vm4104, %v4350
        %4479 = vst.msk [vmem:[%s306 + $0x398] sm:$0xff] %vm4104, %v4351
        %4480 = vst.msk [vmem:[%s306 + $0x3a0] sm:$0xff] %vm4104, %v4352
        %4481 = vst.msk [vmem:[%s306 + $0x3a8] sm:$0xff] %vm4104, %v4353
        %4482 = vst.msk [vmem:[%s306 + $0x3b0] sm:$0xff] %vm4104, %v4354
        %4483 = vst.msk [vmem:[%s306 + $0x3b8] sm:$0xff] %vm4104, %v4355
        %4484 = vst.msk [vmem:[%s306 + $0x3c0] sm:$0xff] %vm4104, %v4356
        %4485 = vst.msk [vmem:[%s306 + $0x3c8] sm:$0xff] %vm4104, %v4357
        %4486 = vst.msk [vmem:[%s306 + $0x3d0] sm:$0xff] %vm4104, %v4358
        %4487 = vst.msk [vmem:[%s306 + $0x3d8] sm:$0xff] %vm4104, %v4359
        %4488 = vst.msk [vmem:[%s306 + $0x3e0] sm:$0xff] %vm4104, %v4360
        %4489 = vst.msk [vmem:[%s306 + $0x3e8] sm:$0xff] %vm4104, %v4361
        %4490 = vst.msk [vmem:[%s306 + $0x3f0] sm:$0xff] %vm4104, %v4362
        %4491 = vst.msk [vmem:[%s306 + $0x3f8] sm:$0xff] %vm4104, %v4363
      $region56: #{ae_curskenet_forward.2} parent=47 // pred_fallthru
        _
      %p4492 = scmp.lt.s32.totalorder %s22, 1
      %s4493 = scalar_select %p4492, %s22, 1
      %s4494 = smul.addr %s4493, 128
      %s4495 = smul.addr %s4494, 8
      %s4496 = scalar_lea.vmem %s7, %s4495
      // Predicated region
      $region57: #{ae_curskenet_forward.2} parent=47 // pred_check
        %p4497 = pneg %p202
      $region58: #{ae_curskenet_forward.2} parent=47 // pred_check_branch
        %4499 = sbr.rel (%p4497) target = $region60
      $region59: #{ae_curskenet_forward.2} parent=47 // pred_region
        _
      $region60: #{ae_curskenet_forward.2} parent=47 // pred_fallthru
        _
    $region48: #{ae_curskenet_forward.2} parent=5 // pred_fallthru
      _
    %p4500 = scmp.le.s32.totalorder 2, %s13
    // Predicated region
    $region61: #{ae_curskenet_forward.2} parent=5 // pred_check
      %p4501 = pneg %p4500
    $region62: #{ae_curskenet_forward.2} parent=5 // pred_check_branch
      %4503 = sbr.rel (%p4501) target = $region64
    $region63: #{ae_curskenet_forward.2} parent=5 // pred_region
      %s4504 = ssub.s32 %s13, 2
      // Predicated region
      $region65: #{ae_curskenet_forward.2} parent=63 // pred_check
        %p4505 = pneg %p208
      $region66: #{ae_curskenet_forward.2} parent=63 // pred_check_branch
        %4507 = sbr.rel (%p4505) target = $region68
      $region67: #{ae_curskenet_forward.2} parent=63 // pred_region
        %p4508 = scmp.lt.s32.totalorder %s24, 1
        %s4509 = scalar_select %p4508, %s24, 1
        %s4510 = smul.addr %s4509, 128
        %s4511 = smul.addr %s4510, 8
        %s4512 = scalar_lea.vmem %s7, %s4511
      $region68: #{ae_curskenet_forward.2} parent=63 // pred_fallthru
        _
    $region64: #{ae_curskenet_forward.2} parent=5 // pred_fallthru
      _
  $region6: #{ae_curskenet_forward.2} parent=0 // loop_footer
    %s17 = sadd.s32 1, %s13
  $region7: #{ae_curskenet_forward.2} parent=0 // loop_footer_branch
    %12 = sbr.rel target = $region3
  $region8: #{ae_curskenet_forward.2} parent=0 // loop_exit
    _

</llo_original>
